<compile_context>
chip_gen: v5e
topology: v5e:2x2
jax: 0.10.0
libtpu: 0.0.40
codegen_flags: <defaults>
</compile_context>

<pallas_src>
import jax
import jax.numpy as jnp
from jax import lax
from jax.experimental import pallas as pl
from jax.experimental.pallas import tpu as pltpu


# ----------------------------------------------------------------------------
# helpers
# ----------------------------------------------------------------------------
def _round_up(x, m):
    return ((x + m - 1) // m) * m


def _fold_bn(gamma, beta, mean, var, eps=1e-5):
    scale = gamma / jnp.sqrt(var + eps)
    bias = beta - mean * scale
    return scale.astype(jnp.float32), bias.astype(jnp.float32)


def _conv_taps(w_oihw, ci_pad, co_pad):
    """PyTorch conv weight (O, I, 3, 3) -> (9, ci_pad, co_pad) bf16 tap matrices."""
    O, I, KH, KW = w_oihw.shape
    w = jnp.transpose(w_oihw, (2, 3, 1, 0)).reshape(KH * KW, I, O)   # [kh*3+kw, I, O]
    w = jnp.pad(w, ((0, 0), (0, ci_pad - I), (0, co_pad - O)))
    return w.astype(jnp.bfloat16)


# ----------------------------------------------------------------------------
# fused Pallas kernel (one batch element per grid step)
# ----------------------------------------------------------------------------
def _make_kernel(Wp, HWp, PAD0, Pp, inv_hw):
    def kernel(x_ref, w1_ref, w2_ref, s1_ref, b1_ref, s2_ref, b2_ref,
               fc1_ref, fc2_ref, mask_ref, o_ref, y1_ref):
        # Zero the padded-y1 scratch: its head / tail / masked junk columns act
        # as the zero padding conv2 reads through.
        y1_ref[...] = jnp.zeros_like(y1_ref)
        mask = mask_ref[...]                                    # (HWp, 1) 1/0

        # ---- conv1 (3x3, pad=1) as 9 shifted matmuls + folded BN1 + ReLU ----
        acc = jnp.zeros((HWp, Pp), jnp.float32)
        for kh in range(3):
            for kw in range(3):
                xt = x_ref[pl.ds(kh * Wp + kw, HWp), :].astype(jnp.bfloat16)
                acc = acc + jnp.dot(xt, w1_ref[kh * 3 + kw],
                                    preferred_element_type=jnp.float32)
        y1 = jnp.maximum(acc * s1_ref[...] + b1_ref[...], 0.0) * mask
        # keep y1 resident in VMEM (aligned store at sublane offset PAD0)
        y1_ref[pl.ds(PAD0, HWp), :] = y1

        # ---- conv2 (3x3, pad=1) on the VMEM-resident padded y1 + folded BN2 ----
        acc2 = jnp.zeros((HWp, Pp), jnp.float32)
        for kh in range(3):
            for kw in range(3):
                off = PAD0 + (kh - 1) * Wp + (kw - 1)
                yt = y1_ref[pl.ds(off, HWp), :].astype(jnp.bfloat16)
                acc2 = acc2 + jnp.dot(yt, w2_ref[kh * 3 + kw],
                                      preferred_element_type=jnp.float32)
        y2 = acc2 * s2_ref[...] + b2_ref[...]                   # bn2 (eval mode)

        # ---- SE: masked global avg pool -> fc1 -> ReLU -> fc2 -> sigmoid ----
        m = jnp.sum(y2 * mask, axis=0, keepdims=True) * inv_hw  # (1, Pp)
        a = jnp.maximum(
            jnp.dot(m.astype(jnp.bfloat16), fc1_ref[...],
                    preferred_element_type=jnp.float32), 0.0)
        g = jax.nn.sigmoid(
            jnp.dot(a.astype(jnp.bfloat16), fc2_ref[...],
                    preferred_element_type=jnp.float32))        # (1, Pp)

        # channel gate + final ReLU (forward() has no residual add)
        o_ref[...] = jnp.maximum(y2 * g, 0.0)

    return kernel


# ----------------------------------------------------------------------------
# wrapper (NCHW in / NCHW out, matching the PyTorch module)
# ----------------------------------------------------------------------------
def se_basic_block(x_nchw, params):
    N, Cin, H, W = x_nchw.shape
    P = params["w1"].shape[0]
    c_mid = params["fc1"].shape[0]                              # planes // r

    Hp, Wp = H + 2, W + 2
    HWp = H * Wp                                                # rows incl. 2 junk cols / row
    Cp = _round_up(Cin, 128)                                    # lane-dense K for conv1
    Pp = _round_up(P, 128)                                      # lane-dense channels
    Lx = _round_up(Hp * Wp + Wp, 8)                             # flat padded input + headroom
    PAD0 = _round_up(Wp + 1, 8)                                 # aligned y1 scratch offset
    L1 = _round_up(PAD0 + HWp + Wp + 2, 8)                      # padded-y1 scratch rows

    f32, bf16 = jnp.float32, jnp.bfloat16

    # NCHW -> NHWC, spatial zero-pad by 1, channel-pad to lane width, flatten.
    # (In a full network you would stay NHWC between blocks and drop this transpose.)
    x = jnp.transpose(x_nchw, (0, 2, 3, 1)).astype(f32)
    x = jnp.pad(x, ((0, 0), (1, 1), (1, 1), (0, Cp - Cin)))     # (N, Hp, Wp, Cp)
    x = x.reshape(N, Hp * Wp, Cp)
    x = jnp.pad(x, ((0, 0), (0, Lx - Hp * Wp), (0, 0)))         # (N, Lx, Cp)

    w1t = _conv_taps(params["w1"], Cp, Pp)                      # (9, Cp, Pp) bf16
    w2t = _conv_taps(params["w2"], Pp, Pp)                      # (9, Pp, Pp) bf16

    s1, b1 = _fold_bn(params["g1"], params["be1"], params["m1"], params["v1"])
    s2, b2 = _fold_bn(params["g2"], params["be2"], params["m2"], params["v2"])
    s1 = jnp.pad(s1, (0, Pp - P))[None, :]
    b1 = jnp.pad(b1, (0, Pp - P))[None, :]
    s2 = jnp.pad(s2, (0, Pp - P))[None, :]
    b2 = jnp.pad(b2, (0, Pp - P))[None, :]

    fc1p = jnp.pad(params["fc1"].T, ((0, Pp - P), (0, Pp - c_mid))).astype(bf16)
    fc2p = jnp.pad(params["fc2"].T, ((0, Pp - c_mid), (0, Pp - P))).astype(bf16)

    # valid-column mask for the (H, Wp) row layout (last 2 columns of each row are junk)
    mask = (jnp.arange(HWp) % Wp < W).astype(f32)[:, None]      # (HWp, 1)

    kernel = _make_kernel(Wp, HWp, PAD0, Pp, 1.0 / float(H * W))

    flops = 2 * N * HWp * 9 * (Cp * Pp + Pp * Pp)
    bytes_accessed = (x.size * 4 + w1t.size * 2 + w2t.size * 2
                      + 2 * Pp * Pp * 2 + N * HWp * Pp * 4)

    out = pl.pallas_call(
        kernel,
        out_shape=jax.ShapeDtypeStruct((N, HWp, Pp), f32),
        grid=(N,),
        in_specs=[
            pl.BlockSpec((None, Lx, Cp), lambda n: (n, 0, 0)),  # padded flat image
            pl.BlockSpec((9, Cp, Pp), lambda n: (0, 0, 0)),     # conv1 taps
            pl.BlockSpec((9, Pp, Pp), lambda n: (0, 0, 0)),     # conv2 taps
            pl.BlockSpec((1, Pp), lambda n: (0, 0)),            # bn1 scale
            pl.BlockSpec((1, Pp), lambda n: (0, 0)),            # bn1 bias
            pl.BlockSpec((1, Pp), lambda n: (0, 0)),            # bn2 scale
            pl.BlockSpec((1, Pp), lambda n: (0, 0)),            # bn2 bias
            pl.BlockSpec((Pp, Pp), lambda n: (0, 0)),           # SE fc1 (in, out)
            pl.BlockSpec((Pp, Pp), lambda n: (0, 0)),           # SE fc2 (in, out)
            pl.BlockSpec((HWp, 1), lambda n: (0, 0)),           # valid-column mask
        ],
        out_specs=pl.BlockSpec((None, HWp, Pp), lambda n: (n, 0, 0)),
        scratch_shapes=[pltpu.VMEM((L1, Pp), f32)],             # zero-bordered y1
        compiler_params=pltpu.CompilerParams(
            dimension_semantics=("parallel",),
            vmem_limit_bytes=32 * 1024 * 1024),
        cost_estimate=pl.CostEstimate(
            flops=int(flops),
            transcendentals=int(N * Pp),
            bytes_accessed=int(bytes_accessed)),
    )(x, w1t, w2t, s1, b1, s2, b2, fc1p, fc2p, mask)

    # strip the junk columns and the channel padding, back to NCHW
    out = out.reshape(N, H, Wp, Pp)[:, :, :W, :P]
    return jnp.transpose(out, (0, 3, 1, 2))


# ----------------------------------------------------------------------------
# independent XLA reference (same precision choices: bf16 matmul operands,
# f32 accumulation / elementwise) for correctness checking
# ----------------------------------------------------------------------------
def reference(x_nchw, params):
    f32, bf16 = jnp.float32, jnp.bfloat16
    dn = ("NHWC", "HWIO", "NHWC")
    x = jnp.transpose(x_nchw, (0, 2, 3, 1)).astype(f32)

    w1 = jnp.transpose(params["w1"], (2, 3, 1, 0)).astype(bf16)
    y = lax.conv_general_dilated(x.astype(bf16), w1, (1, 1), "SAME",
                                 dimension_numbers=dn, preferred_element_type=f32)
    s1, b1 = _fold_bn(params["g1"], params["be1"], params["m1"], params["v1"])
    y = jnp.maximum(y * s1 + b1, 0.0)

    w2 = jnp.transpose(params["w2"], (2, 3, 1, 0)).astype(bf16)
    y = lax.conv_general_dilated(y.astype(bf16), w2, (1, 1), "SAME",
                                 dimension_numbers=dn, preferred_element_type=f32)
    s2, b2 = _fold_bn(params["g2"], params["be2"], params["m2"], params["v2"])
    y = y * s2 + b2

    m = jnp.mean(y, axis=(1, 2))                                 # (N, P)
    a = jnp.maximum(jnp.dot(m.astype(bf16), params["fc1"].T.astype(bf16),
                            preferred_element_type=f32), 0.0)
    g = jax.nn.sigmoid(jnp.dot(a.astype(bf16), params["fc2"].T.astype(bf16),
                               preferred_element_type=f32))
    y = jnp.maximum(y * g[:, None, None, :], 0.0)
    return jnp.transpose(y, (0, 3, 1, 2))


# ----------------------------------------------------------------------------
if __name__ == "__main__":
    N, Cin, H, W = 2, 4, 16, 16
    planes, r = 8, 1                                             # r=1 default in SEBasicBlock

    ks = jax.random.split(jax.random.PRNGKey(0), 13)
    params = {
        # conv weights (PyTorch layout: O, I, kH, kW), bias=False
        "w1": jax.random.normal(ks[0], (planes, Cin, 3, 3), jnp.float32) * 0.2,
        "w2": jax.random.normal(ks[1], (planes, planes, 3, 3), jnp.float32) * 0.2,
        # bn1 (gamma, beta, running_mean, running_var)
        "g1": jax.random.normal(ks[2], (planes,), jnp.float32) * 0.1 + 1.0,
        "be1": jax.random.normal(ks[3], (planes,), jnp.float32) * 0.1,
        "m1": jax.random.normal(ks[4], (planes,), jnp.float32) * 0.1,
        "v1": jax.random.uniform(ks[5], (planes,), jnp.float32, 0.5, 1.5),
        # bn2
        "g2": jax.random.normal(ks[6], (planes,), jnp.float32) * 0.1 + 1.0,
        "be2": jax.random.normal(ks[7], (planes,), jnp.float32) * 0.1,
        "m2": jax.random.normal(ks[8], (planes,), jnp.float32) * 0.1,
        "v2": jax.random.uniform(ks[9], (planes,), jnp.float32, 0.5, 1.5),
        # SE excitation Linear weights (PyTorch layout: out, in), bias=False
        "fc1": jax.random.normal(ks[10], (planes // r, planes), jnp.float32) * 0.3,
        "fc2": jax.random.normal(ks[11], (planes, planes // r), jnp.float32) * 0.3,
    }
    x = jax.random.normal(ks[12], (N, Cin, H, W), jnp.float32)

    fwd = jax.jit(se_basic_block)
    out = jax.block_until_ready(fwd(x, params))
    ref = jax.block_until_ready(reference(x, params))

    assert out.shape == (N, planes, H, W), out.shape
    max_err = float(jnp.max(jnp.abs(out - ref)))
    assert jnp.allclose(out, ref, atol=1e-2, rtol=1e-2), max_err
    print("KERNEL_OK")
</pallas_src>

<mosaic_0001>
module attributes {stable_mosaic.version = 11 : i64} {
  func.func @kernel(%arg0: i32, %arg1: memref<1x344x128xf32, #tpu.memory_space<vmem>>, %arg2: memref<9x128x128xbf16, #tpu.memory_space<vmem>>, %arg3: memref<9x128x128xbf16, #tpu.memory_space<vmem>>, %arg4: memref<1x128xf32, #tpu.memory_space<vmem>>, %arg5: memref<1x128xf32, #tpu.memory_space<vmem>>, %arg6: memref<1x128xf32, #tpu.memory_space<vmem>>, %arg7: memref<1x128xf32, #tpu.memory_space<vmem>>, %arg8: memref<128x128xbf16, #tpu.memory_space<vmem>>, %arg9: memref<128x128xbf16, #tpu.memory_space<vmem>>, %arg10: memref<288x1xf32, #tpu.memory_space<vmem>>, %arg11: memref<1x288x128xf32, #tpu.memory_space<vmem>>, %arg12: memref<336x128xf32, #tpu.memory_space<vmem>>) attributes {dimension_semantics = [#tpu.dimension_semantics<parallel>], iteration_bounds = array<i64: 2>, scalar_prefetch = 0 : i64, scratch_operands = 1 : i64, tpu.core_type = #tpu.core_type<tc>, window_params = [{transform_indices = @transform_0, window_bounds = array<i64: 1, 344, 128>}, {pipeline_mode = #tpu.pipeline_mode<synchronous>, transform_indices = @transform_1, window_bounds = array<i64: 9, 128, 128>}, {pipeline_mode = #tpu.pipeline_mode<synchronous>, transform_indices = @transform_2, window_bounds = array<i64: 9, 128, 128>}, {pipeline_mode = #tpu.pipeline_mode<synchronous>, transform_indices = @transform_3, window_bounds = array<i64: 1, 128>}, {pipeline_mode = #tpu.pipeline_mode<synchronous>, transform_indices = @transform_4, window_bounds = array<i64: 1, 128>}, {pipeline_mode = #tpu.pipeline_mode<synchronous>, transform_indices = @transform_5, window_bounds = array<i64: 1, 128>}, {pipeline_mode = #tpu.pipeline_mode<synchronous>, transform_indices = @transform_6, window_bounds = array<i64: 1, 128>}, {pipeline_mode = #tpu.pipeline_mode<synchronous>, transform_indices = @transform_7, window_bounds = array<i64: 128, 128>}, {pipeline_mode = #tpu.pipeline_mode<synchronous>, transform_indices = @transform_8, window_bounds = array<i64: 128, 128>}, {pipeline_mode = #tpu.pipeline_mode<synchronous>, transform_indices = @transform_9, window_bounds = array<i64: 288, 1>}, {transform_indices = @transform_10, window_bounds = array<i64: 1, 288, 128>}]} {
    %cst = arith.constant 0.000000e+00 : f32
    %0 = vector.broadcast %cst : f32 to vector<336x128xf32>
    %c0 = arith.constant 0 : index
    %c0_0 = arith.constant 0 : index
    %1 = vector.load %arg12[%c0, %c0_0] : memref<336x128xf32, #tpu.memory_space<vmem>>, vector<336x128xf32>
    tpu.vector_store %arg12[%c0, %c0_0], %0 {strides = array<i32>} : memref<336x128xf32, #tpu.memory_space<vmem>>, vector<336x128xf32>,
    %c0_1 = arith.constant 0 : index
    %c0_2 = arith.constant 0 : index
    %2 = vector.load %arg10[%c0_1, %c0_2] : memref<288x1xf32, #tpu.memory_space<vmem>>, vector<288x1xf32>
    %cst_3 = arith.constant 0.000000e+00 : f32
    %3 = vector.broadcast %cst_3 : f32 to vector<288x128xf32>
    %c0_4 = arith.constant 0 : index
    %c0_5 = arith.constant 0 : index
    %c0_6 = arith.constant 0 : index
    %4 = vector.load %arg1[%c0_4, %c0_5, %c0_6] : memref<1x344x128xf32, #tpu.memory_space<vmem>>, vector<1x288x128xf32>
    %5 = vector.shape_cast %4 : vector<1x288x128xf32> to vector<288x128xf32>
    %6 = arith.truncf %5 : vector<288x128xf32> to vector<288x128xbf16>
    %c0_7 = arith.constant 0 : index
    %c0_8 = arith.constant 0 : index
    %c0_9 = arith.constant 0 : index
    %7 = vector.load %arg2[%c0_7, %c0_8, %c0_9] : memref<9x128x128xbf16, #tpu.memory_space<vmem>>, vector<1x128x128xbf16>
    %8 = vector.shape_cast %7 : vector<1x128x128xbf16> to vector<128x128xbf16>
    %cst_10 = arith.constant dense<0.000000e+00> : vector<288x128xf32>
    %9 = tpu.matmul %6, %8, %cst_10 {dimension_numbers = #tpu.dot_dimension_numbers<[1], [0], [0], [1], [0, 0, 1, 1], [], []>} : vector<288x128xbf16>, vector<128x128xbf16>, vector<288x128xf32> -> vector<288x128xf32>
    %10 = arith.addf %3, %9 : vector<288x128xf32>
    %c0_11 = arith.constant 0 : index
    %c1 = arith.constant 1 : index
    %c0_12 = arith.constant 0 : index
    %11 = vector.load %arg1[%c0_11, %c1, %c0_12] : memref<1x344x128xf32, #tpu.memory_space<vmem>>, vector<1x288x128xf32>
    %12 = vector.shape_cast %11 : vector<1x288x128xf32> to vector<288x128xf32>
    %13 = arith.truncf %12 : vector<288x128xf32> to vector<288x128xbf16>
    %c1_13 = arith.constant 1 : index
    %c0_14 = arith.constant 0 : index
    %c0_15 = arith.constant 0 : index
    %14 = vector.load %arg2[%c1_13, %c0_14, %c0_15] : memref<9x128x128xbf16, #tpu.memory_space<vmem>>, vector<1x128x128xbf16>
    %15 = vector.shape_cast %14 : vector<1x128x128xbf16> to vector<128x128xbf16>
    %cst_16 = arith.constant dense<0.000000e+00> : vector<288x128xf32>
    %16 = tpu.matmul %13, %15, %cst_16 {dimension_numbers = #tpu.dot_dimension_numbers<[1], [0], [0], [1], [0, 0, 1, 1], [], []>} : vector<288x128xbf16>, vector<128x128xbf16>, vector<288x128xf32> -> vector<288x128xf32>
    %17 = arith.addf %10, %16 : vector<288x128xf32>
    %c0_17 = arith.constant 0 : index
    %c2 = arith.constant 2 : index
    %c0_18 = arith.constant 0 : index
    %18 = vector.load %arg1[%c0_17, %c2, %c0_18] : memref<1x344x128xf32, #tpu.memory_space<vmem>>, vector<1x288x128xf32>
    %19 = vector.shape_cast %18 : vector<1x288x128xf32> to vector<288x128xf32>
    %20 = arith.truncf %19 : vector<288x128xf32> to vector<288x128xbf16>
    %c2_19 = arith.constant 2 : index
    %c0_20 = arith.constant 0 : index
    %c0_21 = arith.constant 0 : index
    %21 = vector.load %arg2[%c2_19, %c0_20, %c0_21] : memref<9x128x128xbf16, #tpu.memory_space<vmem>>, vector<1x128x128xbf16>
    %22 = vector.shape_cast %21 : vector<1x128x128xbf16> to vector<128x128xbf16>
    %cst_22 = arith.constant dense<0.000000e+00> : vector<288x128xf32>
    %23 = tpu.matmul %20, %22, %cst_22 {dimension_numbers = #tpu.dot_dimension_numbers<[1], [0], [0], [1], [0, 0, 1, 1], [], []>} : vector<288x128xbf16>, vector<128x128xbf16>, vector<288x128xf32> -> vector<288x128xf32>
    %24 = arith.addf %17, %23 : vector<288x128xf32>
    %c0_23 = arith.constant 0 : index
    %c18 = arith.constant 18 : index
    %c0_24 = arith.constant 0 : index
    %25 = vector.load %arg1[%c0_23, %c18, %c0_24] : memref<1x344x128xf32, #tpu.memory_space<vmem>>, vector<1x288x128xf32>
    %26 = vector.shape_cast %25 : vector<1x288x128xf32> to vector<288x128xf32>
    %27 = arith.truncf %26 : vector<288x128xf32> to vector<288x128xbf16>
    %c3 = arith.constant 3 : index
    %c0_25 = arith.constant 0 : index
    %c0_26 = arith.constant 0 : index
    %28 = vector.load %arg2[%c3, %c0_25, %c0_26] : memref<9x128x128xbf16, #tpu.memory_space<vmem>>, vector<1x128x128xbf16>
    %29 = vector.shape_cast %28 : vector<1x128x128xbf16> to vector<128x128xbf16>
    %cst_27 = arith.constant dense<0.000000e+00> : vector<288x128xf32>
    %30 = tpu.matmul %27, %29, %cst_27 {dimension_numbers = #tpu.dot_dimension_numbers<[1], [0], [0], [1], [0, 0, 1, 1], [], []>} : vector<288x128xbf16>, vector<128x128xbf16>, vector<288x128xf32> -> vector<288x128xf32>
    %31 = arith.addf %24, %30 : vector<288x128xf32>
    %c0_28 = arith.constant 0 : index
    %c19 = arith.constant 19 : index
    %c0_29 = arith.constant 0 : index
    %32 = vector.load %arg1[%c0_28, %c19, %c0_29] : memref<1x344x128xf32, #tpu.memory_space<vmem>>, vector<1x288x128xf32>
    %33 = vector.shape_cast %32 : vector<1x288x128xf32> to vector<288x128xf32>
    %34 = arith.truncf %33 : vector<288x128xf32> to vector<288x128xbf16>
    %c4 = arith.constant 4 : index
    %c0_30 = arith.constant 0 : index
    %c0_31 = arith.constant 0 : index
    %35 = vector.load %arg2[%c4, %c0_30, %c0_31] : memref<9x128x128xbf16, #tpu.memory_space<vmem>>, vector<1x128x128xbf16>
    %36 = vector.shape_cast %35 : vector<1x128x128xbf16> to vector<128x128xbf16>
    %cst_32 = arith.constant dense<0.000000e+00> : vector<288x128xf32>
    %37 = tpu.matmul %34, %36, %cst_32 {dimension_numbers = #tpu.dot_dimension_numbers<[1], [0], [0], [1], [0, 0, 1, 1], [], []>} : vector<288x128xbf16>, vector<128x128xbf16>, vector<288x128xf32> -> vector<288x128xf32>
    %38 = arith.addf %31, %37 : vector<288x128xf32>
    %c0_33 = arith.constant 0 : index
    %c20 = arith.constant 20 : index
    %c0_34 = arith.constant 0 : index
    %39 = vector.load %arg1[%c0_33, %c20, %c0_34] : memref<1x344x128xf32, #tpu.memory_space<vmem>>, vector<1x288x128xf32>
    %40 = vector.shape_cast %39 : vector<1x288x128xf32> to vector<288x128xf32>
    %41 = arith.truncf %40 : vector<288x128xf32> to vector<288x128xbf16>
    %c5 = arith.constant 5 : index
    %c0_35 = arith.constant 0 : index
    %c0_36 = arith.constant 0 : index
    %42 = vector.load %arg2[%c5, %c0_35, %c0_36] : memref<9x128x128xbf16, #tpu.memory_space<vmem>>, vector<1x128x128xbf16>
    %43 = vector.shape_cast %42 : vector<1x128x128xbf16> to vector<128x128xbf16>
    %cst_37 = arith.constant dense<0.000000e+00> : vector<288x128xf32>
    %44 = tpu.matmul %41, %43, %cst_37 {dimension_numbers = #tpu.dot_dimension_numbers<[1], [0], [0], [1], [0, 0, 1, 1], [], []>} : vector<288x128xbf16>, vector<128x128xbf16>, vector<288x128xf32> -> vector<288x128xf32>
    %45 = arith.addf %38, %44 : vector<288x128xf32>
    %c0_38 = arith.constant 0 : index
    %c36 = arith.constant 36 : index
    %c0_39 = arith.constant 0 : index
    %46 = vector.load %arg1[%c0_38, %c36, %c0_39] : memref<1x344x128xf32, #tpu.memory_space<vmem>>, vector<1x288x128xf32>
    %47 = vector.shape_cast %46 : vector<1x288x128xf32> to vector<288x128xf32>
    %48 = arith.truncf %47 : vector<288x128xf32> to vector<288x128xbf16>
    %c6 = arith.constant 6 : index
    %c0_40 = arith.constant 0 : index
    %c0_41 = arith.constant 0 : index
    %49 = vector.load %arg2[%c6, %c0_40, %c0_41] : memref<9x128x128xbf16, #tpu.memory_space<vmem>>, vector<1x128x128xbf16>
    %50 = vector.shape_cast %49 : vector<1x128x128xbf16> to vector<128x128xbf16>
    %cst_42 = arith.constant dense<0.000000e+00> : vector<288x128xf32>
    %51 = tpu.matmul %48, %50, %cst_42 {dimension_numbers = #tpu.dot_dimension_numbers<[1], [0], [0], [1], [0, 0, 1, 1], [], []>} : vector<288x128xbf16>, vector<128x128xbf16>, vector<288x128xf32> -> vector<288x128xf32>
    %52 = arith.addf %45, %51 : vector<288x128xf32>
    %c0_43 = arith.constant 0 : index
    %c37 = arith.constant 37 : index
    %c0_44 = arith.constant 0 : index
    %53 = vector.load %arg1[%c0_43, %c37, %c0_44] : memref<1x344x128xf32, #tpu.memory_space<vmem>>, vector<1x288x128xf32>
    %54 = vector.shape_cast %53 : vector<1x288x128xf32> to vector<288x128xf32>
    %55 = arith.truncf %54 : vector<288x128xf32> to vector<288x128xbf16>
    %c7 = arith.constant 7 : index
    %c0_45 = arith.constant 0 : index
    %c0_46 = arith.constant 0 : index
    %56 = vector.load %arg2[%c7, %c0_45, %c0_46] : memref<9x128x128xbf16, #tpu.memory_space<vmem>>, vector<1x128x128xbf16>
    %57 = vector.shape_cast %56 : vector<1x128x128xbf16> to vector<128x128xbf16>
    %cst_47 = arith.constant dense<0.000000e+00> : vector<288x128xf32>
    %58 = tpu.matmul %55, %57, %cst_47 {dimension_numbers = #tpu.dot_dimension_numbers<[1], [0], [0], [1], [0, 0, 1, 1], [], []>} : vector<288x128xbf16>, vector<128x128xbf16>, vector<288x128xf32> -> vector<288x128xf32>
    %59 = arith.addf %52, %58 : vector<288x128xf32>
    %c0_48 = arith.constant 0 : index
    %c38 = arith.constant 38 : index
    %c0_49 = arith.constant 0 : index
    %60 = vector.load %arg1[%c0_48, %c38, %c0_49] : memref<1x344x128xf32, #tpu.memory_space<vmem>>, vector<1x288x128xf32>
    %61 = vector.shape_cast %60 : vector<1x288x128xf32> to vector<288x128xf32>
    %62 = arith.truncf %61 : vector<288x128xf32> to vector<288x128xbf16>
    %c8 = arith.constant 8 : index
    %c0_50 = arith.constant 0 : index
    %c0_51 = arith.constant 0 : index
    %63 = vector.load %arg2[%c8, %c0_50, %c0_51] : memref<9x128x128xbf16, #tpu.memory_space<vmem>>, vector<1x128x128xbf16>
    %64 = vector.shape_cast %63 : vector<1x128x128xbf16> to vector<128x128xbf16>
    %cst_52 = arith.constant dense<0.000000e+00> : vector<288x128xf32>
    %65 = tpu.matmul %62, %64, %cst_52 {dimension_numbers = #tpu.dot_dimension_numbers<[1], [0], [0], [1], [0, 0, 1, 1], [], []>} : vector<288x128xbf16>, vector<128x128xbf16>, vector<288x128xf32> -> vector<288x128xf32>
    %66 = arith.addf %59, %65 : vector<288x128xf32>
    %c0_53 = arith.constant 0 : index
    %c0_54 = arith.constant 0 : index
    %67 = vector.load %arg4[%c0_53, %c0_54] : memref<1x128xf32, #tpu.memory_space<vmem>>, vector<1x128xf32>
    %68 = vector.broadcast %67 : vector<1x128xf32> to vector<288x128xf32>
    %69 = arith.mulf %66, %68 : vector<288x128xf32>
    %c0_55 = arith.constant 0 : index
    %c0_56 = arith.constant 0 : index
    %70 = vector.load %arg5[%c0_55, %c0_56] : memref<1x128xf32, #tpu.memory_space<vmem>>, vector<1x128xf32>
    %71 = vector.broadcast %70 : vector<1x128xf32> to vector<288x128xf32>
    %72 = arith.addf %69, %71 : vector<288x128xf32>
    %cst_57 = arith.constant 0.000000e+00 : f32
    %73 = vector.broadcast %cst_57 : f32 to vector<288x128xf32>
    %74 = arith.maximumf %72, %73 : vector<288x128xf32>
    %75 = vector.broadcast %2 : vector<288x1xf32> to vector<288x128xf32>
    %76 = arith.mulf %74, %75 : vector<288x128xf32>
    %c24 = arith.constant 24 : index
    %c0_58 = arith.constant 0 : index
    %77 = vector.load %arg12[%c24, %c0_58] : memref<336x128xf32, #tpu.memory_space<vmem>>, vector<288x128xf32>
    tpu.vector_store %arg12[%c24, %c0_58], %76 {strides = array<i32>} : memref<336x128xf32, #tpu.memory_space<vmem>>, vector<288x128xf32>,
    %cst_59 = arith.constant 0.000000e+00 : f32
    %78 = vector.broadcast %cst_59 : f32 to vector<288x128xf32>
    %c5_60 = arith.constant 5 : index
    %c0_61 = arith.constant 0 : index
    %79 = vector.load %arg12[%c5_60, %c0_61] : memref<336x128xf32, #tpu.memory_space<vmem>>, vector<288x128xf32>
    %80 = arith.truncf %79 : vector<288x128xf32> to vector<288x128xbf16>
    %c0_62 = arith.constant 0 : index
    %c0_63 = arith.constant 0 : index
    %c0_64 = arith.constant 0 : index
    %81 = vector.load %arg3[%c0_62, %c0_63, %c0_64] : memref<9x128x128xbf16, #tpu.memory_space<vmem>>, vector<1x128x128xbf16>
    %82 = vector.shape_cast %81 : vector<1x128x128xbf16> to vector<128x128xbf16>
    %cst_65 = arith.constant dense<0.000000e+00> : vector<288x128xf32>
    %83 = tpu.matmul %80, %82, %cst_65 {dimension_numbers = #tpu.dot_dimension_numbers<[1], [0], [0], [1], [0, 0, 1, 1], [], []>} : vector<288x128xbf16>, vector<128x128xbf16>, vector<288x128xf32> -> vector<288x128xf32>
    %84 = arith.addf %78, %83 : vector<288x128xf32>
    %c6_66 = arith.constant 6 : index
    %c0_67 = arith.constant 0 : index
    %85 = vector.load %arg12[%c6_66, %c0_67] : memref<336x128xf32, #tpu.memory_space<vmem>>, vector<288x128xf32>
    %86 = arith.truncf %85 : vector<288x128xf32> to vector<288x128xbf16>
    %c1_68 = arith.constant 1 : index
    %c0_69 = arith.constant 0 : index
    %c0_70 = arith.constant 0 : index
    %87 = vector.load %arg3[%c1_68, %c0_69, %c0_70] : memref<9x128x128xbf16, #tpu.memory_space<vmem>>, vector<1x128x128xbf16>
    %88 = vector.shape_cast %87 : vector<1x128x128xbf16> to vector<128x128xbf16>
    %cst_71 = arith.constant dense<0.000000e+00> : vector<288x128xf32>
    %89 = tpu.matmul %86, %88, %cst_71 {dimension_numbers = #tpu.dot_dimension_numbers<[1], [0], [0], [1], [0, 0, 1, 1], [], []>} : vector<288x128xbf16>, vector<128x128xbf16>, vector<288x128xf32> -> vector<288x128xf32>
    %90 = arith.addf %84, %89 : vector<288x128xf32>
    %c7_72 = arith.constant 7 : index
    %c0_73 = arith.constant 0 : index
    %91 = vector.load %arg12[%c7_72, %c0_73] : memref<336x128xf32, #tpu.memory_space<vmem>>, vector<288x128xf32>
    %92 = arith.truncf %91 : vector<288x128xf32> to vector<288x128xbf16>
    %c2_74 = arith.constant 2 : index
    %c0_75 = arith.constant 0 : index
    %c0_76 = arith.constant 0 : index
    %93 = vector.load %arg3[%c2_74, %c0_75, %c0_76] : memref<9x128x128xbf16, #tpu.memory_space<vmem>>, vector<1x128x128xbf16>
    %94 = vector.shape_cast %93 : vector<1x128x128xbf16> to vector<128x128xbf16>
    %cst_77 = arith.constant dense<0.000000e+00> : vector<288x128xf32>
    %95 = tpu.matmul %92, %94, %cst_77 {dimension_numbers = #tpu.dot_dimension_numbers<[1], [0], [0], [1], [0, 0, 1, 1], [], []>} : vector<288x128xbf16>, vector<128x128xbf16>, vector<288x128xf32> -> vector<288x128xf32>
    %96 = arith.addf %90, %95 : vector<288x128xf32>
    %c23 = arith.constant 23 : index
    %c0_78 = arith.constant 0 : index
    %97 = vector.load %arg12[%c23, %c0_78] : memref<336x128xf32, #tpu.memory_space<vmem>>, vector<288x128xf32>
    %98 = arith.truncf %97 : vector<288x128xf32> to vector<288x128xbf16>
    %c3_79 = arith.constant 3 : index
    %c0_80 = arith.constant 0 : index
    %c0_81 = arith.constant 0 : index
    %99 = vector.load %arg3[%c3_79, %c0_80, %c0_81] : memref<9x128x128xbf16, #tpu.memory_space<vmem>>, vector<1x128x128xbf16>
    %100 = vector.shape_cast %99 : vector<1x128x128xbf16> to vector<128x128xbf16>
    %cst_82 = arith.constant dense<0.000000e+00> : vector<288x128xf32>
    %101 = tpu.matmul %98, %100, %cst_82 {dimension_numbers = #tpu.dot_dimension_numbers<[1], [0], [0], [1], [0, 0, 1, 1], [], []>} : vector<288x128xbf16>, vector<128x128xbf16>, vector<288x128xf32> -> vector<288x128xf32>
    %102 = arith.addf %96, %101 : vector<288x128xf32>
    %c24_83 = arith.constant 24 : index
    %c0_84 = arith.constant 0 : index
    %103 = vector.load %arg12[%c24_83, %c0_84] : memref<336x128xf32, #tpu.memory_space<vmem>>, vector<288x128xf32>
    %104 = arith.truncf %103 : vector<288x128xf32> to vector<288x128xbf16>
    %c4_85 = arith.constant 4 : index
    %c0_86 = arith.constant 0 : index
    %c0_87 = arith.constant 0 : index
    %105 = vector.load %arg3[%c4_85, %c0_86, %c0_87] : memref<9x128x128xbf16, #tpu.memory_space<vmem>>, vector<1x128x128xbf16>
    %106 = vector.shape_cast %105 : vector<1x128x128xbf16> to vector<128x128xbf16>
    %cst_88 = arith.constant dense<0.000000e+00> : vector<288x128xf32>
    %107 = tpu.matmul %104, %106, %cst_88 {dimension_numbers = #tpu.dot_dimension_numbers<[1], [0], [0], [1], [0, 0, 1, 1], [], []>} : vector<288x128xbf16>, vector<128x128xbf16>, vector<288x128xf32> -> vector<288x128xf32>
    %108 = arith.addf %102, %107 : vector<288x128xf32>
    %c25 = arith.constant 25 : index
    %c0_89 = arith.constant 0 : index
    %109 = vector.load %arg12[%c25, %c0_89] : memref<336x128xf32, #tpu.memory_space<vmem>>, vector<288x128xf32>
    %110 = arith.truncf %109 : vector<288x128xf32> to vector<288x128xbf16>
    %c5_90 = arith.constant 5 : index
    %c0_91 = arith.constant 0 : index
    %c0_92 = arith.constant 0 : index
    %111 = vector.load %arg3[%c5_90, %c0_91, %c0_92] : memref<9x128x128xbf16, #tpu.memory_space<vmem>>, vector<1x128x128xbf16>
    %112 = vector.shape_cast %111 : vector<1x128x128xbf16> to vector<128x128xbf16>
    %cst_93 = arith.constant dense<0.000000e+00> : vector<288x128xf32>
    %113 = tpu.matmul %110, %112, %cst_93 {dimension_numbers = #tpu.dot_dimension_numbers<[1], [0], [0], [1], [0, 0, 1, 1], [], []>} : vector<288x128xbf16>, vector<128x128xbf16>, vector<288x128xf32> -> vector<288x128xf32>
    %114 = arith.addf %108, %113 : vector<288x128xf32>
    %c41 = arith.constant 41 : index
    %c0_94 = arith.constant 0 : index
    %115 = vector.load %arg12[%c41, %c0_94] : memref<336x128xf32, #tpu.memory_space<vmem>>, vector<288x128xf32>
    %116 = arith.truncf %115 : vector<288x128xf32> to vector<288x128xbf16>
    %c6_95 = arith.constant 6 : index
    %c0_96 = arith.constant 0 : index
    %c0_97 = arith.constant 0 : index
    %117 = vector.load %arg3[%c6_95, %c0_96, %c0_97] : memref<9x128x128xbf16, #tpu.memory_space<vmem>>, vector<1x128x128xbf16>
    %118 = vector.shape_cast %117 : vector<1x128x128xbf16> to vector<128x128xbf16>
    %cst_98 = arith.constant dense<0.000000e+00> : vector<288x128xf32>
    %119 = tpu.matmul %116, %118, %cst_98 {dimension_numbers = #tpu.dot_dimension_numbers<[1], [0], [0], [1], [0, 0, 1, 1], [], []>} : vector<288x128xbf16>, vector<128x128xbf16>, vector<288x128xf32> -> vector<288x128xf32>
    %120 = arith.addf %114, %119 : vector<288x128xf32>
    %c42 = arith.constant 42 : index
    %c0_99 = arith.constant 0 : index
    %121 = vector.load %arg12[%c42, %c0_99] : memref<336x128xf32, #tpu.memory_space<vmem>>, vector<288x128xf32>
    %122 = arith.truncf %121 : vector<288x128xf32> to vector<288x128xbf16>
    %c7_100 = arith.constant 7 : index
    %c0_101 = arith.constant 0 : index
    %c0_102 = arith.constant 0 : index
    %123 = vector.load %arg3[%c7_100, %c0_101, %c0_102] : memref<9x128x128xbf16, #tpu.memory_space<vmem>>, vector<1x128x128xbf16>
    %124 = vector.shape_cast %123 : vector<1x128x128xbf16> to vector<128x128xbf16>
    %cst_103 = arith.constant dense<0.000000e+00> : vector<288x128xf32>
    %125 = tpu.matmul %122, %124, %cst_103 {dimension_numbers = #tpu.dot_dimension_numbers<[1], [0], [0], [1], [0, 0, 1, 1], [], []>} : vector<288x128xbf16>, vector<128x128xbf16>, vector<288x128xf32> -> vector<288x128xf32>
    %126 = arith.addf %120, %125 : vector<288x128xf32>
    %c43 = arith.constant 43 : index
    %c0_104 = arith.constant 0 : index
    %127 = vector.load %arg12[%c43, %c0_104] : memref<336x128xf32, #tpu.memory_space<vmem>>, vector<288x128xf32>
    %128 = arith.truncf %127 : vector<288x128xf32> to vector<288x128xbf16>
    %c8_105 = arith.constant 8 : index
    %c0_106 = arith.constant 0 : index
    %c0_107 = arith.constant 0 : index
    %129 = vector.load %arg3[%c8_105, %c0_106, %c0_107] : memref<9x128x128xbf16, #tpu.memory_space<vmem>>, vector<1x128x128xbf16>
    %130 = vector.shape_cast %129 : vector<1x128x128xbf16> to vector<128x128xbf16>
    %cst_108 = arith.constant dense<0.000000e+00> : vector<288x128xf32>
    %131 = tpu.matmul %128, %130, %cst_108 {dimension_numbers = #tpu.dot_dimension_numbers<[1], [0], [0], [1], [0, 0, 1, 1], [], []>} : vector<288x128xbf16>, vector<128x128xbf16>, vector<288x128xf32> -> vector<288x128xf32>
    %132 = arith.addf %126, %131 : vector<288x128xf32>
    %c0_109 = arith.constant 0 : index
    %c0_110 = arith.constant 0 : index
    %133 = vector.load %arg6[%c0_109, %c0_110] : memref<1x128xf32, #tpu.memory_space<vmem>>, vector<1x128xf32>
    %134 = vector.broadcast %133 : vector<1x128xf32> to vector<288x128xf32>
    %135 = arith.mulf %132, %134 : vector<288x128xf32>
    %c0_111 = arith.constant 0 : index
    %c0_112 = arith.constant 0 : index
    %136 = vector.load %arg7[%c0_111, %c0_112] : memref<1x128xf32, #tpu.memory_space<vmem>>, vector<1x128xf32>
    %137 = vector.broadcast %136 : vector<1x128xf32> to vector<288x128xf32>
    %138 = arith.addf %135, %137 : vector<288x128xf32>
    %139 = vector.broadcast %2 : vector<288x1xf32> to vector<288x128xf32>
    %140 = arith.mulf %138, %139 : vector<288x128xf32>
    %cst_113 = arith.constant dense<0.000000e+00> : vector<128xf32>
    %141 = vector.multi_reduction <add>, %140, %cst_113 [0] : vector<288x128xf32> to vector<128xf32>
    %142 = vector.shape_cast %141 : vector<128xf32> to vector<1x128xf32>
    %cst_114 = arith.constant 3.906250e-03 : f32
    %143 = vector.broadcast %cst_114 : f32 to vector<1x128xf32>
    %144 = arith.mulf %142, %143 : vector<1x128xf32>
    %145 = arith.truncf %144 : vector<1x128xf32> to vector<1x128xbf16>
    %c0_115 = arith.constant 0 : index
    %c0_116 = arith.constant 0 : index
    %146 = vector.load %arg8[%c0_115, %c0_116] : memref<128x128xbf16, #tpu.memory_space<vmem>>, vector<128x128xbf16>
    %cst_117 = arith.constant dense<0.000000e+00> : vector<1x128xf32>
    %147 = tpu.matmul %145, %146, %cst_117 {dimension_numbers = #tpu.dot_dimension_numbers<[1], [0], [0], [1], [0, 0, 1, 1], [], []>} : vector<1x128xbf16>, vector<128x128xbf16>, vector<1x128xf32> -> vector<1x128xf32>
    %cst_118 = arith.constant 0.000000e+00 : f32
    %148 = vector.broadcast %cst_118 : f32 to vector<1x128xf32>
    %149 = arith.maximumf %147, %148 : vector<1x128xf32>
    %150 = arith.truncf %149 : vector<1x128xf32> to vector<1x128xbf16>
    %c0_119 = arith.constant 0 : index
    %c0_120 = arith.constant 0 : index
    %151 = vector.load %arg9[%c0_119, %c0_120] : memref<128x128xbf16, #tpu.memory_space<vmem>>, vector<128x128xbf16>
    %cst_121 = arith.constant dense<0.000000e+00> : vector<1x128xf32>
    %152 = tpu.matmul %150, %151, %cst_121 {dimension_numbers = #tpu.dot_dimension_numbers<[1], [0], [0], [1], [0, 0, 1, 1], [], []>} : vector<1x128xbf16>, vector<128x128xbf16>, vector<1x128xf32> -> vector<1x128xf32>
    %153 = arith.negf %152 : vector<1x128xf32>
    %154 = math.exp %153 : vector<1x128xf32>
    %cst_122 = arith.constant 1.000000e+00 : f32
    %155 = vector.broadcast %cst_122 : f32 to vector<1x128xf32>
    %156 = arith.addf %155, %154 : vector<1x128xf32>
    %157 = arith.divf %155, %156 : vector<1x128xf32>
    %158 = vector.broadcast %157 : vector<1x128xf32> to vector<288x128xf32>
    %159 = arith.mulf %138, %158 : vector<288x128xf32>
    %cst_123 = arith.constant 0.000000e+00 : f32
    %160 = vector.broadcast %cst_123 : f32 to vector<288x128xf32>
    %161 = arith.maximumf %159, %160 : vector<288x128xf32>
    %c0_124 = arith.constant 0 : index
    %c0_125 = arith.constant 0 : index
    %c0_126 = arith.constant 0 : index
    %162 = vector.load %arg11[%c0_124, %c0_125, %c0_126] : memref<1x288x128xf32, #tpu.memory_space<vmem>>, vector<1x288x128xf32>
    %163 = vector.shape_cast %162 : vector<1x288x128xf32> to vector<288x128xf32>
    %164 = vector.shape_cast %161 : vector<288x128xf32> to vector<1x288x128xf32>
    tpu.vector_store %arg11[%c0_124, %c0_125, %c0_126], %164 {strides = array<i32>} : memref<1x288x128xf32, #tpu.memory_space<vmem>>, vector<1x288x128xf32>,
    return
  }
  func.func @transform_0(%arg0: i32) -> (i32, i32, i32) {
    %c0_i32 = arith.constant 0 : i32
    %c0_i32_0 = arith.constant 0 : i32
    %c0_i32_1 = arith.constant 0 : i32
    return %arg0, %c0_i32, %c0_i32_0 : i32, i32, i32
  }
  func.func @transform_1(%arg0: i32) -> (i32, i32, i32) {
    %c0_i32 = arith.constant 0 : i32
    %c0_i32_0 = arith.constant 0 : i32
    %c0_i32_1 = arith.constant 0 : i32
    %c0_i32_2 = arith.constant 0 : i32
    return %c0_i32, %c0_i32_0, %c0_i32_1 : i32, i32, i32
  }
  func.func @transform_2(%arg0: i32) -> (i32, i32, i32) {
    %c0_i32 = arith.constant 0 : i32
    %c0_i32_0 = arith.constant 0 : i32
    %c0_i32_1 = arith.constant 0 : i32
    %c0_i32_2 = arith.constant 0 : i32
    return %c0_i32, %c0_i32_0, %c0_i32_1 : i32, i32, i32
  }
  func.func @transform_3(%arg0: i32) -> (i32, i32) {
    %c0_i32 = arith.constant 0 : i32
    %c0_i32_0 = arith.constant 0 : i32
    %c0_i32_1 = arith.constant 0 : i32
    return %c0_i32, %c0_i32_0 : i32, i32
  }
  func.func @transform_4(%arg0: i32) -> (i32, i32) {
    %c0_i32 = arith.constant 0 : i32
    %c0_i32_0 = arith.constant 0 : i32
    %c0_i32_1 = arith.constant 0 : i32
    return %c0_i32, %c0_i32_0 : i32, i32
  }
  func.func @transform_5(%arg0: i32) -> (i32, i32) {
    %c0_i32 = arith.constant 0 : i32
    %c0_i32_0 = arith.constant 0 : i32
    %c0_i32_1 = arith.constant 0 : i32
    return %c0_i32, %c0_i32_0 : i32, i32
  }
  func.func @transform_6(%arg0: i32) -> (i32, i32) {
    %c0_i32 = arith.constant 0 : i32
    %c0_i32_0 = arith.constant 0 : i32
    %c0_i32_1 = arith.constant 0 : i32
    return %c0_i32, %c0_i32_0 : i32, i32
  }
  func.func @transform_7(%arg0: i32) -> (i32, i32) {
    %c0_i32 = arith.constant 0 : i32
    %c0_i32_0 = arith.constant 0 : i32
    %c0_i32_1 = arith.constant 0 : i32
    return %c0_i32, %c0_i32_0 : i32, i32
  }
  func.func @transform_8(%arg0: i32) -> (i32, i32) {
    %c0_i32 = arith.constant 0 : i32
    %c0_i32_0 = arith.constant 0 : i32
    %c0_i32_1 = arith.constant 0 : i32
    return %c0_i32, %c0_i32_0 : i32, i32
  }
  func.func @transform_9(%arg0: i32) -> (i32, i32) {
    %c0_i32 = arith.constant 0 : i32
    %c0_i32_0 = arith.constant 0 : i32
    %c0_i32_1 = arith.constant 0 : i32
    return %c0_i32, %c0_i32_0 : i32, i32
  }
  func.func @transform_10(%arg0: i32) -> (i32, i32, i32) {
    %c0_i32 = arith.constant 0 : i32
    %c0_i32_0 = arith.constant 0 : i32
    %c0_i32_1 = arith.constant 0 : i32
    return %arg0, %c0_i32, %c0_i32_0 : i32, i32, i32
  }
}

</mosaic_0001>

<llo_original>
// kernel: se_basic_block.1
$region0: #{se_basic_block.1}
  #allocation0 [shape = 'u32[]', space=smem, size = 0x4, offset = 0x4, fixed_abs, tag = 'smem constant byte address 0x4 - core index']
  #allocation1 [shape = 'u32[72,128]{1,0:T(1,128)}', space=vmem, size = 0x9000, scoped, tag = 'internal scratch']
  #allocation2 [shape = 'f32[336,128]{1,0:T(8,128)}', space=vmem, size = 0x2a000, scoped, tag = 'scratch operand']
  %s0 = inlined_call_operand.vmem [shape: f32[2,344,128], index: 0, kind: input, shape index: {}]
  %s1 = inlined_call_operand.vmem [shape: bf16[9,128,128], index: 1, kind: input, shape index: {}]
  %s2 = inlined_call_operand.vmem [shape: bf16[9,128,128], index: 2, kind: input, shape index: {}]
  %s3 = inlined_call_operand.vmem [shape: f32[1,128], index: 3, kind: input, shape index: {}]
  %s4 = inlined_call_operand.vmem [shape: f32[1,128], index: 4, kind: input, shape index: {}]
  %s5 = inlined_call_operand.vmem [shape: f32[1,128], index: 5, kind: input, shape index: {}]
  %s6 = inlined_call_operand.vmem [shape: f32[1,128], index: 6, kind: input, shape index: {}]
  %s7 = inlined_call_operand.vmem [shape: bf16[128,128], index: 7, kind: input, shape index: {}]
  %s8 = inlined_call_operand.vmem [shape: bf16[128,128], index: 8, kind: input, shape index: {}]
  %s9 = inlined_call_operand.vmem [shape: f32[288,1], index: 9, kind: input, shape index: {}]
  %s10 = inlined_call_operand.vmem [shape: f32[2,288,128], index: 10, kind: output, shape index: {}]
  %s11 = sld [smem:[#allocation0]]
  $region73: #{se_basic_block.1} parent=0
    _
  %s13 = ssub.s32 1, %s11
  %s14 = scalar_select 0, %s13, %s11
  loop: start=0, step=1, limit=4
  $region2: #{se_basic_block.1} parent=0 // loop_pre_header
    _
  $region3: #{se_basic_block.1} parent=0 // loop_header
    %s16 = sphi 0, %s20
    %p17 = scmp.ge.s32.totalorder %s16, 4
    %s26 = sphi 0, %s28
    %s29 = sphi 0, %s26
    %s30 = sphi 0, %s29
    %s46 = sphi 0, %s30
    %s50 = sphi 0, %s50
    %s52 = sphi 0, %s50
    %s53 = sphi 0, %s52
    %s67 = sphi 0, %s53
    %s71 = sphi 0, %s71
    %s73 = sphi 0, %s71
    %s74 = sphi 0, %s73
    %s88 = sphi 0, %s74
    %s92 = sphi 0, %s92
    %s94 = sphi 0, %s92
    %s95 = sphi 0, %s94
    %s109 = sphi 0, %s95
    %s113 = sphi 0, %s113
    %s115 = sphi 0, %s113
    %s116 = sphi 0, %s115
    %s130 = sphi 0, %s116
    %s134 = sphi 0, %s134
    %s136 = sphi 0, %s134
    %s137 = sphi 0, %s136
    %s151 = sphi 0, %s137
    %s155 = sphi 0, %s155
    %s157 = sphi 0, %s155
    %s158 = sphi 0, %s157
    %s172 = sphi 0, %s158
    %s176 = sphi 0, %s176
    %s178 = sphi 0, %s176
    %s179 = sphi 0, %s178
    %s193 = sphi 0, %s179
    %s197 = sphi 0, %s197
    %s199 = sphi 0, %s197
    %s200 = sphi 0, %s199
    %s214 = sphi 0, %s200
    %s218 = sphi 0, %s218
    %s220 = sphi 0, %s218
    %s221 = sphi 0, %s220
    %s235 = sphi 0, %s221
    %s241 = sphi 0, %s243
    %s244 = sphi 0, %s241
    %s245 = sphi 0, %s244
    %s261 = sphi 0, %s245
  $region4: #{se_basic_block.1} parent=0 // loop_header_branch
    %19 = sbr.rel (%p17) target = $region8
  $region5: #{se_basic_block.1} parent=0 // loop_body
    %s21 = ssub.s32 %s16, 1
    %s22 = ssub.s32 %s16, 2
    %s23 = sadd.s32 %s16, 1
    %s24 = ssub.s32 %s16, %s23
    %p25 = scmp.eq.s32.totalorder %s24, 0
    %s27 = sadd.s32 %s26, 1
    %s28 = scalar_select %p25, %s26, %s27
    %p31 = pneg %p25
    %p32 = scmp.eq.s32.totalorder %s16, 1
    %p33 = por %p31, %p32
    %p34 = scmp.ne.s32.totalorder %s26, %s29
    %p35 = scmp.eq.s32.totalorder %s16, 0
    %p36 = por %p34, %p35
    %p37 = scmp.ne.s32.totalorder %s26, %s29
    %p38 = scmp.eq.s32.totalorder %s21, 1
    %p39 = por %p37, %p38
    %p40 = scmp.ne.s32.totalorder %s29, %s30
    %p41 = scmp.eq.s32.totalorder %s21, 0
    %p42 = por %p40, %p41
    %p43 = scmp.ne.s32.totalorder %s29, %s30
    %p44 = scmp.eq.s32.totalorder %s22, 1
    %p45 = por %p43, %p44
    %p47 = scmp.ne.s32.totalorder %s30, %s46
    %p48 = scmp.eq.s32.totalorder %s22, 0
    %p49 = por %p47, %p48
    %s51 = sadd.s32 %s50, 1
    %p54 = scmp.eq.s32.totalorder %s16, 1
    %p55 = scmp.ne.s32.totalorder %s50, %s52
    %p56 = scmp.eq.s32.totalorder %s16, 0
    %p57 = por %p55, %p56
    %p58 = scmp.ne.s32.totalorder %s50, %s52
    %p59 = scmp.eq.s32.totalorder %s21, 1
    %p60 = por %p58, %p59
    %p61 = scmp.ne.s32.totalorder %s52, %s53
    %p62 = scmp.eq.s32.totalorder %s21, 0
    %p63 = por %p61, %p62
    %p64 = scmp.ne.s32.totalorder %s52, %s53
    %p65 = scmp.eq.s32.totalorder %s22, 1
    %p66 = por %p64, %p65
    %p68 = scmp.ne.s32.totalorder %s53, %s67
    %p69 = scmp.eq.s32.totalorder %s22, 0
    %p70 = por %p68, %p69
    %s72 = sadd.s32 %s71, 1
    %p75 = scmp.eq.s32.totalorder %s16, 1
    %p76 = scmp.ne.s32.totalorder %s71, %s73
    %p77 = scmp.eq.s32.totalorder %s16, 0
    %p78 = por %p76, %p77
    %p79 = scmp.ne.s32.totalorder %s71, %s73
    %p80 = scmp.eq.s32.totalorder %s21, 1
    %p81 = por %p79, %p80
    %p82 = scmp.ne.s32.totalorder %s73, %s74
    %p83 = scmp.eq.s32.totalorder %s21, 0
    %p84 = por %p82, %p83
    %p85 = scmp.ne.s32.totalorder %s73, %s74
    %p86 = scmp.eq.s32.totalorder %s22, 1
    %p87 = por %p85, %p86
    %p89 = scmp.ne.s32.totalorder %s74, %s88
    %p90 = scmp.eq.s32.totalorder %s22, 0
    %p91 = por %p89, %p90
    %s93 = sadd.s32 %s92, 1
    %p96 = scmp.eq.s32.totalorder %s16, 1
    %p97 = scmp.ne.s32.totalorder %s92, %s94
    %p98 = scmp.eq.s32.totalorder %s16, 0
    %p99 = por %p97, %p98
    %p100 = scmp.ne.s32.totalorder %s92, %s94
    %p101 = scmp.eq.s32.totalorder %s21, 1
    %p102 = por %p100, %p101
    %p103 = scmp.ne.s32.totalorder %s94, %s95
    %p104 = scmp.eq.s32.totalorder %s21, 0
    %p105 = por %p103, %p104
    %p106 = scmp.ne.s32.totalorder %s94, %s95
    %p107 = scmp.eq.s32.totalorder %s22, 1
    %p108 = por %p106, %p107
    %p110 = scmp.ne.s32.totalorder %s95, %s109
    %p111 = scmp.eq.s32.totalorder %s22, 0
    %p112 = por %p110, %p111
    %s114 = sadd.s32 %s113, 1
    %p117 = scmp.eq.s32.totalorder %s16, 1
    %p118 = scmp.ne.s32.totalorder %s113, %s115
    %p119 = scmp.eq.s32.totalorder %s16, 0
    %p120 = por %p118, %p119
    %p121 = scmp.ne.s32.totalorder %s113, %s115
    %p122 = scmp.eq.s32.totalorder %s21, 1
    %p123 = por %p121, %p122
    %p124 = scmp.ne.s32.totalorder %s115, %s116
    %p125 = scmp.eq.s32.totalorder %s21, 0
    %p126 = por %p124, %p125
    %p127 = scmp.ne.s32.totalorder %s115, %s116
    %p128 = scmp.eq.s32.totalorder %s22, 1
    %p129 = por %p127, %p128
    %p131 = scmp.ne.s32.totalorder %s116, %s130
    %p132 = scmp.eq.s32.totalorder %s22, 0
    %p133 = por %p131, %p132
    %s135 = sadd.s32 %s134, 1
    %p138 = scmp.eq.s32.totalorder %s16, 1
    %p139 = scmp.ne.s32.totalorder %s134, %s136
    %p140 = scmp.eq.s32.totalorder %s16, 0
    %p141 = por %p139, %p140
    %p142 = scmp.ne.s32.totalorder %s134, %s136
    %p143 = scmp.eq.s32.totalorder %s21, 1
    %p144 = por %p142, %p143
    %p145 = scmp.ne.s32.totalorder %s136, %s137
    %p146 = scmp.eq.s32.totalorder %s21, 0
    %p147 = por %p145, %p146
    %p148 = scmp.ne.s32.totalorder %s136, %s137
    %p149 = scmp.eq.s32.totalorder %s22, 1
    %p150 = por %p148, %p149
    %p152 = scmp.ne.s32.totalorder %s137, %s151
    %p153 = scmp.eq.s32.totalorder %s22, 0
    %p154 = por %p152, %p153
    %s156 = sadd.s32 %s155, 1
    %p159 = scmp.eq.s32.totalorder %s16, 1
    %p160 = scmp.ne.s32.totalorder %s155, %s157
    %p161 = scmp.eq.s32.totalorder %s16, 0
    %p162 = por %p160, %p161
    %p163 = scmp.ne.s32.totalorder %s155, %s157
    %p164 = scmp.eq.s32.totalorder %s21, 1
    %p165 = por %p163, %p164
    %p166 = scmp.ne.s32.totalorder %s157, %s158
    %p167 = scmp.eq.s32.totalorder %s21, 0
    %p168 = por %p166, %p167
    %p169 = scmp.ne.s32.totalorder %s157, %s158
    %p170 = scmp.eq.s32.totalorder %s22, 1
    %p171 = por %p169, %p170
    %p173 = scmp.ne.s32.totalorder %s158, %s172
    %p174 = scmp.eq.s32.totalorder %s22, 0
    %p175 = por %p173, %p174
    %s177 = sadd.s32 %s176, 1
    %p180 = scmp.eq.s32.totalorder %s16, 1
    %p181 = scmp.ne.s32.totalorder %s176, %s178
    %p182 = scmp.eq.s32.totalorder %s16, 0
    %p183 = por %p181, %p182
    %p184 = scmp.ne.s32.totalorder %s176, %s178
    %p185 = scmp.eq.s32.totalorder %s21, 1
    %p186 = por %p184, %p185
    %p187 = scmp.ne.s32.totalorder %s178, %s179
    %p188 = scmp.eq.s32.totalorder %s21, 0
    %p189 = por %p187, %p188
    %p190 = scmp.ne.s32.totalorder %s178, %s179
    %p191 = scmp.eq.s32.totalorder %s22, 1
    %p192 = por %p190, %p191
    %p194 = scmp.ne.s32.totalorder %s179, %s193
    %p195 = scmp.eq.s32.totalorder %s22, 0
    %p196 = por %p194, %p195
    %s198 = sadd.s32 %s197, 1
    %p201 = scmp.eq.s32.totalorder %s16, 1
    %p202 = scmp.ne.s32.totalorder %s197, %s199
    %p203 = scmp.eq.s32.totalorder %s16, 0
    %p204 = por %p202, %p203
    %p205 = scmp.ne.s32.totalorder %s197, %s199
    %p206 = scmp.eq.s32.totalorder %s21, 1
    %p207 = por %p205, %p206
    %p208 = scmp.ne.s32.totalorder %s199, %s200
    %p209 = scmp.eq.s32.totalorder %s21, 0
    %p210 = por %p208, %p209
    %p211 = scmp.ne.s32.totalorder %s199, %s200
    %p212 = scmp.eq.s32.totalorder %s22, 1
    %p213 = por %p211, %p212
    %p215 = scmp.ne.s32.totalorder %s200, %s214
    %p216 = scmp.eq.s32.totalorder %s22, 0
    %p217 = por %p215, %p216
    %s219 = sadd.s32 %s218, 1
    %p222 = scmp.eq.s32.totalorder %s16, 1
    %p223 = scmp.ne.s32.totalorder %s218, %s220
    %p224 = scmp.eq.s32.totalorder %s16, 0
    %p225 = por %p223, %p224
    %p226 = scmp.ne.s32.totalorder %s218, %s220
    %p227 = scmp.eq.s32.totalorder %s21, 1
    %p228 = por %p226, %p227
    %p229 = scmp.ne.s32.totalorder %s220, %s221
    %p230 = scmp.eq.s32.totalorder %s21, 0
    %p231 = por %p229, %p230
    %p232 = scmp.ne.s32.totalorder %s220, %s221
    %p233 = scmp.eq.s32.totalorder %s22, 1
    %p234 = por %p232, %p233
    %p236 = scmp.ne.s32.totalorder %s221, %s235
    %p237 = scmp.eq.s32.totalorder %s22, 0
    %p238 = por %p236, %p237
    %s239 = ssub.s32 %s16, %s23
    %p240 = scmp.eq.s32.totalorder %s239, 0
    %s242 = sadd.s32 %s241, 1
    %s243 = scalar_select %p240, %s241, %s242
    %p246 = pneg %p240
    %p247 = scmp.eq.s32.totalorder %s16, 1
    %p248 = por %p246, %p247
    %p249 = scmp.ne.s32.totalorder %s241, %s244
    %p250 = scmp.eq.s32.totalorder %s16, 0
    %p251 = por %p249, %p250
    %p252 = scmp.ne.s32.totalorder %s241, %s244
    %p253 = scmp.eq.s32.totalorder %s21, 1
    %p254 = por %p252, %p253
    %p255 = scmp.ne.s32.totalorder %s244, %s245
    %p256 = scmp.eq.s32.totalorder %s21, 0
    %p257 = por %p255, %p256
    %p258 = scmp.ne.s32.totalorder %s244, %s245
    %p259 = scmp.eq.s32.totalorder %s22, 1
    %p260 = por %p258, %p259
    %p262 = scmp.ne.s32.totalorder %s245, %s261
    %p263 = scmp.eq.s32.totalorder %s22, 0
    %p264 = por %p262, %p263
    %p265 = scmp.le.s32.totalorder 1, %s16
    %p266 = scmp.lt.s32.totalorder %s16, 3
    %p267 = pnand %p265, %p266
    %p268 = pneg %p267
    // Predicated region
    $region9: #{se_basic_block.1} parent=5 // pred_check
      _
    $region10: #{se_basic_block.1} parent=5 // pred_check_branch
      %270 = sbr.rel (%p267) target = $region12
    $region11: #{se_basic_block.1} parent=5 // pred_region
      %s271 = ssub.s32 %s16, 1
      // Predicated region
      $region13: #{se_basic_block.1} parent=11 // pred_check
        %p272 = pneg %p63
      $region14: #{se_basic_block.1} parent=11 // pred_check_branch
        %274 = sbr.rel (%p272) target = $region16
      $region15: #{se_basic_block.1} parent=11 // pred_region
        _
      $region16: #{se_basic_block.1} parent=11 // pred_fallthru
        _
      // Predicated region
      $region17: #{se_basic_block.1} parent=11 // pred_check
        %p275 = pneg %p84
      $region18: #{se_basic_block.1} parent=11 // pred_check_branch
        %277 = sbr.rel (%p275) target = $region20
      $region19: #{se_basic_block.1} parent=11 // pred_region
        _
      $region20: #{se_basic_block.1} parent=11 // pred_fallthru
        _
      // Predicated region
      $region21: #{se_basic_block.1} parent=11 // pred_check
        %p278 = pneg %p105
      $region22: #{se_basic_block.1} parent=11 // pred_check_branch
        %280 = sbr.rel (%p278) target = $region24
      $region23: #{se_basic_block.1} parent=11 // pred_region
        _
      $region24: #{se_basic_block.1} parent=11 // pred_fallthru
        _
      // Predicated region
      $region25: #{se_basic_block.1} parent=11 // pred_check
        %p281 = pneg %p126
      $region26: #{se_basic_block.1} parent=11 // pred_check_branch
        %283 = sbr.rel (%p281) target = $region28
      $region27: #{se_basic_block.1} parent=11 // pred_region
        _
      $region28: #{se_basic_block.1} parent=11 // pred_fallthru
        _
      // Predicated region
      $region29: #{se_basic_block.1} parent=11 // pred_check
        %p284 = pneg %p147
      $region30: #{se_basic_block.1} parent=11 // pred_check_branch
        %286 = sbr.rel (%p284) target = $region32
      $region31: #{se_basic_block.1} parent=11 // pred_region
        _
      $region32: #{se_basic_block.1} parent=11 // pred_fallthru
        _
      // Predicated region
      $region33: #{se_basic_block.1} parent=11 // pred_check
        %p287 = pneg %p168
      $region34: #{se_basic_block.1} parent=11 // pred_check_branch
        %289 = sbr.rel (%p287) target = $region36
      $region35: #{se_basic_block.1} parent=11 // pred_region
        _
      $region36: #{se_basic_block.1} parent=11 // pred_fallthru
        _
      // Predicated region
      $region37: #{se_basic_block.1} parent=11 // pred_check
        %p290 = pneg %p189
      $region38: #{se_basic_block.1} parent=11 // pred_check_branch
        %292 = sbr.rel (%p290) target = $region40
      $region39: #{se_basic_block.1} parent=11 // pred_region
        _
      $region40: #{se_basic_block.1} parent=11 // pred_fallthru
        _
      // Predicated region
      $region41: #{se_basic_block.1} parent=11 // pred_check
        %p293 = pneg %p210
      $region42: #{se_basic_block.1} parent=11 // pred_check_branch
        %295 = sbr.rel (%p293) target = $region44
      $region43: #{se_basic_block.1} parent=11 // pred_region
        _
      $region44: #{se_basic_block.1} parent=11 // pred_fallthru
        _
      // Predicated region
      $region45: #{se_basic_block.1} parent=11 // pred_check
        %p296 = pneg %p231
      $region46: #{se_basic_block.1} parent=11 // pred_check_branch
        %298 = sbr.rel (%p296) target = $region48
      $region47: #{se_basic_block.1} parent=11 // pred_region
        _
      $region48: #{se_basic_block.1} parent=11 // pred_fallthru
        _
    $region12: #{se_basic_block.1} parent=5 // pred_fallthru
      _
    %p299 = scmp.lt.s32.totalorder %s16, 2
    // Predicated region
    $region49: #{se_basic_block.1} parent=5 // pred_check
      %p300 = pneg %p299
    $region50: #{se_basic_block.1} parent=5 // pred_check_branch
      %302 = sbr.rel (%p300) target = $region52
    $region51: #{se_basic_block.1} parent=5 // pred_region
      // Predicated region
      $region53: #{se_basic_block.1} parent=51 // pred_check
        %p303 = pneg %p36
      $region54: #{se_basic_block.1} parent=51 // pred_check_branch
        %305 = sbr.rel (%p303) target = $region56
      $region55: #{se_basic_block.1} parent=51 // pred_region
        %p306 = scmp.lt.s32.totalorder %s16, 1
        %s307 = scalar_select %p306, %s16, 1
        %s308 = smul.addr %s307, 43
        %s309 = smul.addr %s308, 8
        %s310 = scalar_lea.vmem %s0, %s309
      $region56: #{se_basic_block.1} parent=51 // pred_fallthru
        _
    $region52: #{se_basic_block.1} parent=5 // pred_fallthru
      _
    %p311 = scmp.le.s32.totalorder 1, %s16
    %p312 = scmp.lt.s32.totalorder %s16, 3
    %p313 = pnand %p311, %p312
    %p314 = pneg %p313
    // Predicated region
    $region57: #{se_basic_block.1} parent=5 // pred_check
      _
    $region58: #{se_basic_block.1} parent=5 // pred_check_branch
      %316 = sbr.rel (%p313) target = $region60
    $region59: #{se_basic_block.1} parent=5 // pred_region
      %s317 = ssub.s32 %s16, 1
      %p318 = scmp.lt.s32.totalorder %s21, 1
      %s319 = scalar_select %p318, %s21, 1
      %s320 = smul.addr %s319, 43
      %s321 = smul.addr %s320, 8
      %s322 = scalar_lea.vmem %s0, %s321
      %p323 = pneg %p42
      %p324 = pneg %p39
      %p325 = pneg %p63
      %p326 = pneg %p60
      %p327 = pneg %p84
      %p328 = pneg %p81
      %p329 = pneg %p105
      %p330 = pneg %p102
      %p331 = pneg %p126
      %p332 = pneg %p123
      %p333 = pneg %p147
      %p334 = pneg %p144
      %p335 = pneg %p168
      %p336 = pneg %p165
      %p337 = pneg %p189
      %p338 = pneg %p186
      %p339 = pneg %p210
      %p340 = pneg %p207
      %p341 = pneg %p231
      %p342 = pneg %p228
      %p343 = pneg %p257
      %p344 = pneg %p254
      %p345 = scmp.lt.s32.totalorder %s21, 1
      %s346 = scalar_select %p345, %s21, 1
      %s347 = smul.addr %s346, 36
      %s348 = smul.addr %s347, 8
      %s349 = scalar_lea.vmem %s10, %s348
      %p350 = scmp.lt.s32.totalorder %s21, 1
      %s351 = scalar_select %p350, %s21, 1
      %s352 = smul.addr %s351, 43
      %s353 = smul.addr %s352, 8
      %s354 = scalar_lea.vmem %s0, %s353
      %p355 = scmp.lt.s32.totalorder %s21, 1
      %s356 = scalar_select %p355, %s21, 1
      %s357 = smul.addr %s356, 36
      %s358 = smul.addr %s357, 8
      %s359 = scalar_lea.vmem %s10, %s358
      %360 = vst [vmem:[#allocation2] sm:$0xff] 0.0
      %361 = vst [vmem:[#allocation2 + $0x8] sm:$0xff] 0.0
      %362 = vst [vmem:[#allocation2 + $0x10] sm:$0xff] 0.0
      %363 = vst [vmem:[#allocation2 + $0x18] sm:$0xff] 0.0
      %364 = vst [vmem:[#allocation2 + $0x20] sm:$0xff] 0.0
      %365 = vst [vmem:[#allocation2 + $0x28] sm:$0xff] 0.0
      %366 = vst [vmem:[#allocation2 + $0x30] sm:$0xff] 0.0
      %367 = vst [vmem:[#allocation2 + $0x38] sm:$0xff] 0.0
      %368 = vst [vmem:[#allocation2 + $0x40] sm:$0xff] 0.0
      %369 = vst [vmem:[#allocation2 + $0x48] sm:$0xff] 0.0
      %370 = vst [vmem:[#allocation2 + $0x50] sm:$0xff] 0.0
      %371 = vst [vmem:[#allocation2 + $0x58] sm:$0xff] 0.0
      %372 = vst [vmem:[#allocation2 + $0x60] sm:$0xff] 0.0
      %373 = vst [vmem:[#allocation2 + $0x68] sm:$0xff] 0.0
      %374 = vst [vmem:[#allocation2 + $0x70] sm:$0xff] 0.0
      %375 = vst [vmem:[#allocation2 + $0x78] sm:$0xff] 0.0
      %376 = vst [vmem:[#allocation2 + $0x80] sm:$0xff] 0.0
      %377 = vst [vmem:[#allocation2 + $0x88] sm:$0xff] 0.0
      %378 = vst [vmem:[#allocation2 + $0x90] sm:$0xff] 0.0
      %379 = vst [vmem:[#allocation2 + $0x98] sm:$0xff] 0.0
      %380 = vst [vmem:[#allocation2 + $0xa0] sm:$0xff] 0.0
      %381 = vst [vmem:[#allocation2 + $0xa8] sm:$0xff] 0.0
      %382 = vst [vmem:[#allocation2 + $0xb0] sm:$0xff] 0.0
      %383 = vst [vmem:[#allocation2 + $0xb8] sm:$0xff] 0.0
      %384 = vst [vmem:[#allocation2 + $0xc0] sm:$0xff] 0.0
      %385 = vst [vmem:[#allocation2 + $0xc8] sm:$0xff] 0.0
      %386 = vst [vmem:[#allocation2 + $0xd0] sm:$0xff] 0.0
      %387 = vst [vmem:[#allocation2 + $0xd8] sm:$0xff] 0.0
      %388 = vst [vmem:[#allocation2 + $0xe0] sm:$0xff] 0.0
      %389 = vst [vmem:[#allocation2 + $0xe8] sm:$0xff] 0.0
      %390 = vst [vmem:[#allocation2 + $0xf0] sm:$0xff] 0.0
      %391 = vst [vmem:[#allocation2 + $0xf8] sm:$0xff] 0.0
      %392 = vst [vmem:[#allocation2 + $0x100] sm:$0xff] 0.0
      %393 = vst [vmem:[#allocation2 + $0x108] sm:$0xff] 0.0
      %394 = vst [vmem:[#allocation2 + $0x110] sm:$0xff] 0.0
      %395 = vst [vmem:[#allocation2 + $0x118] sm:$0xff] 0.0
      %396 = vst [vmem:[#allocation2 + $0x120] sm:$0xff] 0.0
      %397 = vst [vmem:[#allocation2 + $0x128] sm:$0xff] 0.0
      %398 = vst [vmem:[#allocation2 + $0x130] sm:$0xff] 0.0
      %399 = vst [vmem:[#allocation2 + $0x138] sm:$0xff] 0.0
      %400 = vst [vmem:[#allocation2 + $0x140] sm:$0xff] 0.0
      %401 = vst [vmem:[#allocation2 + $0x148] sm:$0xff] 0.0
      %v402 = vld [vmem:[%s9] sm:$0xff]
      %v403 = vld [vmem:[%s9 + $0x8] sm:$0xff]
      %v404 = vld [vmem:[%s9 + $0x10] sm:$0xff]
      %v405 = vld [vmem:[%s9 + $0x18] sm:$0xff]
      %v406 = vld [vmem:[%s9 + $0x20] sm:$0xff]
      %v407 = vld [vmem:[%s9 + $0x28] sm:$0xff]
      %v408 = vld [vmem:[%s9 + $0x30] sm:$0xff]
      %v409 = vld [vmem:[%s9 + $0x38] sm:$0xff]
      %v410 = vld [vmem:[%s9 + $0x40] sm:$0xff]
      %v411 = vld [vmem:[%s9 + $0x48] sm:$0xff]
      %v412 = vld [vmem:[%s9 + $0x50] sm:$0xff]
      %v413 = vld [vmem:[%s9 + $0x58] sm:$0xff]
      %v414 = vld [vmem:[%s9 + $0x60] sm:$0xff]
      %v415 = vld [vmem:[%s9 + $0x68] sm:$0xff]
      %v416 = vld [vmem:[%s9 + $0x70] sm:$0xff]
      %v417 = vld [vmem:[%s9 + $0x78] sm:$0xff]
      %v418 = vld [vmem:[%s9 + $0x80] sm:$0xff]
      %v419 = vld [vmem:[%s9 + $0x88] sm:$0xff]
      %v420 = vld [vmem:[%s9 + $0x90] sm:$0xff]
      %v421 = vld [vmem:[%s9 + $0x98] sm:$0xff]
      %v422 = vld [vmem:[%s9 + $0xa0] sm:$0xff]
      %v423 = vld [vmem:[%s9 + $0xa8] sm:$0xff]
      %v424 = vld [vmem:[%s9 + $0xb0] sm:$0xff]
      %v425 = vld [vmem:[%s9 + $0xb8] sm:$0xff]
      %v426 = vld [vmem:[%s9 + $0xc0] sm:$0xff]
      %v427 = vld [vmem:[%s9 + $0xc8] sm:$0xff]
      %v428 = vld [vmem:[%s9 + $0xd0] sm:$0xff]
      %v429 = vld [vmem:[%s9 + $0xd8] sm:$0xff]
      %v430 = vld [vmem:[%s9 + $0xe0] sm:$0xff]
      %v431 = vld [vmem:[%s9 + $0xe8] sm:$0xff]
      %v432 = vld [vmem:[%s9 + $0xf0] sm:$0xff]
      %v433 = vld [vmem:[%s9 + $0xf8] sm:$0xff]
      %v434 = vld [vmem:[%s9 + $0x100] sm:$0xff]
      %v435 = vld [vmem:[%s9 + $0x108] sm:$0xff]
      %v436 = vld [vmem:[%s9 + $0x110] sm:$0xff]
      %v437 = vld [vmem:[%s9 + $0x118] sm:$0xff]
      %v438 = vld [vmem:[%s354] sm:$0xff]
      %v439 = vld [vmem:[%s354 + $0x8] sm:$0xff]
      %v440 = vld [vmem:[%s354 + $0x10] sm:$0xff]
      %v441 = vld [vmem:[%s354 + $0x18] sm:$0xff]
      %v442 = vld [vmem:[%s354 + $0x20] sm:$0xff]
      %v443 = vld [vmem:[%s354 + $0x28] sm:$0xff]
      %v444 = vld [vmem:[%s354 + $0x30] sm:$0xff]
      %v445 = vld [vmem:[%s354 + $0x38] sm:$0xff]
      %v446 = vld [vmem:[%s354 + $0x40] sm:$0xff]
      %v447 = vld [vmem:[%s354 + $0x48] sm:$0xff]
      %v448 = vld [vmem:[%s354 + $0x50] sm:$0xff]
      %v449 = vld [vmem:[%s354 + $0x58] sm:$0xff]
      %v450 = vld [vmem:[%s354 + $0x60] sm:$0xff]
      %v451 = vld [vmem:[%s354 + $0x68] sm:$0xff]
      %v452 = vld [vmem:[%s354 + $0x70] sm:$0xff]
      %v453 = vld [vmem:[%s354 + $0x78] sm:$0xff]
      %v454 = vld [vmem:[%s354 + $0x80] sm:$0xff]
      %v455 = vld [vmem:[%s354 + $0x88] sm:$0xff]
      %v456 = vld [vmem:[%s354 + $0x90] sm:$0xff]
      %v457 = vld [vmem:[%s354 + $0x98] sm:$0xff]
      %v458 = vld [vmem:[%s354 + $0xa0] sm:$0xff]
      %v459 = vld [vmem:[%s354 + $0xa8] sm:$0xff]
      %v460 = vld [vmem:[%s354 + $0xb0] sm:$0xff]
      %v461 = vld [vmem:[%s354 + $0xb8] sm:$0xff]
      %v462 = vld [vmem:[%s354 + $0xc0] sm:$0xff]
      %v463 = vld [vmem:[%s354 + $0xc8] sm:$0xff]
      %v464 = vld [vmem:[%s354 + $0xd0] sm:$0xff]
      %v465 = vld [vmem:[%s354 + $0xd8] sm:$0xff]
      %v466 = vld [vmem:[%s354 + $0xe0] sm:$0xff]
      %v467 = vld [vmem:[%s354 + $0xe8] sm:$0xff]
      %v468 = vld [vmem:[%s354 + $0xf0] sm:$0xff]
      %v469 = vld [vmem:[%s354 + $0xf8] sm:$0xff]
      %v470 = vld [vmem:[%s354 + $0x100] sm:$0xff]
      %v471 = vld [vmem:[%s354 + $0x108] sm:$0xff]
      %v472 = vld [vmem:[%s354 + $0x110] sm:$0xff]
      %v473 = vld [vmem:[%s354 + $0x118] sm:$0xff]
      %v474 = vpack.c.bf16 %v439, %v438
      %v475 = vpack.c.bf16 %v441, %v440
      %v476 = vpack.c.bf16 %v443, %v442
      %v477 = vpack.c.bf16 %v445, %v444
      %v478 = vpack.c.bf16 %v447, %v446
      %v479 = vpack.c.bf16 %v449, %v448
      %v480 = vpack.c.bf16 %v451, %v450
      %v481 = vpack.c.bf16 %v453, %v452
      %v482 = vpack.c.bf16 %v455, %v454
      %v483 = vpack.c.bf16 %v457, %v456
      %v484 = vpack.c.bf16 %v459, %v458
      %v485 = vpack.c.bf16 %v461, %v460
      %v486 = vpack.c.bf16 %v463, %v462
      %v487 = vpack.c.bf16 %v465, %v464
      %v488 = vpack.c.bf16 %v467, %v466
      %v489 = vpack.c.bf16 %v469, %v468
      %v490 = vpack.c.bf16 %v471, %v470
      %v491 = vpack.c.bf16 %v473, %v472
      %v492 = vld [vmem:[%s1] sm:$0xf]
      %v493 = vld [vmem:[%s1 + $0x4] sm:$0xf]
      %v494 = vld [vmem:[%s1 + $0x8] sm:$0xf]
      %v495 = vld [vmem:[%s1 + $0xc] sm:$0xf]
      %v496 = vld [vmem:[%s1 + $0x10] sm:$0xf]
      %v497 = vld [vmem:[%s1 + $0x14] sm:$0xf]
      %v498 = vld [vmem:[%s1 + $0x18] sm:$0xf]
      %v499 = vld [vmem:[%s1 + $0x1c] sm:$0xf]
      %v500 = vld [vmem:[%s1 + $0x20] sm:$0xf]
      %v501 = vld [vmem:[%s1 + $0x24] sm:$0xf]
      %v502 = vld [vmem:[%s1 + $0x28] sm:$0xf]
      %v503 = vld [vmem:[%s1 + $0x2c] sm:$0xf]
      %v504 = vld [vmem:[%s1 + $0x30] sm:$0xf]
      %v505 = vld [vmem:[%s1 + $0x34] sm:$0xf]
      %v506 = vld [vmem:[%s1 + $0x38] sm:$0xf]
      %v507 = vld [vmem:[%s1 + $0x3c] sm:$0xf]
      %v508 = vld [vmem:[%s354 + $0x1] sm:$0xff]
      %v509 = vld [vmem:[%s354 + $0x9] sm:$0xff]
      %v510 = vld [vmem:[%s354 + $0x11] sm:$0xff]
      %v511 = vld [vmem:[%s354 + $0x19] sm:$0xff]
      %v512 = vld [vmem:[%s354 + $0x21] sm:$0xff]
      %v513 = vld [vmem:[%s354 + $0x29] sm:$0xff]
      %v514 = vld [vmem:[%s354 + $0x31] sm:$0xff]
      %v515 = vld [vmem:[%s354 + $0x39] sm:$0xff]
      %v516 = vld [vmem:[%s354 + $0x41] sm:$0xff]
      %v517 = vld [vmem:[%s354 + $0x49] sm:$0xff]
      %v518 = vld [vmem:[%s354 + $0x51] sm:$0xff]
      %v519 = vld [vmem:[%s354 + $0x59] sm:$0xff]
      %v520 = vld [vmem:[%s354 + $0x61] sm:$0xff]
      %v521 = vld [vmem:[%s354 + $0x69] sm:$0xff]
      %v522 = vld [vmem:[%s354 + $0x71] sm:$0xff]
      %v523 = vld [vmem:[%s354 + $0x79] sm:$0xff]
      %v524 = vld [vmem:[%s354 + $0x81] sm:$0xff]
      %v525 = vld [vmem:[%s354 + $0x89] sm:$0xff]
      %v526 = vld [vmem:[%s354 + $0x91] sm:$0xff]
      %v527 = vld [vmem:[%s354 + $0x99] sm:$0xff]
      %v528 = vld [vmem:[%s354 + $0xa1] sm:$0xff]
      %v529 = vld [vmem:[%s354 + $0xa9] sm:$0xff]
      %v530 = vld [vmem:[%s354 + $0xb1] sm:$0xff]
      %v531 = vld [vmem:[%s354 + $0xb9] sm:$0xff]
      %v532 = vld [vmem:[%s354 + $0xc1] sm:$0xff]
      %v533 = vld [vmem:[%s354 + $0xc9] sm:$0xff]
      %v534 = vld [vmem:[%s354 + $0xd1] sm:$0xff]
      %v535 = vld [vmem:[%s354 + $0xd9] sm:$0xff]
      %v536 = vld [vmem:[%s354 + $0xe1] sm:$0xff]
      %v537 = vld [vmem:[%s354 + $0xe9] sm:$0xff]
      %v538 = vld [vmem:[%s354 + $0xf1] sm:$0xff]
      %v539 = vld [vmem:[%s354 + $0xf9] sm:$0xff]
      %v540 = vld [vmem:[%s354 + $0x101] sm:$0xff]
      %v541 = vld [vmem:[%s354 + $0x109] sm:$0xff]
      %v542 = vld [vmem:[%s354 + $0x111] sm:$0xff]
      %v543 = vld [vmem:[%s354 + $0x119] sm:$0xff]
      %v544 = vpack.c.bf16 %v509, %v508
      %v545 = vpack.c.bf16 %v511, %v510
      %v546 = vpack.c.bf16 %v513, %v512
      %v547 = vpack.c.bf16 %v515, %v514
      %v548 = vpack.c.bf16 %v517, %v516
      %v549 = vpack.c.bf16 %v519, %v518
      %v550 = vpack.c.bf16 %v521, %v520
      %v551 = vpack.c.bf16 %v523, %v522
      %v552 = vpack.c.bf16 %v525, %v524
      %v553 = vpack.c.bf16 %v527, %v526
      %v554 = vpack.c.bf16 %v529, %v528
      %v555 = vpack.c.bf16 %v531, %v530
      %v556 = vpack.c.bf16 %v533, %v532
      %v557 = vpack.c.bf16 %v535, %v534
      %v558 = vpack.c.bf16 %v537, %v536
      %v559 = vpack.c.bf16 %v539, %v538
      %v560 = vpack.c.bf16 %v541, %v540
      %v561 = vpack.c.bf16 %v543, %v542
      %s562 = scalar_lea.vmem %s1, 64
      %v563 = vld [vmem:[%s562] sm:$0xf]
      %v564 = vld [vmem:[%s562 + $0x4] sm:$0xf]
      %v565 = vld [vmem:[%s562 + $0x8] sm:$0xf]
      %v566 = vld [vmem:[%s562 + $0xc] sm:$0xf]
      %v567 = vld [vmem:[%s562 + $0x10] sm:$0xf]
      %v568 = vld [vmem:[%s562 + $0x14] sm:$0xf]
      %v569 = vld [vmem:[%s562 + $0x18] sm:$0xf]
      %v570 = vld [vmem:[%s562 + $0x1c] sm:$0xf]
      %v571 = vld [vmem:[%s562 + $0x20] sm:$0xf]
      %v572 = vld [vmem:[%s562 + $0x24] sm:$0xf]
      %v573 = vld [vmem:[%s562 + $0x28] sm:$0xf]
      %v574 = vld [vmem:[%s562 + $0x2c] sm:$0xf]
      %v575 = vld [vmem:[%s562 + $0x30] sm:$0xf]
      %v576 = vld [vmem:[%s562 + $0x34] sm:$0xf]
      %v577 = vld [vmem:[%s562 + $0x38] sm:$0xf]
      %v578 = vld [vmem:[%s562 + $0x3c] sm:$0xf]
      %v595 = vunpack.c.l.b16 %v563
      %v596 = vunpack.c.l.b16 %v564
      %v597 = vunpack.c.l.b16 %v565
      %v598 = vunpack.c.l.b16 %v566
      %v599 = vunpack.c.l.b16 %v567
      %v600 = vunpack.c.l.b16 %v568
      %v601 = vunpack.c.l.b16 %v569
      %v602 = vunpack.c.l.b16 %v570
      %v603 = vunpack.c.l.b16 %v571
      %v604 = vunpack.c.l.b16 %v572
      %v605 = vunpack.c.l.b16 %v573
      %v606 = vunpack.c.l.b16 %v574
      %v607 = vunpack.c.l.b16 %v575
      %v608 = vunpack.c.l.b16 %v576
      %v609 = vunpack.c.l.b16 %v577
      %v610 = vunpack.c.l.b16 %v578
      %v611 = vpack.c.b16 %v596, %v595
      %v612 = vpack.c.b16 %v598, %v597
      %v613 = vpack.c.b16 %v600, %v599
      %v614 = vpack.c.b16 %v602, %v601
      %v615 = vpack.c.b16 %v604, %v603
      %v616 = vpack.c.b16 %v606, %v605
      %v617 = vpack.c.b16 %v608, %v607
      %v618 = vpack.c.b16 %v610, %v609
      %627 = vmatpush.bf16.msra.mxu0 %v618
      %628 = vmatpush.bf16.msra.mxu0 %v617
      %629 = vmatpush.bf16.msra.mxu0 %v616
      %630 = vmatpush.bf16.msra.mxu0 %v615
      %631 = vmatpush.bf16.msra.mxu0 %v614
      %632 = vmatpush.bf16.msra.mxu0 %v613
      %633 = vmatpush.bf16.msra.mxu0 %v612
      %634 = vmatpush.bf16.msra.mxu0 %v611
      %635 = vmatmul.bf16.gmra.mxu0 %v544
      %v636 = vpop.f32.mrf.mxu0
      %v637 = vadd.f32 0.0, %v636
      %v638 = vpop.f32.mrf.mxu0
      %v639 = vadd.f32 0.0, %v638
      %640 = vmatmul.bf16.gmra.mxu0 %v545
      %v641 = vpop.f32.mrf.mxu0
      %v642 = vadd.f32 0.0, %v641
      %v643 = vpop.f32.mrf.mxu0
      %v644 = vadd.f32 0.0, %v643
      %645 = vmatmul.bf16.gmra.mxu0 %v546
      %v646 = vpop.f32.mrf.mxu0
      %v647 = vadd.f32 0.0, %v646
      %v648 = vpop.f32.mrf.mxu0
      %v649 = vadd.f32 0.0, %v648
      %650 = vmatmul.bf16.gmra.mxu0 %v547
      %v651 = vpop.f32.mrf.mxu0
      %v652 = vadd.f32 0.0, %v651
      %v653 = vpop.f32.mrf.mxu0
      %v654 = vadd.f32 0.0, %v653
      %655 = vmatmul.bf16.gmra.mxu0 %v548
      %v656 = vpop.f32.mrf.mxu0
      %v657 = vadd.f32 0.0, %v656
      %v658 = vpop.f32.mrf.mxu0
      %v659 = vadd.f32 0.0, %v658
      %660 = vmatmul.bf16.gmra.mxu0 %v549
      %v661 = vpop.f32.mrf.mxu0
      %v662 = vadd.f32 0.0, %v661
      %v663 = vpop.f32.mrf.mxu0
      %v664 = vadd.f32 0.0, %v663
      %665 = vmatmul.bf16.gmra.mxu0 %v550
      %v666 = vpop.f32.mrf.mxu0
      %v667 = vadd.f32 0.0, %v666
      %v668 = vpop.f32.mrf.mxu0
      %v669 = vadd.f32 0.0, %v668
      %670 = vmatmul.bf16.gmra.mxu0 %v551
      %v671 = vpop.f32.mrf.mxu0
      %v672 = vadd.f32 0.0, %v671
      %v673 = vpop.f32.mrf.mxu0
      %v674 = vadd.f32 0.0, %v673
      %675 = vmatmul.bf16.gmra.mxu0 %v552
      %v676 = vpop.f32.mrf.mxu0
      %v677 = vadd.f32 0.0, %v676
      %v678 = vpop.f32.mrf.mxu0
      %v679 = vadd.f32 0.0, %v678
      %680 = vmatmul.bf16.gmra.mxu0 %v553
      %v681 = vpop.f32.mrf.mxu0
      %v682 = vadd.f32 0.0, %v681
      %v683 = vpop.f32.mrf.mxu0
      %v684 = vadd.f32 0.0, %v683
      %685 = vmatmul.bf16.gmra.mxu0 %v554
      %v686 = vpop.f32.mrf.mxu0
      %v687 = vadd.f32 0.0, %v686
      %v688 = vpop.f32.mrf.mxu0
      %v689 = vadd.f32 0.0, %v688
      %690 = vmatmul.bf16.gmra.mxu0 %v555
      %v691 = vpop.f32.mrf.mxu0
      %v692 = vadd.f32 0.0, %v691
      %v693 = vpop.f32.mrf.mxu0
      %v694 = vadd.f32 0.0, %v693
      %695 = vmatmul.bf16.gmra.mxu0 %v556
      %v696 = vpop.f32.mrf.mxu0
      %v697 = vadd.f32 0.0, %v696
      %v698 = vpop.f32.mrf.mxu0
      %v699 = vadd.f32 0.0, %v698
      %700 = vmatmul.bf16.gmra.mxu0 %v557
      %v701 = vpop.f32.mrf.mxu0
      %v702 = vadd.f32 0.0, %v701
      %v703 = vpop.f32.mrf.mxu0
      %v704 = vadd.f32 0.0, %v703
      %705 = vmatmul.bf16.gmra.mxu0 %v558
      %v706 = vpop.f32.mrf.mxu0
      %v707 = vadd.f32 0.0, %v706
      %v708 = vpop.f32.mrf.mxu0
      %v709 = vadd.f32 0.0, %v708
      %710 = vmatmul.bf16.gmra.mxu0 %v559
      %v711 = vpop.f32.mrf.mxu0
      %v712 = vadd.f32 0.0, %v711
      %v713 = vpop.f32.mrf.mxu0
      %v714 = vadd.f32 0.0, %v713
      %715 = vmatmul.bf16.gmra.mxu0 %v560
      %v716 = vpop.f32.mrf.mxu0
      %v717 = vadd.f32 0.0, %v716
      %v718 = vpop.f32.mrf.mxu0
      %v719 = vadd.f32 0.0, %v718
      %720 = vmatmul.bf16.gmra.mxu0 %v561
      %v721 = vpop.f32.mrf.mxu0
      %v722 = vadd.f32 0.0, %v721
      %v723 = vpop.f32.mrf.mxu0
      %v724 = vadd.f32 0.0, %v723
      %725 = vdwg.mxu0
      %v742 = vunpack.c.l.b16 %v492
      %v743 = vunpack.c.l.b16 %v493
      %v744 = vunpack.c.l.b16 %v494
      %v745 = vunpack.c.l.b16 %v495
      %v746 = vunpack.c.l.b16 %v496
      %v747 = vunpack.c.l.b16 %v497
      %v748 = vunpack.c.l.b16 %v498
      %v749 = vunpack.c.l.b16 %v499
      %v750 = vunpack.c.l.b16 %v500
      %v751 = vunpack.c.l.b16 %v501
      %v752 = vunpack.c.l.b16 %v502
      %v753 = vunpack.c.l.b16 %v503
      %v754 = vunpack.c.l.b16 %v504
      %v755 = vunpack.c.l.b16 %v505
      %v756 = vunpack.c.l.b16 %v506
      %v757 = vunpack.c.l.b16 %v507
      %v758 = vpack.c.b16 %v743, %v742
      %v759 = vpack.c.b16 %v745, %v744
      %v760 = vpack.c.b16 %v747, %v746
      %v761 = vpack.c.b16 %v749, %v748
      %v762 = vpack.c.b16 %v751, %v750
      %v763 = vpack.c.b16 %v753, %v752
      %v764 = vpack.c.b16 %v755, %v754
      %v765 = vpack.c.b16 %v757, %v756
      %774 = vmatpush.bf16.msra.mxu0 %v765
      %775 = vmatpush.bf16.msra.mxu0 %v764
      %776 = vmatpush.bf16.msra.mxu0 %v763
      %777 = vmatpush.bf16.msra.mxu0 %v762
      %778 = vmatpush.bf16.msra.mxu0 %v761
      %779 = vmatpush.bf16.msra.mxu0 %v760
      %780 = vmatpush.bf16.msra.mxu0 %v759
      %781 = vmatpush.bf16.msra.mxu0 %v758
      %782 = vmatmul.bf16.gmra.mxu0 %v474
      %v783 = vpop.f32.mrf.mxu0
      %v784 = vadd.f32 %v637, %v783
      %v785 = vpop.f32.mrf.mxu0
      %v786 = vadd.f32 %v639, %v785
      %787 = vmatmul.bf16.gmra.mxu0 %v475
      %v788 = vpop.f32.mrf.mxu0
      %v789 = vadd.f32 %v642, %v788
      %v790 = vpop.f32.mrf.mxu0
      %v791 = vadd.f32 %v644, %v790
      %792 = vmatmul.bf16.gmra.mxu0 %v476
      %v793 = vpop.f32.mrf.mxu0
      %v794 = vadd.f32 %v647, %v793
      %v795 = vpop.f32.mrf.mxu0
      %v796 = vadd.f32 %v649, %v795
      %797 = vmatmul.bf16.gmra.mxu0 %v477
      %v798 = vpop.f32.mrf.mxu0
      %v799 = vadd.f32 %v652, %v798
      %v800 = vpop.f32.mrf.mxu0
      %v801 = vadd.f32 %v654, %v800
      %802 = vmatmul.bf16.gmra.mxu0 %v478
      %v803 = vpop.f32.mrf.mxu0
      %v804 = vadd.f32 %v657, %v803
      %v805 = vpop.f32.mrf.mxu0
      %v806 = vadd.f32 %v659, %v805
      %807 = vmatmul.bf16.gmra.mxu0 %v479
      %v808 = vpop.f32.mrf.mxu0
      %v809 = vadd.f32 %v662, %v808
      %v810 = vpop.f32.mrf.mxu0
      %v811 = vadd.f32 %v664, %v810
      %812 = vmatmul.bf16.gmra.mxu0 %v480
      %v813 = vpop.f32.mrf.mxu0
      %v814 = vadd.f32 %v667, %v813
      %v815 = vpop.f32.mrf.mxu0
      %v816 = vadd.f32 %v669, %v815
      %817 = vmatmul.bf16.gmra.mxu0 %v481
      %v818 = vpop.f32.mrf.mxu0
      %v819 = vadd.f32 %v672, %v818
      %v820 = vpop.f32.mrf.mxu0
      %v821 = vadd.f32 %v674, %v820
      %822 = vmatmul.bf16.gmra.mxu0 %v482
      %v823 = vpop.f32.mrf.mxu0
      %v824 = vadd.f32 %v677, %v823
      %v825 = vpop.f32.mrf.mxu0
      %v826 = vadd.f32 %v679, %v825
      %827 = vmatmul.bf16.gmra.mxu0 %v483
      %v828 = vpop.f32.mrf.mxu0
      %v829 = vadd.f32 %v682, %v828
      %v830 = vpop.f32.mrf.mxu0
      %v831 = vadd.f32 %v684, %v830
      %832 = vmatmul.bf16.gmra.mxu0 %v484
      %v833 = vpop.f32.mrf.mxu0
      %v834 = vadd.f32 %v687, %v833
      %v835 = vpop.f32.mrf.mxu0
      %v836 = vadd.f32 %v689, %v835
      %837 = vmatmul.bf16.gmra.mxu0 %v485
      %v838 = vpop.f32.mrf.mxu0
      %v839 = vadd.f32 %v692, %v838
      %v840 = vpop.f32.mrf.mxu0
      %v841 = vadd.f32 %v694, %v840
      %842 = vmatmul.bf16.gmra.mxu0 %v486
      %v843 = vpop.f32.mrf.mxu0
      %v844 = vadd.f32 %v697, %v843
      %v845 = vpop.f32.mrf.mxu0
      %v846 = vadd.f32 %v699, %v845
      %847 = vmatmul.bf16.gmra.mxu0 %v487
      %v848 = vpop.f32.mrf.mxu0
      %v849 = vadd.f32 %v702, %v848
      %v850 = vpop.f32.mrf.mxu0
      %v851 = vadd.f32 %v704, %v850
      %852 = vmatmul.bf16.gmra.mxu0 %v488
      %v853 = vpop.f32.mrf.mxu0
      %v854 = vadd.f32 %v707, %v853
      %v855 = vpop.f32.mrf.mxu0
      %v856 = vadd.f32 %v709, %v855
      %857 = vmatmul.bf16.gmra.mxu0 %v489
      %v858 = vpop.f32.mrf.mxu0
      %v859 = vadd.f32 %v712, %v858
      %v860 = vpop.f32.mrf.mxu0
      %v861 = vadd.f32 %v714, %v860
      %862 = vmatmul.bf16.gmra.mxu0 %v490
      %v863 = vpop.f32.mrf.mxu0
      %v864 = vadd.f32 %v717, %v863
      %v865 = vpop.f32.mrf.mxu0
      %v866 = vadd.f32 %v719, %v865
      %867 = vmatmul.bf16.gmra.mxu0 %v491
      %v868 = vpop.f32.mrf.mxu0
      %v869 = vadd.f32 %v722, %v868
      %v870 = vpop.f32.mrf.mxu0
      %v871 = vadd.f32 %v724, %v870
      %872 = vdwg.mxu0
      %v873 = vld [vmem:[%s354 + $0x2] sm:$0xff]
      %v874 = vld [vmem:[%s354 + $0xa] sm:$0xff]
      %v875 = vld [vmem:[%s354 + $0x12] sm:$0xff]
      %v876 = vld [vmem:[%s354 + $0x1a] sm:$0xff]
      %v877 = vld [vmem:[%s354 + $0x22] sm:$0xff]
      %v878 = vld [vmem:[%s354 + $0x2a] sm:$0xff]
      %v879 = vld [vmem:[%s354 + $0x32] sm:$0xff]
      %v880 = vld [vmem:[%s354 + $0x3a] sm:$0xff]
      %v881 = vld [vmem:[%s354 + $0x42] sm:$0xff]
      %v882 = vld [vmem:[%s354 + $0x4a] sm:$0xff]
      %v883 = vld [vmem:[%s354 + $0x52] sm:$0xff]
      %v884 = vld [vmem:[%s354 + $0x5a] sm:$0xff]
      %v885 = vld [vmem:[%s354 + $0x62] sm:$0xff]
      %v886 = vld [vmem:[%s354 + $0x6a] sm:$0xff]
      %v887 = vld [vmem:[%s354 + $0x72] sm:$0xff]
      %v888 = vld [vmem:[%s354 + $0x7a] sm:$0xff]
      %v889 = vld [vmem:[%s354 + $0x82] sm:$0xff]
      %v890 = vld [vmem:[%s354 + $0x8a] sm:$0xff]
      %v891 = vld [vmem:[%s354 + $0x92] sm:$0xff]
      %v892 = vld [vmem:[%s354 + $0x9a] sm:$0xff]
      %v893 = vld [vmem:[%s354 + $0xa2] sm:$0xff]
      %v894 = vld [vmem:[%s354 + $0xaa] sm:$0xff]
      %v895 = vld [vmem:[%s354 + $0xb2] sm:$0xff]
      %v896 = vld [vmem:[%s354 + $0xba] sm:$0xff]
      %v897 = vld [vmem:[%s354 + $0xc2] sm:$0xff]
      %v898 = vld [vmem:[%s354 + $0xca] sm:$0xff]
      %v899 = vld [vmem:[%s354 + $0xd2] sm:$0xff]
      %v900 = vld [vmem:[%s354 + $0xda] sm:$0xff]
      %v901 = vld [vmem:[%s354 + $0xe2] sm:$0xff]
      %v902 = vld [vmem:[%s354 + $0xea] sm:$0xff]
      %v903 = vld [vmem:[%s354 + $0xf2] sm:$0xff]
      %v904 = vld [vmem:[%s354 + $0xfa] sm:$0xff]
      %v905 = vld [vmem:[%s354 + $0x102] sm:$0xff]
      %v906 = vld [vmem:[%s354 + $0x10a] sm:$0xff]
      %v907 = vld [vmem:[%s354 + $0x112] sm:$0xff]
      %v908 = vld [vmem:[%s354 + $0x11a] sm:$0xff]
      %v909 = vpack.c.bf16 %v874, %v873
      %v910 = vpack.c.bf16 %v876, %v875
      %v911 = vpack.c.bf16 %v878, %v877
      %v912 = vpack.c.bf16 %v880, %v879
      %v913 = vpack.c.bf16 %v882, %v881
      %v914 = vpack.c.bf16 %v884, %v883
      %v915 = vpack.c.bf16 %v886, %v885
      %v916 = vpack.c.bf16 %v888, %v887
      %v917 = vpack.c.bf16 %v890, %v889
      %v918 = vpack.c.bf16 %v892, %v891
      %v919 = vpack.c.bf16 %v894, %v893
      %v920 = vpack.c.bf16 %v896, %v895
      %v921 = vpack.c.bf16 %v898, %v897
      %v922 = vpack.c.bf16 %v900, %v899
      %v923 = vpack.c.bf16 %v902, %v901
      %v924 = vpack.c.bf16 %v904, %v903
      %v925 = vpack.c.bf16 %v906, %v905
      %v926 = vpack.c.bf16 %v908, %v907
      %s927 = scalar_lea.vmem %s1, 128
      %v928 = vld [vmem:[%s927] sm:$0xf]
      %v929 = vld [vmem:[%s927 + $0x4] sm:$0xf]
      %v930 = vld [vmem:[%s927 + $0x8] sm:$0xf]
      %v931 = vld [vmem:[%s927 + $0xc] sm:$0xf]
      %v932 = vld [vmem:[%s927 + $0x10] sm:$0xf]
      %v933 = vld [vmem:[%s927 + $0x14] sm:$0xf]
      %v934 = vld [vmem:[%s927 + $0x18] sm:$0xf]
      %v935 = vld [vmem:[%s927 + $0x1c] sm:$0xf]
      %v936 = vld [vmem:[%s927 + $0x20] sm:$0xf]
      %v937 = vld [vmem:[%s927 + $0x24] sm:$0xf]
      %v938 = vld [vmem:[%s927 + $0x28] sm:$0xf]
      %v939 = vld [vmem:[%s927 + $0x2c] sm:$0xf]
      %v940 = vld [vmem:[%s927 + $0x30] sm:$0xf]
      %v941 = vld [vmem:[%s927 + $0x34] sm:$0xf]
      %v942 = vld [vmem:[%s927 + $0x38] sm:$0xf]
      %v943 = vld [vmem:[%s927 + $0x3c] sm:$0xf]
      %v960 = vunpack.c.l.b16 %v928
      %v961 = vunpack.c.l.b16 %v929
      %v962 = vunpack.c.l.b16 %v930
      %v963 = vunpack.c.l.b16 %v931
      %v964 = vunpack.c.l.b16 %v932
      %v965 = vunpack.c.l.b16 %v933
      %v966 = vunpack.c.l.b16 %v934
      %v967 = vunpack.c.l.b16 %v935
      %v968 = vunpack.c.l.b16 %v936
      %v969 = vunpack.c.l.b16 %v937
      %v970 = vunpack.c.l.b16 %v938
      %v971 = vunpack.c.l.b16 %v939
      %v972 = vunpack.c.l.b16 %v940
      %v973 = vunpack.c.l.b16 %v941
      %v974 = vunpack.c.l.b16 %v942
      %v975 = vunpack.c.l.b16 %v943
      %v976 = vpack.c.b16 %v961, %v960
      %v977 = vpack.c.b16 %v963, %v962
      %v978 = vpack.c.b16 %v965, %v964
      %v979 = vpack.c.b16 %v967, %v966
      %v980 = vpack.c.b16 %v969, %v968
      %v981 = vpack.c.b16 %v971, %v970
      %v982 = vpack.c.b16 %v973, %v972
      %v983 = vpack.c.b16 %v975, %v974
      %992 = vmatpush.bf16.msra.mxu0 %v983
      %993 = vmatpush.bf16.msra.mxu0 %v982
      %994 = vmatpush.bf16.msra.mxu0 %v981
      %995 = vmatpush.bf16.msra.mxu0 %v980
      %996 = vmatpush.bf16.msra.mxu0 %v979
      %997 = vmatpush.bf16.msra.mxu0 %v978
      %998 = vmatpush.bf16.msra.mxu0 %v977
      %999 = vmatpush.bf16.msra.mxu0 %v976
      %1000 = vmatmul.bf16.gmra.mxu0 %v909
      %v1001 = vpop.f32.mrf.mxu0
      %v1002 = vadd.f32 0.0, %v1001
      %v1003 = vpop.f32.mrf.mxu0
      %v1004 = vadd.f32 0.0, %v1003
      %1005 = vmatmul.bf16.gmra.mxu0 %v910
      %v1006 = vpop.f32.mrf.mxu0
      %v1007 = vadd.f32 0.0, %v1006
      %v1008 = vpop.f32.mrf.mxu0
      %v1009 = vadd.f32 0.0, %v1008
      %1010 = vmatmul.bf16.gmra.mxu0 %v911
      %v1011 = vpop.f32.mrf.mxu0
      %v1012 = vadd.f32 0.0, %v1011
      %v1013 = vpop.f32.mrf.mxu0
      %v1014 = vadd.f32 0.0, %v1013
      %1015 = vmatmul.bf16.gmra.mxu0 %v912
      %v1016 = vpop.f32.mrf.mxu0
      %v1017 = vadd.f32 0.0, %v1016
      %v1018 = vpop.f32.mrf.mxu0
      %v1019 = vadd.f32 0.0, %v1018
      %1020 = vmatmul.bf16.gmra.mxu0 %v913
      %v1021 = vpop.f32.mrf.mxu0
      %v1022 = vadd.f32 0.0, %v1021
      %v1023 = vpop.f32.mrf.mxu0
      %v1024 = vadd.f32 0.0, %v1023
      %1025 = vmatmul.bf16.gmra.mxu0 %v914
      %v1026 = vpop.f32.mrf.mxu0
      %v1027 = vadd.f32 0.0, %v1026
      %v1028 = vpop.f32.mrf.mxu0
      %v1029 = vadd.f32 0.0, %v1028
      %1030 = vmatmul.bf16.gmra.mxu0 %v915
      %v1031 = vpop.f32.mrf.mxu0
      %v1032 = vadd.f32 0.0, %v1031
      %v1033 = vpop.f32.mrf.mxu0
      %v1034 = vadd.f32 0.0, %v1033
      %1035 = vmatmul.bf16.gmra.mxu0 %v916
      %v1036 = vpop.f32.mrf.mxu0
      %v1037 = vadd.f32 0.0, %v1036
      %v1038 = vpop.f32.mrf.mxu0
      %v1039 = vadd.f32 0.0, %v1038
      %1040 = vmatmul.bf16.gmra.mxu0 %v917
      %v1041 = vpop.f32.mrf.mxu0
      %v1042 = vadd.f32 0.0, %v1041
      %v1043 = vpop.f32.mrf.mxu0
      %v1044 = vadd.f32 0.0, %v1043
      %1045 = vmatmul.bf16.gmra.mxu0 %v918
      %v1046 = vpop.f32.mrf.mxu0
      %v1047 = vadd.f32 0.0, %v1046
      %v1048 = vpop.f32.mrf.mxu0
      %v1049 = vadd.f32 0.0, %v1048
      %1050 = vmatmul.bf16.gmra.mxu0 %v919
      %v1051 = vpop.f32.mrf.mxu0
      %v1052 = vadd.f32 0.0, %v1051
      %v1053 = vpop.f32.mrf.mxu0
      %v1054 = vadd.f32 0.0, %v1053
      %1055 = vmatmul.bf16.gmra.mxu0 %v920
      %v1056 = vpop.f32.mrf.mxu0
      %v1057 = vadd.f32 0.0, %v1056
      %v1058 = vpop.f32.mrf.mxu0
      %v1059 = vadd.f32 0.0, %v1058
      %1060 = vmatmul.bf16.gmra.mxu0 %v921
      %v1061 = vpop.f32.mrf.mxu0
      %v1062 = vadd.f32 0.0, %v1061
      %v1063 = vpop.f32.mrf.mxu0
      %v1064 = vadd.f32 0.0, %v1063
      %1065 = vmatmul.bf16.gmra.mxu0 %v922
      %v1066 = vpop.f32.mrf.mxu0
      %v1067 = vadd.f32 0.0, %v1066
      %v1068 = vpop.f32.mrf.mxu0
      %v1069 = vadd.f32 0.0, %v1068
      %1070 = vmatmul.bf16.gmra.mxu0 %v923
      %v1071 = vpop.f32.mrf.mxu0
      %v1072 = vadd.f32 0.0, %v1071
      %v1073 = vpop.f32.mrf.mxu0
      %v1074 = vadd.f32 0.0, %v1073
      %1075 = vmatmul.bf16.gmra.mxu0 %v924
      %v1076 = vpop.f32.mrf.mxu0
      %v1077 = vadd.f32 0.0, %v1076
      %v1078 = vpop.f32.mrf.mxu0
      %v1079 = vadd.f32 0.0, %v1078
      %1080 = vmatmul.bf16.gmra.mxu0 %v925
      %v1081 = vpop.f32.mrf.mxu0
      %v1082 = vadd.f32 0.0, %v1081
      %v1083 = vpop.f32.mrf.mxu0
      %v1084 = vadd.f32 0.0, %v1083
      %1085 = vmatmul.bf16.gmra.mxu0 %v926
      %v1086 = vpop.f32.mrf.mxu0
      %v1087 = vadd.f32 0.0, %v1086
      %v1088 = vpop.f32.mrf.mxu0
      %v1089 = vadd.f32 0.0, %v1088
      %1090 = vdwg.mxu0
      %v1091 = vadd.f32 %v784, %v1002
      %v1092 = vadd.f32 %v786, %v1004
      %v1093 = vadd.f32 %v789, %v1007
      %v1094 = vadd.f32 %v791, %v1009
      %v1095 = vadd.f32 %v794, %v1012
      %v1096 = vadd.f32 %v796, %v1014
      %v1097 = vadd.f32 %v799, %v1017
      %v1098 = vadd.f32 %v801, %v1019
      %v1099 = vadd.f32 %v804, %v1022
      %v1100 = vadd.f32 %v806, %v1024
      %v1101 = vadd.f32 %v809, %v1027
      %v1102 = vadd.f32 %v811, %v1029
      %v1103 = vadd.f32 %v814, %v1032
      %v1104 = vadd.f32 %v816, %v1034
      %v1105 = vadd.f32 %v819, %v1037
      %v1106 = vadd.f32 %v821, %v1039
      %v1107 = vadd.f32 %v824, %v1042
      %v1108 = vadd.f32 %v826, %v1044
      %v1109 = vadd.f32 %v829, %v1047
      %v1110 = vadd.f32 %v831, %v1049
      %v1111 = vadd.f32 %v834, %v1052
      %v1112 = vadd.f32 %v836, %v1054
      %v1113 = vadd.f32 %v839, %v1057
      %v1114 = vadd.f32 %v841, %v1059
      %v1115 = vadd.f32 %v844, %v1062
      %v1116 = vadd.f32 %v846, %v1064
      %v1117 = vadd.f32 %v849, %v1067
      %v1118 = vadd.f32 %v851, %v1069
      %v1119 = vadd.f32 %v854, %v1072
      %v1120 = vadd.f32 %v856, %v1074
      %v1121 = vadd.f32 %v859, %v1077
      %v1122 = vadd.f32 %v861, %v1079
      %v1123 = vadd.f32 %v864, %v1082
      %v1124 = vadd.f32 %v866, %v1084
      %v1125 = vadd.f32 %v869, %v1087
      %v1126 = vadd.f32 %v871, %v1089
      %v1127 = vld [vmem:[%s354 + $0x12] sm:$0xff]
      %v1128 = vld [vmem:[%s354 + $0x1a] sm:$0xff]
      %v1129 = vld [vmem:[%s354 + $0x22] sm:$0xff]
      %v1130 = vld [vmem:[%s354 + $0x2a] sm:$0xff]
      %v1131 = vld [vmem:[%s354 + $0x32] sm:$0xff]
      %v1132 = vld [vmem:[%s354 + $0x3a] sm:$0xff]
      %v1133 = vld [vmem:[%s354 + $0x42] sm:$0xff]
      %v1134 = vld [vmem:[%s354 + $0x4a] sm:$0xff]
      %v1135 = vld [vmem:[%s354 + $0x52] sm:$0xff]
      %v1136 = vld [vmem:[%s354 + $0x5a] sm:$0xff]
      %v1137 = vld [vmem:[%s354 + $0x62] sm:$0xff]
      %v1138 = vld [vmem:[%s354 + $0x6a] sm:$0xff]
      %v1139 = vld [vmem:[%s354 + $0x72] sm:$0xff]
      %v1140 = vld [vmem:[%s354 + $0x7a] sm:$0xff]
      %v1141 = vld [vmem:[%s354 + $0x82] sm:$0xff]
      %v1142 = vld [vmem:[%s354 + $0x8a] sm:$0xff]
      %v1143 = vld [vmem:[%s354 + $0x92] sm:$0xff]
      %v1144 = vld [vmem:[%s354 + $0x9a] sm:$0xff]
      %v1145 = vld [vmem:[%s354 + $0xa2] sm:$0xff]
      %v1146 = vld [vmem:[%s354 + $0xaa] sm:$0xff]
      %v1147 = vld [vmem:[%s354 + $0xb2] sm:$0xff]
      %v1148 = vld [vmem:[%s354 + $0xba] sm:$0xff]
      %v1149 = vld [vmem:[%s354 + $0xc2] sm:$0xff]
      %v1150 = vld [vmem:[%s354 + $0xca] sm:$0xff]
      %v1151 = vld [vmem:[%s354 + $0xd2] sm:$0xff]
      %v1152 = vld [vmem:[%s354 + $0xda] sm:$0xff]
      %v1153 = vld [vmem:[%s354 + $0xe2] sm:$0xff]
      %v1154 = vld [vmem:[%s354 + $0xea] sm:$0xff]
      %v1155 = vld [vmem:[%s354 + $0xf2] sm:$0xff]
      %v1156 = vld [vmem:[%s354 + $0xfa] sm:$0xff]
      %v1157 = vld [vmem:[%s354 + $0x102] sm:$0xff]
      %v1158 = vld [vmem:[%s354 + $0x10a] sm:$0xff]
      %v1159 = vld [vmem:[%s354 + $0x112] sm:$0xff]
      %v1160 = vld [vmem:[%s354 + $0x11a] sm:$0xff]
      %v1161 = vld [vmem:[%s354 + $0x122] sm:$0xff]
      %v1162 = vld [vmem:[%s354 + $0x12a] sm:$0xff]
      %v1163 = vpack.c.bf16 %v1128, %v1127
      %v1164 = vpack.c.bf16 %v1130, %v1129
      %v1165 = vpack.c.bf16 %v1132, %v1131
      %v1166 = vpack.c.bf16 %v1134, %v1133
      %v1167 = vpack.c.bf16 %v1136, %v1135
      %v1168 = vpack.c.bf16 %v1138, %v1137
      %v1169 = vpack.c.bf16 %v1140, %v1139
      %v1170 = vpack.c.bf16 %v1142, %v1141
      %v1171 = vpack.c.bf16 %v1144, %v1143
      %v1172 = vpack.c.bf16 %v1146, %v1145
      %v1173 = vpack.c.bf16 %v1148, %v1147
      %v1174 = vpack.c.bf16 %v1150, %v1149
      %v1175 = vpack.c.bf16 %v1152, %v1151
      %v1176 = vpack.c.bf16 %v1154, %v1153
      %v1177 = vpack.c.bf16 %v1156, %v1155
      %v1178 = vpack.c.bf16 %v1158, %v1157
      %v1179 = vpack.c.bf16 %v1160, %v1159
      %v1180 = vpack.c.bf16 %v1162, %v1161
      %s1181 = scalar_lea.vmem %s1, 192
      %v1182 = vld [vmem:[%s1181] sm:$0xf]
      %v1183 = vld [vmem:[%s1181 + $0x4] sm:$0xf]
      %v1184 = vld [vmem:[%s1181 + $0x8] sm:$0xf]
      %v1185 = vld [vmem:[%s1181 + $0xc] sm:$0xf]
      %v1186 = vld [vmem:[%s1181 + $0x10] sm:$0xf]
      %v1187 = vld [vmem:[%s1181 + $0x14] sm:$0xf]
      %v1188 = vld [vmem:[%s1181 + $0x18] sm:$0xf]
      %v1189 = vld [vmem:[%s1181 + $0x1c] sm:$0xf]
      %v1190 = vld [vmem:[%s1181 + $0x20] sm:$0xf]
      %v1191 = vld [vmem:[%s1181 + $0x24] sm:$0xf]
      %v1192 = vld [vmem:[%s1181 + $0x28] sm:$0xf]
      %v1193 = vld [vmem:[%s1181 + $0x2c] sm:$0xf]
      %v1194 = vld [vmem:[%s1181 + $0x30] sm:$0xf]
      %v1195 = vld [vmem:[%s1181 + $0x34] sm:$0xf]
      %v1196 = vld [vmem:[%s1181 + $0x38] sm:$0xf]
      %v1197 = vld [vmem:[%s1181 + $0x3c] sm:$0xf]
      %v1214 = vunpack.c.l.b16 %v1182
      %v1215 = vunpack.c.l.b16 %v1183
      %v1216 = vunpack.c.l.b16 %v1184
      %v1217 = vunpack.c.l.b16 %v1185
      %v1218 = vunpack.c.l.b16 %v1186
      %v1219 = vunpack.c.l.b16 %v1187
      %v1220 = vunpack.c.l.b16 %v1188
      %v1221 = vunpack.c.l.b16 %v1189
      %v1222 = vunpack.c.l.b16 %v1190
      %v1223 = vunpack.c.l.b16 %v1191
      %v1224 = vunpack.c.l.b16 %v1192
      %v1225 = vunpack.c.l.b16 %v1193
      %v1226 = vunpack.c.l.b16 %v1194
      %v1227 = vunpack.c.l.b16 %v1195
      %v1228 = vunpack.c.l.b16 %v1196
      %v1229 = vunpack.c.l.b16 %v1197
      %v1230 = vpack.c.b16 %v1215, %v1214
      %v1231 = vpack.c.b16 %v1217, %v1216
      %v1232 = vpack.c.b16 %v1219, %v1218
      %v1233 = vpack.c.b16 %v1221, %v1220
      %v1234 = vpack.c.b16 %v1223, %v1222
      %v1235 = vpack.c.b16 %v1225, %v1224
      %v1236 = vpack.c.b16 %v1227, %v1226
      %v1237 = vpack.c.b16 %v1229, %v1228
      %1246 = vmatpush.bf16.msra.mxu0 %v1237
      %1247 = vmatpush.bf16.msra.mxu0 %v1236
      %1248 = vmatpush.bf16.msra.mxu0 %v1235
      %1249 = vmatpush.bf16.msra.mxu0 %v1234
      %1250 = vmatpush.bf16.msra.mxu0 %v1233
      %1251 = vmatpush.bf16.msra.mxu0 %v1232
      %1252 = vmatpush.bf16.msra.mxu0 %v1231
      %1253 = vmatpush.bf16.msra.mxu0 %v1230
      %1254 = vmatmul.bf16.gmra.mxu0 %v1163
      %v1255 = vpop.f32.mrf.mxu0
      %v1256 = vadd.f32 0.0, %v1255
      %v1257 = vpop.f32.mrf.mxu0
      %v1258 = vadd.f32 0.0, %v1257
      %1259 = vmatmul.bf16.gmra.mxu0 %v1164
      %v1260 = vpop.f32.mrf.mxu0
      %v1261 = vadd.f32 0.0, %v1260
      %v1262 = vpop.f32.mrf.mxu0
      %v1263 = vadd.f32 0.0, %v1262
      %1264 = vmatmul.bf16.gmra.mxu0 %v1165
      %v1265 = vpop.f32.mrf.mxu0
      %v1266 = vadd.f32 0.0, %v1265
      %v1267 = vpop.f32.mrf.mxu0
      %v1268 = vadd.f32 0.0, %v1267
      %1269 = vmatmul.bf16.gmra.mxu0 %v1166
      %v1270 = vpop.f32.mrf.mxu0
      %v1271 = vadd.f32 0.0, %v1270
      %v1272 = vpop.f32.mrf.mxu0
      %v1273 = vadd.f32 0.0, %v1272
      %1274 = vmatmul.bf16.gmra.mxu0 %v1167
      %v1275 = vpop.f32.mrf.mxu0
      %v1276 = vadd.f32 0.0, %v1275
      %v1277 = vpop.f32.mrf.mxu0
      %v1278 = vadd.f32 0.0, %v1277
      %1279 = vmatmul.bf16.gmra.mxu0 %v1168
      %v1280 = vpop.f32.mrf.mxu0
      %v1281 = vadd.f32 0.0, %v1280
      %v1282 = vpop.f32.mrf.mxu0
      %v1283 = vadd.f32 0.0, %v1282
      %1284 = vmatmul.bf16.gmra.mxu0 %v1169
      %v1285 = vpop.f32.mrf.mxu0
      %v1286 = vadd.f32 0.0, %v1285
      %v1287 = vpop.f32.mrf.mxu0
      %v1288 = vadd.f32 0.0, %v1287
      %1289 = vmatmul.bf16.gmra.mxu0 %v1170
      %v1290 = vpop.f32.mrf.mxu0
      %v1291 = vadd.f32 0.0, %v1290
      %v1292 = vpop.f32.mrf.mxu0
      %v1293 = vadd.f32 0.0, %v1292
      %1294 = vmatmul.bf16.gmra.mxu0 %v1171
      %v1295 = vpop.f32.mrf.mxu0
      %v1296 = vadd.f32 0.0, %v1295
      %v1297 = vpop.f32.mrf.mxu0
      %v1298 = vadd.f32 0.0, %v1297
      %1299 = vmatmul.bf16.gmra.mxu0 %v1172
      %v1300 = vpop.f32.mrf.mxu0
      %v1301 = vadd.f32 0.0, %v1300
      %v1302 = vpop.f32.mrf.mxu0
      %v1303 = vadd.f32 0.0, %v1302
      %1304 = vmatmul.bf16.gmra.mxu0 %v1173
      %v1305 = vpop.f32.mrf.mxu0
      %v1306 = vadd.f32 0.0, %v1305
      %v1307 = vpop.f32.mrf.mxu0
      %v1308 = vadd.f32 0.0, %v1307
      %1309 = vmatmul.bf16.gmra.mxu0 %v1174
      %v1310 = vpop.f32.mrf.mxu0
      %v1311 = vadd.f32 0.0, %v1310
      %v1312 = vpop.f32.mrf.mxu0
      %v1313 = vadd.f32 0.0, %v1312
      %1314 = vmatmul.bf16.gmra.mxu0 %v1175
      %v1315 = vpop.f32.mrf.mxu0
      %v1316 = vadd.f32 0.0, %v1315
      %v1317 = vpop.f32.mrf.mxu0
      %v1318 = vadd.f32 0.0, %v1317
      %1319 = vmatmul.bf16.gmra.mxu0 %v1176
      %v1320 = vpop.f32.mrf.mxu0
      %v1321 = vadd.f32 0.0, %v1320
      %v1322 = vpop.f32.mrf.mxu0
      %v1323 = vadd.f32 0.0, %v1322
      %1324 = vmatmul.bf16.gmra.mxu0 %v1177
      %v1325 = vpop.f32.mrf.mxu0
      %v1326 = vadd.f32 0.0, %v1325
      %v1327 = vpop.f32.mrf.mxu0
      %v1328 = vadd.f32 0.0, %v1327
      %1329 = vmatmul.bf16.gmra.mxu0 %v1178
      %v1330 = vpop.f32.mrf.mxu0
      %v1331 = vadd.f32 0.0, %v1330
      %v1332 = vpop.f32.mrf.mxu0
      %v1333 = vadd.f32 0.0, %v1332
      %1334 = vmatmul.bf16.gmra.mxu0 %v1179
      %v1335 = vpop.f32.mrf.mxu0
      %v1336 = vadd.f32 0.0, %v1335
      %v1337 = vpop.f32.mrf.mxu0
      %v1338 = vadd.f32 0.0, %v1337
      %1339 = vmatmul.bf16.gmra.mxu0 %v1180
      %v1340 = vpop.f32.mrf.mxu0
      %v1341 = vadd.f32 0.0, %v1340
      %v1342 = vpop.f32.mrf.mxu0
      %v1343 = vadd.f32 0.0, %v1342
      %1344 = vdwg.mxu0
      %v1345 = vadd.f32 %v1091, %v1256
      %v1346 = vadd.f32 %v1092, %v1258
      %v1347 = vadd.f32 %v1093, %v1261
      %v1348 = vadd.f32 %v1094, %v1263
      %v1349 = vadd.f32 %v1095, %v1266
      %v1350 = vadd.f32 %v1096, %v1268
      %v1351 = vadd.f32 %v1097, %v1271
      %v1352 = vadd.f32 %v1098, %v1273
      %v1353 = vadd.f32 %v1099, %v1276
      %v1354 = vadd.f32 %v1100, %v1278
      %v1355 = vadd.f32 %v1101, %v1281
      %v1356 = vadd.f32 %v1102, %v1283
      %v1357 = vadd.f32 %v1103, %v1286
      %v1358 = vadd.f32 %v1104, %v1288
      %v1359 = vadd.f32 %v1105, %v1291
      %v1360 = vadd.f32 %v1106, %v1293
      %v1361 = vadd.f32 %v1107, %v1296
      %v1362 = vadd.f32 %v1108, %v1298
      %v1363 = vadd.f32 %v1109, %v1301
      %v1364 = vadd.f32 %v1110, %v1303
      %v1365 = vadd.f32 %v1111, %v1306
      %v1366 = vadd.f32 %v1112, %v1308
      %v1367 = vadd.f32 %v1113, %v1311
      %v1368 = vadd.f32 %v1114, %v1313
      %v1369 = vadd.f32 %v1115, %v1316
      %v1370 = vadd.f32 %v1116, %v1318
      %v1371 = vadd.f32 %v1117, %v1321
      %v1372 = vadd.f32 %v1118, %v1323
      %v1373 = vadd.f32 %v1119, %v1326
      %v1374 = vadd.f32 %v1120, %v1328
      %v1375 = vadd.f32 %v1121, %v1331
      %v1376 = vadd.f32 %v1122, %v1333
      %v1377 = vadd.f32 %v1123, %v1336
      %v1378 = vadd.f32 %v1124, %v1338
      %v1379 = vadd.f32 %v1125, %v1341
      %v1380 = vadd.f32 %v1126, %v1343
      %v1381 = vld [vmem:[%s354 + $0x13] sm:$0xff]
      %v1382 = vld [vmem:[%s354 + $0x1b] sm:$0xff]
      %v1383 = vld [vmem:[%s354 + $0x23] sm:$0xff]
      %v1384 = vld [vmem:[%s354 + $0x2b] sm:$0xff]
      %v1385 = vld [vmem:[%s354 + $0x33] sm:$0xff]
      %v1386 = vld [vmem:[%s354 + $0x3b] sm:$0xff]
      %v1387 = vld [vmem:[%s354 + $0x43] sm:$0xff]
      %v1388 = vld [vmem:[%s354 + $0x4b] sm:$0xff]
      %v1389 = vld [vmem:[%s354 + $0x53] sm:$0xff]
      %v1390 = vld [vmem:[%s354 + $0x5b] sm:$0xff]
      %v1391 = vld [vmem:[%s354 + $0x63] sm:$0xff]
      %v1392 = vld [vmem:[%s354 + $0x6b] sm:$0xff]
      %v1393 = vld [vmem:[%s354 + $0x73] sm:$0xff]
      %v1394 = vld [vmem:[%s354 + $0x7b] sm:$0xff]
      %v1395 = vld [vmem:[%s354 + $0x83] sm:$0xff]
      %v1396 = vld [vmem:[%s354 + $0x8b] sm:$0xff]
      %v1397 = vld [vmem:[%s354 + $0x93] sm:$0xff]
      %v1398 = vld [vmem:[%s354 + $0x9b] sm:$0xff]
      %v1399 = vld [vmem:[%s354 + $0xa3] sm:$0xff]
      %v1400 = vld [vmem:[%s354 + $0xab] sm:$0xff]
      %v1401 = vld [vmem:[%s354 + $0xb3] sm:$0xff]
      %v1402 = vld [vmem:[%s354 + $0xbb] sm:$0xff]
      %v1403 = vld [vmem:[%s354 + $0xc3] sm:$0xff]
      %v1404 = vld [vmem:[%s354 + $0xcb] sm:$0xff]
      %v1405 = vld [vmem:[%s354 + $0xd3] sm:$0xff]
      %v1406 = vld [vmem:[%s354 + $0xdb] sm:$0xff]
      %v1407 = vld [vmem:[%s354 + $0xe3] sm:$0xff]
      %v1408 = vld [vmem:[%s354 + $0xeb] sm:$0xff]
      %v1409 = vld [vmem:[%s354 + $0xf3] sm:$0xff]
      %v1410 = vld [vmem:[%s354 + $0xfb] sm:$0xff]
      %v1411 = vld [vmem:[%s354 + $0x103] sm:$0xff]
      %v1412 = vld [vmem:[%s354 + $0x10b] sm:$0xff]
      %v1413 = vld [vmem:[%s354 + $0x113] sm:$0xff]
      %v1414 = vld [vmem:[%s354 + $0x11b] sm:$0xff]
      %v1415 = vld [vmem:[%s354 + $0x123] sm:$0xff]
      %v1416 = vld [vmem:[%s354 + $0x12b] sm:$0xff]
      %v1417 = vpack.c.bf16 %v1382, %v1381
      %v1418 = vpack.c.bf16 %v1384, %v1383
      %v1419 = vpack.c.bf16 %v1386, %v1385
      %v1420 = vpack.c.bf16 %v1388, %v1387
      %v1421 = vpack.c.bf16 %v1390, %v1389
      %v1422 = vpack.c.bf16 %v1392, %v1391
      %v1423 = vpack.c.bf16 %v1394, %v1393
      %v1424 = vpack.c.bf16 %v1396, %v1395
      %v1425 = vpack.c.bf16 %v1398, %v1397
      %v1426 = vpack.c.bf16 %v1400, %v1399
      %v1427 = vpack.c.bf16 %v1402, %v1401
      %v1428 = vpack.c.bf16 %v1404, %v1403
      %v1429 = vpack.c.bf16 %v1406, %v1405
      %v1430 = vpack.c.bf16 %v1408, %v1407
      %v1431 = vpack.c.bf16 %v1410, %v1409
      %v1432 = vpack.c.bf16 %v1412, %v1411
      %v1433 = vpack.c.bf16 %v1414, %v1413
      %v1434 = vpack.c.bf16 %v1416, %v1415
      %s1435 = scalar_lea.vmem %s1, 256
      %v1436 = vld [vmem:[%s1435] sm:$0xf]
      %v1437 = vld [vmem:[%s1435 + $0x4] sm:$0xf]
      %v1438 = vld [vmem:[%s1435 + $0x8] sm:$0xf]
      %v1439 = vld [vmem:[%s1435 + $0xc] sm:$0xf]
      %v1440 = vld [vmem:[%s1435 + $0x10] sm:$0xf]
      %v1441 = vld [vmem:[%s1435 + $0x14] sm:$0xf]
      %v1442 = vld [vmem:[%s1435 + $0x18] sm:$0xf]
      %v1443 = vld [vmem:[%s1435 + $0x1c] sm:$0xf]
      %v1444 = vld [vmem:[%s1435 + $0x20] sm:$0xf]
      %v1445 = vld [vmem:[%s1435 + $0x24] sm:$0xf]
      %v1446 = vld [vmem:[%s1435 + $0x28] sm:$0xf]
      %v1447 = vld [vmem:[%s1435 + $0x2c] sm:$0xf]
      %v1448 = vld [vmem:[%s1435 + $0x30] sm:$0xf]
      %v1449 = vld [vmem:[%s1435 + $0x34] sm:$0xf]
      %v1450 = vld [vmem:[%s1435 + $0x38] sm:$0xf]
      %v1451 = vld [vmem:[%s1435 + $0x3c] sm:$0xf]
      %v1468 = vunpack.c.l.b16 %v1436
      %v1469 = vunpack.c.l.b16 %v1437
      %v1470 = vunpack.c.l.b16 %v1438
      %v1471 = vunpack.c.l.b16 %v1439
      %v1472 = vunpack.c.l.b16 %v1440
      %v1473 = vunpack.c.l.b16 %v1441
      %v1474 = vunpack.c.l.b16 %v1442
      %v1475 = vunpack.c.l.b16 %v1443
      %v1476 = vunpack.c.l.b16 %v1444
      %v1477 = vunpack.c.l.b16 %v1445
      %v1478 = vunpack.c.l.b16 %v1446
      %v1479 = vunpack.c.l.b16 %v1447
      %v1480 = vunpack.c.l.b16 %v1448
      %v1481 = vunpack.c.l.b16 %v1449
      %v1482 = vunpack.c.l.b16 %v1450
      %v1483 = vunpack.c.l.b16 %v1451
      %v1484 = vpack.c.b16 %v1469, %v1468
      %v1485 = vpack.c.b16 %v1471, %v1470
      %v1486 = vpack.c.b16 %v1473, %v1472
      %v1487 = vpack.c.b16 %v1475, %v1474
      %v1488 = vpack.c.b16 %v1477, %v1476
      %v1489 = vpack.c.b16 %v1479, %v1478
      %v1490 = vpack.c.b16 %v1481, %v1480
      %v1491 = vpack.c.b16 %v1483, %v1482
      %1500 = vmatpush.bf16.msra.mxu0 %v1491
      %1501 = vmatpush.bf16.msra.mxu0 %v1490
      %1502 = vmatpush.bf16.msra.mxu0 %v1489
      %1503 = vmatpush.bf16.msra.mxu0 %v1488
      %1504 = vmatpush.bf16.msra.mxu0 %v1487
      %1505 = vmatpush.bf16.msra.mxu0 %v1486
      %1506 = vmatpush.bf16.msra.mxu0 %v1485
      %1507 = vmatpush.bf16.msra.mxu0 %v1484
      %1508 = vmatmul.bf16.gmra.mxu0 %v1417
      %v1509 = vpop.f32.mrf.mxu0
      %v1510 = vadd.f32 0.0, %v1509
      %v1511 = vpop.f32.mrf.mxu0
      %v1512 = vadd.f32 0.0, %v1511
      %1513 = vmatmul.bf16.gmra.mxu0 %v1418
      %v1514 = vpop.f32.mrf.mxu0
      %v1515 = vadd.f32 0.0, %v1514
      %v1516 = vpop.f32.mrf.mxu0
      %v1517 = vadd.f32 0.0, %v1516
      %1518 = vmatmul.bf16.gmra.mxu0 %v1419
      %v1519 = vpop.f32.mrf.mxu0
      %v1520 = vadd.f32 0.0, %v1519
      %v1521 = vpop.f32.mrf.mxu0
      %v1522 = vadd.f32 0.0, %v1521
      %1523 = vmatmul.bf16.gmra.mxu0 %v1420
      %v1524 = vpop.f32.mrf.mxu0
      %v1525 = vadd.f32 0.0, %v1524
      %v1526 = vpop.f32.mrf.mxu0
      %v1527 = vadd.f32 0.0, %v1526
      %1528 = vmatmul.bf16.gmra.mxu0 %v1421
      %v1529 = vpop.f32.mrf.mxu0
      %v1530 = vadd.f32 0.0, %v1529
      %v1531 = vpop.f32.mrf.mxu0
      %v1532 = vadd.f32 0.0, %v1531
      %1533 = vmatmul.bf16.gmra.mxu0 %v1422
      %v1534 = vpop.f32.mrf.mxu0
      %v1535 = vadd.f32 0.0, %v1534
      %v1536 = vpop.f32.mrf.mxu0
      %v1537 = vadd.f32 0.0, %v1536
      %1538 = vmatmul.bf16.gmra.mxu0 %v1423
      %v1539 = vpop.f32.mrf.mxu0
      %v1540 = vadd.f32 0.0, %v1539
      %v1541 = vpop.f32.mrf.mxu0
      %v1542 = vadd.f32 0.0, %v1541
      %1543 = vmatmul.bf16.gmra.mxu0 %v1424
      %v1544 = vpop.f32.mrf.mxu0
      %v1545 = vadd.f32 0.0, %v1544
      %v1546 = vpop.f32.mrf.mxu0
      %v1547 = vadd.f32 0.0, %v1546
      %1548 = vmatmul.bf16.gmra.mxu0 %v1425
      %v1549 = vpop.f32.mrf.mxu0
      %v1550 = vadd.f32 0.0, %v1549
      %v1551 = vpop.f32.mrf.mxu0
      %v1552 = vadd.f32 0.0, %v1551
      %1553 = vmatmul.bf16.gmra.mxu0 %v1426
      %v1554 = vpop.f32.mrf.mxu0
      %v1555 = vadd.f32 0.0, %v1554
      %v1556 = vpop.f32.mrf.mxu0
      %v1557 = vadd.f32 0.0, %v1556
      %1558 = vmatmul.bf16.gmra.mxu0 %v1427
      %v1559 = vpop.f32.mrf.mxu0
      %v1560 = vadd.f32 0.0, %v1559
      %v1561 = vpop.f32.mrf.mxu0
      %v1562 = vadd.f32 0.0, %v1561
      %1563 = vmatmul.bf16.gmra.mxu0 %v1428
      %v1564 = vpop.f32.mrf.mxu0
      %v1565 = vadd.f32 0.0, %v1564
      %v1566 = vpop.f32.mrf.mxu0
      %v1567 = vadd.f32 0.0, %v1566
      %1568 = vmatmul.bf16.gmra.mxu0 %v1429
      %v1569 = vpop.f32.mrf.mxu0
      %v1570 = vadd.f32 0.0, %v1569
      %v1571 = vpop.f32.mrf.mxu0
      %v1572 = vadd.f32 0.0, %v1571
      %1573 = vmatmul.bf16.gmra.mxu0 %v1430
      %v1574 = vpop.f32.mrf.mxu0
      %v1575 = vadd.f32 0.0, %v1574
      %v1576 = vpop.f32.mrf.mxu0
      %v1577 = vadd.f32 0.0, %v1576
      %1578 = vmatmul.bf16.gmra.mxu0 %v1431
      %v1579 = vpop.f32.mrf.mxu0
      %v1580 = vadd.f32 0.0, %v1579
      %v1581 = vpop.f32.mrf.mxu0
      %v1582 = vadd.f32 0.0, %v1581
      %1583 = vmatmul.bf16.gmra.mxu0 %v1432
      %v1584 = vpop.f32.mrf.mxu0
      %v1585 = vadd.f32 0.0, %v1584
      %v1586 = vpop.f32.mrf.mxu0
      %v1587 = vadd.f32 0.0, %v1586
      %1588 = vmatmul.bf16.gmra.mxu0 %v1433
      %v1589 = vpop.f32.mrf.mxu0
      %v1590 = vadd.f32 0.0, %v1589
      %v1591 = vpop.f32.mrf.mxu0
      %v1592 = vadd.f32 0.0, %v1591
      %1593 = vmatmul.bf16.gmra.mxu0 %v1434
      %v1594 = vpop.f32.mrf.mxu0
      %v1595 = vadd.f32 0.0, %v1594
      %v1596 = vpop.f32.mrf.mxu0
      %v1597 = vadd.f32 0.0, %v1596
      %1598 = vdwg.mxu0
      %v1599 = vadd.f32 %v1345, %v1510
      %v1600 = vadd.f32 %v1346, %v1512
      %v1601 = vadd.f32 %v1347, %v1515
      %v1602 = vadd.f32 %v1348, %v1517
      %v1603 = vadd.f32 %v1349, %v1520
      %v1604 = vadd.f32 %v1350, %v1522
      %v1605 = vadd.f32 %v1351, %v1525
      %v1606 = vadd.f32 %v1352, %v1527
      %v1607 = vadd.f32 %v1353, %v1530
      %v1608 = vadd.f32 %v1354, %v1532
      %v1609 = vadd.f32 %v1355, %v1535
      %v1610 = vadd.f32 %v1356, %v1537
      %v1611 = vadd.f32 %v1357, %v1540
      %v1612 = vadd.f32 %v1358, %v1542
      %v1613 = vadd.f32 %v1359, %v1545
      %v1614 = vadd.f32 %v1360, %v1547
      %v1615 = vadd.f32 %v1361, %v1550
      %v1616 = vadd.f32 %v1362, %v1552
      %v1617 = vadd.f32 %v1363, %v1555
      %v1618 = vadd.f32 %v1364, %v1557
      %v1619 = vadd.f32 %v1365, %v1560
      %v1620 = vadd.f32 %v1366, %v1562
      %v1621 = vadd.f32 %v1367, %v1565
      %v1622 = vadd.f32 %v1368, %v1567
      %v1623 = vadd.f32 %v1369, %v1570
      %v1624 = vadd.f32 %v1370, %v1572
      %v1625 = vadd.f32 %v1371, %v1575
      %v1626 = vadd.f32 %v1372, %v1577
      %v1627 = vadd.f32 %v1373, %v1580
      %v1628 = vadd.f32 %v1374, %v1582
      %v1629 = vadd.f32 %v1375, %v1585
      %v1630 = vadd.f32 %v1376, %v1587
      %v1631 = vadd.f32 %v1377, %v1590
      %v1632 = vadd.f32 %v1378, %v1592
      %v1633 = vadd.f32 %v1379, %v1595
      %v1634 = vadd.f32 %v1380, %v1597
      %v1635 = vld [vmem:[%s354 + $0x14] sm:$0xff]
      %v1636 = vld [vmem:[%s354 + $0x1c] sm:$0xff]
      %v1637 = vld [vmem:[%s354 + $0x24] sm:$0xff]
      %v1638 = vld [vmem:[%s354 + $0x2c] sm:$0xff]
      %v1639 = vld [vmem:[%s354 + $0x34] sm:$0xff]
      %v1640 = vld [vmem:[%s354 + $0x3c] sm:$0xff]
      %v1641 = vld [vmem:[%s354 + $0x44] sm:$0xff]
      %v1642 = vld [vmem:[%s354 + $0x4c] sm:$0xff]
      %v1643 = vld [vmem:[%s354 + $0x54] sm:$0xff]
      %v1644 = vld [vmem:[%s354 + $0x5c] sm:$0xff]
      %v1645 = vld [vmem:[%s354 + $0x64] sm:$0xff]
      %v1646 = vld [vmem:[%s354 + $0x6c] sm:$0xff]
      %v1647 = vld [vmem:[%s354 + $0x74] sm:$0xff]
      %v1648 = vld [vmem:[%s354 + $0x7c] sm:$0xff]
      %v1649 = vld [vmem:[%s354 + $0x84] sm:$0xff]
      %v1650 = vld [vmem:[%s354 + $0x8c] sm:$0xff]
      %v1651 = vld [vmem:[%s354 + $0x94] sm:$0xff]
      %v1652 = vld [vmem:[%s354 + $0x9c] sm:$0xff]
      %v1653 = vld [vmem:[%s354 + $0xa4] sm:$0xff]
      %v1654 = vld [vmem:[%s354 + $0xac] sm:$0xff]
      %v1655 = vld [vmem:[%s354 + $0xb4] sm:$0xff]
      %v1656 = vld [vmem:[%s354 + $0xbc] sm:$0xff]
      %v1657 = vld [vmem:[%s354 + $0xc4] sm:$0xff]
      %v1658 = vld [vmem:[%s354 + $0xcc] sm:$0xff]
      %v1659 = vld [vmem:[%s354 + $0xd4] sm:$0xff]
      %v1660 = vld [vmem:[%s354 + $0xdc] sm:$0xff]
      %v1661 = vld [vmem:[%s354 + $0xe4] sm:$0xff]
      %v1662 = vld [vmem:[%s354 + $0xec] sm:$0xff]
      %v1663 = vld [vmem:[%s354 + $0xf4] sm:$0xff]
      %v1664 = vld [vmem:[%s354 + $0xfc] sm:$0xff]
      %v1665 = vld [vmem:[%s354 + $0x104] sm:$0xff]
      %v1666 = vld [vmem:[%s354 + $0x10c] sm:$0xff]
      %v1667 = vld [vmem:[%s354 + $0x114] sm:$0xff]
      %v1668 = vld [vmem:[%s354 + $0x11c] sm:$0xff]
      %v1669 = vld [vmem:[%s354 + $0x124] sm:$0xff]
      %v1670 = vld [vmem:[%s354 + $0x12c] sm:$0xff]
      %v1671 = vpack.c.bf16 %v1636, %v1635
      %v1672 = vpack.c.bf16 %v1638, %v1637
      %v1673 = vpack.c.bf16 %v1640, %v1639
      %v1674 = vpack.c.bf16 %v1642, %v1641
      %v1675 = vpack.c.bf16 %v1644, %v1643
      %v1676 = vpack.c.bf16 %v1646, %v1645
      %v1677 = vpack.c.bf16 %v1648, %v1647
      %v1678 = vpack.c.bf16 %v1650, %v1649
      %v1679 = vpack.c.bf16 %v1652, %v1651
      %v1680 = vpack.c.bf16 %v1654, %v1653
      %v1681 = vpack.c.bf16 %v1656, %v1655
      %v1682 = vpack.c.bf16 %v1658, %v1657
      %v1683 = vpack.c.bf16 %v1660, %v1659
      %v1684 = vpack.c.bf16 %v1662, %v1661
      %v1685 = vpack.c.bf16 %v1664, %v1663
      %v1686 = vpack.c.bf16 %v1666, %v1665
      %v1687 = vpack.c.bf16 %v1668, %v1667
      %v1688 = vpack.c.bf16 %v1670, %v1669
      %s1689 = scalar_lea.vmem %s1, 320
      %v1690 = vld [vmem:[%s1689] sm:$0xf]
      %v1691 = vld [vmem:[%s1689 + $0x4] sm:$0xf]
      %v1692 = vld [vmem:[%s1689 + $0x8] sm:$0xf]
      %v1693 = vld [vmem:[%s1689 + $0xc] sm:$0xf]
      %v1694 = vld [vmem:[%s1689 + $0x10] sm:$0xf]
      %v1695 = vld [vmem:[%s1689 + $0x14] sm:$0xf]
      %v1696 = vld [vmem:[%s1689 + $0x18] sm:$0xf]
      %v1697 = vld [vmem:[%s1689 + $0x1c] sm:$0xf]
      %v1698 = vld [vmem:[%s1689 + $0x20] sm:$0xf]
      %v1699 = vld [vmem:[%s1689 + $0x24] sm:$0xf]
      %v1700 = vld [vmem:[%s1689 + $0x28] sm:$0xf]
      %v1701 = vld [vmem:[%s1689 + $0x2c] sm:$0xf]
      %v1702 = vld [vmem:[%s1689 + $0x30] sm:$0xf]
      %v1703 = vld [vmem:[%s1689 + $0x34] sm:$0xf]
      %v1704 = vld [vmem:[%s1689 + $0x38] sm:$0xf]
      %v1705 = vld [vmem:[%s1689 + $0x3c] sm:$0xf]
      %v1722 = vunpack.c.l.b16 %v1690
      %v1723 = vunpack.c.l.b16 %v1691
      %v1724 = vunpack.c.l.b16 %v1692
      %v1725 = vunpack.c.l.b16 %v1693
      %v1726 = vunpack.c.l.b16 %v1694
      %v1727 = vunpack.c.l.b16 %v1695
      %v1728 = vunpack.c.l.b16 %v1696
      %v1729 = vunpack.c.l.b16 %v1697
      %v1730 = vunpack.c.l.b16 %v1698
      %v1731 = vunpack.c.l.b16 %v1699
      %v1732 = vunpack.c.l.b16 %v1700
      %v1733 = vunpack.c.l.b16 %v1701
      %v1734 = vunpack.c.l.b16 %v1702
      %v1735 = vunpack.c.l.b16 %v1703
      %v1736 = vunpack.c.l.b16 %v1704
      %v1737 = vunpack.c.l.b16 %v1705
      %v1738 = vpack.c.b16 %v1723, %v1722
      %v1739 = vpack.c.b16 %v1725, %v1724
      %v1740 = vpack.c.b16 %v1727, %v1726
      %v1741 = vpack.c.b16 %v1729, %v1728
      %v1742 = vpack.c.b16 %v1731, %v1730
      %v1743 = vpack.c.b16 %v1733, %v1732
      %v1744 = vpack.c.b16 %v1735, %v1734
      %v1745 = vpack.c.b16 %v1737, %v1736
      %1754 = vmatpush.bf16.msra.mxu0 %v1745
      %1755 = vmatpush.bf16.msra.mxu0 %v1744
      %1756 = vmatpush.bf16.msra.mxu0 %v1743
      %1757 = vmatpush.bf16.msra.mxu0 %v1742
      %1758 = vmatpush.bf16.msra.mxu0 %v1741
      %1759 = vmatpush.bf16.msra.mxu0 %v1740
      %1760 = vmatpush.bf16.msra.mxu0 %v1739
      %1761 = vmatpush.bf16.msra.mxu0 %v1738
      %1762 = vmatmul.bf16.gmra.mxu0 %v1671
      %v1763 = vpop.f32.mrf.mxu0
      %v1764 = vadd.f32 0.0, %v1763
      %v1765 = vpop.f32.mrf.mxu0
      %v1766 = vadd.f32 0.0, %v1765
      %1767 = vmatmul.bf16.gmra.mxu0 %v1672
      %v1768 = vpop.f32.mrf.mxu0
      %v1769 = vadd.f32 0.0, %v1768
      %v1770 = vpop.f32.mrf.mxu0
      %v1771 = vadd.f32 0.0, %v1770
      %1772 = vmatmul.bf16.gmra.mxu0 %v1673
      %v1773 = vpop.f32.mrf.mxu0
      %v1774 = vadd.f32 0.0, %v1773
      %v1775 = vpop.f32.mrf.mxu0
      %v1776 = vadd.f32 0.0, %v1775
      %1777 = vmatmul.bf16.gmra.mxu0 %v1674
      %v1778 = vpop.f32.mrf.mxu0
      %v1779 = vadd.f32 0.0, %v1778
      %v1780 = vpop.f32.mrf.mxu0
      %v1781 = vadd.f32 0.0, %v1780
      %1782 = vmatmul.bf16.gmra.mxu0 %v1675
      %v1783 = vpop.f32.mrf.mxu0
      %v1784 = vadd.f32 0.0, %v1783
      %v1785 = vpop.f32.mrf.mxu0
      %v1786 = vadd.f32 0.0, %v1785
      %1787 = vmatmul.bf16.gmra.mxu0 %v1676
      %v1788 = vpop.f32.mrf.mxu0
      %v1789 = vadd.f32 0.0, %v1788
      %v1790 = vpop.f32.mrf.mxu0
      %v1791 = vadd.f32 0.0, %v1790
      %1792 = vmatmul.bf16.gmra.mxu0 %v1677
      %v1793 = vpop.f32.mrf.mxu0
      %v1794 = vadd.f32 0.0, %v1793
      %v1795 = vpop.f32.mrf.mxu0
      %v1796 = vadd.f32 0.0, %v1795
      %1797 = vmatmul.bf16.gmra.mxu0 %v1678
      %v1798 = vpop.f32.mrf.mxu0
      %v1799 = vadd.f32 0.0, %v1798
      %v1800 = vpop.f32.mrf.mxu0
      %v1801 = vadd.f32 0.0, %v1800
      %1802 = vmatmul.bf16.gmra.mxu0 %v1679
      %v1803 = vpop.f32.mrf.mxu0
      %v1804 = vadd.f32 0.0, %v1803
      %v1805 = vpop.f32.mrf.mxu0
      %v1806 = vadd.f32 0.0, %v1805
      %1807 = vmatmul.bf16.gmra.mxu0 %v1680
      %v1808 = vpop.f32.mrf.mxu0
      %v1809 = vadd.f32 0.0, %v1808
      %v1810 = vpop.f32.mrf.mxu0
      %v1811 = vadd.f32 0.0, %v1810
      %1812 = vmatmul.bf16.gmra.mxu0 %v1681
      %v1813 = vpop.f32.mrf.mxu0
      %v1814 = vadd.f32 0.0, %v1813
      %v1815 = vpop.f32.mrf.mxu0
      %v1816 = vadd.f32 0.0, %v1815
      %1817 = vmatmul.bf16.gmra.mxu0 %v1682
      %v1818 = vpop.f32.mrf.mxu0
      %v1819 = vadd.f32 0.0, %v1818
      %v1820 = vpop.f32.mrf.mxu0
      %v1821 = vadd.f32 0.0, %v1820
      %1822 = vmatmul.bf16.gmra.mxu0 %v1683
      %v1823 = vpop.f32.mrf.mxu0
      %v1824 = vadd.f32 0.0, %v1823
      %v1825 = vpop.f32.mrf.mxu0
      %v1826 = vadd.f32 0.0, %v1825
      %1827 = vmatmul.bf16.gmra.mxu0 %v1684
      %v1828 = vpop.f32.mrf.mxu0
      %v1829 = vadd.f32 0.0, %v1828
      %v1830 = vpop.f32.mrf.mxu0
      %v1831 = vadd.f32 0.0, %v1830
      %1832 = vmatmul.bf16.gmra.mxu0 %v1685
      %v1833 = vpop.f32.mrf.mxu0
      %v1834 = vadd.f32 0.0, %v1833
      %v1835 = vpop.f32.mrf.mxu0
      %v1836 = vadd.f32 0.0, %v1835
      %1837 = vmatmul.bf16.gmra.mxu0 %v1686
      %v1838 = vpop.f32.mrf.mxu0
      %v1839 = vadd.f32 0.0, %v1838
      %v1840 = vpop.f32.mrf.mxu0
      %v1841 = vadd.f32 0.0, %v1840
      %1842 = vmatmul.bf16.gmra.mxu0 %v1687
      %v1843 = vpop.f32.mrf.mxu0
      %v1844 = vadd.f32 0.0, %v1843
      %v1845 = vpop.f32.mrf.mxu0
      %v1846 = vadd.f32 0.0, %v1845
      %1847 = vmatmul.bf16.gmra.mxu0 %v1688
      %v1848 = vpop.f32.mrf.mxu0
      %v1849 = vadd.f32 0.0, %v1848
      %v1850 = vpop.f32.mrf.mxu0
      %v1851 = vadd.f32 0.0, %v1850
      %1852 = vdwg.mxu0
      %v1853 = vadd.f32 %v1599, %v1764
      %v1854 = vadd.f32 %v1600, %v1766
      %v1855 = vadd.f32 %v1601, %v1769
      %v1856 = vadd.f32 %v1602, %v1771
      %v1857 = vadd.f32 %v1603, %v1774
      %v1858 = vadd.f32 %v1604, %v1776
      %v1859 = vadd.f32 %v1605, %v1779
      %v1860 = vadd.f32 %v1606, %v1781
      %v1861 = vadd.f32 %v1607, %v1784
      %v1862 = vadd.f32 %v1608, %v1786
      %v1863 = vadd.f32 %v1609, %v1789
      %v1864 = vadd.f32 %v1610, %v1791
      %v1865 = vadd.f32 %v1611, %v1794
      %v1866 = vadd.f32 %v1612, %v1796
      %v1867 = vadd.f32 %v1613, %v1799
      %v1868 = vadd.f32 %v1614, %v1801
      %v1869 = vadd.f32 %v1615, %v1804
      %v1870 = vadd.f32 %v1616, %v1806
      %v1871 = vadd.f32 %v1617, %v1809
      %v1872 = vadd.f32 %v1618, %v1811
      %v1873 = vadd.f32 %v1619, %v1814
      %v1874 = vadd.f32 %v1620, %v1816
      %v1875 = vadd.f32 %v1621, %v1819
      %v1876 = vadd.f32 %v1622, %v1821
      %v1877 = vadd.f32 %v1623, %v1824
      %v1878 = vadd.f32 %v1624, %v1826
      %v1879 = vadd.f32 %v1625, %v1829
      %v1880 = vadd.f32 %v1626, %v1831
      %v1881 = vadd.f32 %v1627, %v1834
      %v1882 = vadd.f32 %v1628, %v1836
      %v1883 = vadd.f32 %v1629, %v1839
      %v1884 = vadd.f32 %v1630, %v1841
      %v1885 = vadd.f32 %v1631, %v1844
      %v1886 = vadd.f32 %v1632, %v1846
      %v1887 = vadd.f32 %v1633, %v1849
      %v1888 = vadd.f32 %v1634, %v1851
      %v1889 = vld [vmem:[%s354 + $0x24] sm:$0xff]
      %v1890 = vld [vmem:[%s354 + $0x2c] sm:$0xff]
      %v1891 = vld [vmem:[%s354 + $0x34] sm:$0xff]
      %v1892 = vld [vmem:[%s354 + $0x3c] sm:$0xff]
      %v1893 = vld [vmem:[%s354 + $0x44] sm:$0xff]
      %v1894 = vld [vmem:[%s354 + $0x4c] sm:$0xff]
      %v1895 = vld [vmem:[%s354 + $0x54] sm:$0xff]
      %v1896 = vld [vmem:[%s354 + $0x5c] sm:$0xff]
      %v1897 = vld [vmem:[%s354 + $0x64] sm:$0xff]
      %v1898 = vld [vmem:[%s354 + $0x6c] sm:$0xff]
      %v1899 = vld [vmem:[%s354 + $0x74] sm:$0xff]
      %v1900 = vld [vmem:[%s354 + $0x7c] sm:$0xff]
      %v1901 = vld [vmem:[%s354 + $0x84] sm:$0xff]
      %v1902 = vld [vmem:[%s354 + $0x8c] sm:$0xff]
      %v1903 = vld [vmem:[%s354 + $0x94] sm:$0xff]
      %v1904 = vld [vmem:[%s354 + $0x9c] sm:$0xff]
      %v1905 = vld [vmem:[%s354 + $0xa4] sm:$0xff]
      %v1906 = vld [vmem:[%s354 + $0xac] sm:$0xff]
      %v1907 = vld [vmem:[%s354 + $0xb4] sm:$0xff]
      %v1908 = vld [vmem:[%s354 + $0xbc] sm:$0xff]
      %v1909 = vld [vmem:[%s354 + $0xc4] sm:$0xff]
      %v1910 = vld [vmem:[%s354 + $0xcc] sm:$0xff]
      %v1911 = vld [vmem:[%s354 + $0xd4] sm:$0xff]
      %v1912 = vld [vmem:[%s354 + $0xdc] sm:$0xff]
      %v1913 = vld [vmem:[%s354 + $0xe4] sm:$0xff]
      %v1914 = vld [vmem:[%s354 + $0xec] sm:$0xff]
      %v1915 = vld [vmem:[%s354 + $0xf4] sm:$0xff]
      %v1916 = vld [vmem:[%s354 + $0xfc] sm:$0xff]
      %v1917 = vld [vmem:[%s354 + $0x104] sm:$0xff]
      %v1918 = vld [vmem:[%s354 + $0x10c] sm:$0xff]
      %v1919 = vld [vmem:[%s354 + $0x114] sm:$0xff]
      %v1920 = vld [vmem:[%s354 + $0x11c] sm:$0xff]
      %v1921 = vld [vmem:[%s354 + $0x124] sm:$0xff]
      %v1922 = vld [vmem:[%s354 + $0x12c] sm:$0xff]
      %v1923 = vld [vmem:[%s354 + $0x134] sm:$0xff]
      %v1924 = vld [vmem:[%s354 + $0x13c] sm:$0xff]
      %v1925 = vpack.c.bf16 %v1890, %v1889
      %v1926 = vpack.c.bf16 %v1892, %v1891
      %v1927 = vpack.c.bf16 %v1894, %v1893
      %v1928 = vpack.c.bf16 %v1896, %v1895
      %v1929 = vpack.c.bf16 %v1898, %v1897
      %v1930 = vpack.c.bf16 %v1900, %v1899
      %v1931 = vpack.c.bf16 %v1902, %v1901
      %v1932 = vpack.c.bf16 %v1904, %v1903
      %v1933 = vpack.c.bf16 %v1906, %v1905
      %v1934 = vpack.c.bf16 %v1908, %v1907
      %v1935 = vpack.c.bf16 %v1910, %v1909
      %v1936 = vpack.c.bf16 %v1912, %v1911
      %v1937 = vpack.c.bf16 %v1914, %v1913
      %v1938 = vpack.c.bf16 %v1916, %v1915
      %v1939 = vpack.c.bf16 %v1918, %v1917
      %v1940 = vpack.c.bf16 %v1920, %v1919
      %v1941 = vpack.c.bf16 %v1922, %v1921
      %v1942 = vpack.c.bf16 %v1924, %v1923
      %s1943 = scalar_lea.vmem %s1, 384
      %v1944 = vld [vmem:[%s1943] sm:$0xf]
      %v1945 = vld [vmem:[%s1943 + $0x4] sm:$0xf]
      %v1946 = vld [vmem:[%s1943 + $0x8] sm:$0xf]
      %v1947 = vld [vmem:[%s1943 + $0xc] sm:$0xf]
      %v1948 = vld [vmem:[%s1943 + $0x10] sm:$0xf]
      %v1949 = vld [vmem:[%s1943 + $0x14] sm:$0xf]
      %v1950 = vld [vmem:[%s1943 + $0x18] sm:$0xf]
      %v1951 = vld [vmem:[%s1943 + $0x1c] sm:$0xf]
      %v1952 = vld [vmem:[%s1943 + $0x20] sm:$0xf]
      %v1953 = vld [vmem:[%s1943 + $0x24] sm:$0xf]
      %v1954 = vld [vmem:[%s1943 + $0x28] sm:$0xf]
      %v1955 = vld [vmem:[%s1943 + $0x2c] sm:$0xf]
      %v1956 = vld [vmem:[%s1943 + $0x30] sm:$0xf]
      %v1957 = vld [vmem:[%s1943 + $0x34] sm:$0xf]
      %v1958 = vld [vmem:[%s1943 + $0x38] sm:$0xf]
      %v1959 = vld [vmem:[%s1943 + $0x3c] sm:$0xf]
      %v1976 = vunpack.c.l.b16 %v1944
      %v1977 = vunpack.c.l.b16 %v1945
      %v1978 = vunpack.c.l.b16 %v1946
      %v1979 = vunpack.c.l.b16 %v1947
      %v1980 = vunpack.c.l.b16 %v1948
      %v1981 = vunpack.c.l.b16 %v1949
      %v1982 = vunpack.c.l.b16 %v1950
      %v1983 = vunpack.c.l.b16 %v1951
      %v1984 = vunpack.c.l.b16 %v1952
      %v1985 = vunpack.c.l.b16 %v1953
      %v1986 = vunpack.c.l.b16 %v1954
      %v1987 = vunpack.c.l.b16 %v1955
      %v1988 = vunpack.c.l.b16 %v1956
      %v1989 = vunpack.c.l.b16 %v1957
      %v1990 = vunpack.c.l.b16 %v1958
      %v1991 = vunpack.c.l.b16 %v1959
      %v1992 = vpack.c.b16 %v1977, %v1976
      %v1993 = vpack.c.b16 %v1979, %v1978
      %v1994 = vpack.c.b16 %v1981, %v1980
      %v1995 = vpack.c.b16 %v1983, %v1982
      %v1996 = vpack.c.b16 %v1985, %v1984
      %v1997 = vpack.c.b16 %v1987, %v1986
      %v1998 = vpack.c.b16 %v1989, %v1988
      %v1999 = vpack.c.b16 %v1991, %v1990
      %2008 = vmatpush.bf16.msra.mxu0 %v1999
      %2009 = vmatpush.bf16.msra.mxu0 %v1998
      %2010 = vmatpush.bf16.msra.mxu0 %v1997
      %2011 = vmatpush.bf16.msra.mxu0 %v1996
      %2012 = vmatpush.bf16.msra.mxu0 %v1995
      %2013 = vmatpush.bf16.msra.mxu0 %v1994
      %2014 = vmatpush.bf16.msra.mxu0 %v1993
      %2015 = vmatpush.bf16.msra.mxu0 %v1992
      %2016 = vmatmul.bf16.gmra.mxu0 %v1925
      %v2017 = vpop.f32.mrf.mxu0
      %v2018 = vadd.f32 0.0, %v2017
      %v2019 = vpop.f32.mrf.mxu0
      %v2020 = vadd.f32 0.0, %v2019
      %2021 = vmatmul.bf16.gmra.mxu0 %v1926
      %v2022 = vpop.f32.mrf.mxu0
      %v2023 = vadd.f32 0.0, %v2022
      %v2024 = vpop.f32.mrf.mxu0
      %v2025 = vadd.f32 0.0, %v2024
      %2026 = vmatmul.bf16.gmra.mxu0 %v1927
      %v2027 = vpop.f32.mrf.mxu0
      %v2028 = vadd.f32 0.0, %v2027
      %v2029 = vpop.f32.mrf.mxu0
      %v2030 = vadd.f32 0.0, %v2029
      %2031 = vmatmul.bf16.gmra.mxu0 %v1928
      %v2032 = vpop.f32.mrf.mxu0
      %v2033 = vadd.f32 0.0, %v2032
      %v2034 = vpop.f32.mrf.mxu0
      %v2035 = vadd.f32 0.0, %v2034
      %2036 = vmatmul.bf16.gmra.mxu0 %v1929
      %v2037 = vpop.f32.mrf.mxu0
      %v2038 = vadd.f32 0.0, %v2037
      %v2039 = vpop.f32.mrf.mxu0
      %v2040 = vadd.f32 0.0, %v2039
      %2041 = vmatmul.bf16.gmra.mxu0 %v1930
      %v2042 = vpop.f32.mrf.mxu0
      %v2043 = vadd.f32 0.0, %v2042
      %v2044 = vpop.f32.mrf.mxu0
      %v2045 = vadd.f32 0.0, %v2044
      %2046 = vmatmul.bf16.gmra.mxu0 %v1931
      %v2047 = vpop.f32.mrf.mxu0
      %v2048 = vadd.f32 0.0, %v2047
      %v2049 = vpop.f32.mrf.mxu0
      %v2050 = vadd.f32 0.0, %v2049
      %2051 = vmatmul.bf16.gmra.mxu0 %v1932
      %v2052 = vpop.f32.mrf.mxu0
      %v2053 = vadd.f32 0.0, %v2052
      %v2054 = vpop.f32.mrf.mxu0
      %v2055 = vadd.f32 0.0, %v2054
      %2056 = vmatmul.bf16.gmra.mxu0 %v1933
      %v2057 = vpop.f32.mrf.mxu0
      %v2058 = vadd.f32 0.0, %v2057
      %v2059 = vpop.f32.mrf.mxu0
      %v2060 = vadd.f32 0.0, %v2059
      %2061 = vmatmul.bf16.gmra.mxu0 %v1934
      %v2062 = vpop.f32.mrf.mxu0
      %v2063 = vadd.f32 0.0, %v2062
      %v2064 = vpop.f32.mrf.mxu0
      %v2065 = vadd.f32 0.0, %v2064
      %2066 = vmatmul.bf16.gmra.mxu0 %v1935
      %v2067 = vpop.f32.mrf.mxu0
      %v2068 = vadd.f32 0.0, %v2067
      %v2069 = vpop.f32.mrf.mxu0
      %v2070 = vadd.f32 0.0, %v2069
      %2071 = vmatmul.bf16.gmra.mxu0 %v1936
      %v2072 = vpop.f32.mrf.mxu0
      %v2073 = vadd.f32 0.0, %v2072
      %v2074 = vpop.f32.mrf.mxu0
      %v2075 = vadd.f32 0.0, %v2074
      %2076 = vmatmul.bf16.gmra.mxu0 %v1937
      %v2077 = vpop.f32.mrf.mxu0
      %v2078 = vadd.f32 0.0, %v2077
      %v2079 = vpop.f32.mrf.mxu0
      %v2080 = vadd.f32 0.0, %v2079
      %2081 = vmatmul.bf16.gmra.mxu0 %v1938
      %v2082 = vpop.f32.mrf.mxu0
      %v2083 = vadd.f32 0.0, %v2082
      %v2084 = vpop.f32.mrf.mxu0
      %v2085 = vadd.f32 0.0, %v2084
      %2086 = vmatmul.bf16.gmra.mxu0 %v1939
      %v2087 = vpop.f32.mrf.mxu0
      %v2088 = vadd.f32 0.0, %v2087
      %v2089 = vpop.f32.mrf.mxu0
      %v2090 = vadd.f32 0.0, %v2089
      %2091 = vmatmul.bf16.gmra.mxu0 %v1940
      %v2092 = vpop.f32.mrf.mxu0
      %v2093 = vadd.f32 0.0, %v2092
      %v2094 = vpop.f32.mrf.mxu0
      %v2095 = vadd.f32 0.0, %v2094
      %2096 = vmatmul.bf16.gmra.mxu0 %v1941
      %v2097 = vpop.f32.mrf.mxu0
      %v2098 = vadd.f32 0.0, %v2097
      %v2099 = vpop.f32.mrf.mxu0
      %v2100 = vadd.f32 0.0, %v2099
      %2101 = vmatmul.bf16.gmra.mxu0 %v1942
      %v2102 = vpop.f32.mrf.mxu0
      %v2103 = vadd.f32 0.0, %v2102
      %v2104 = vpop.f32.mrf.mxu0
      %v2105 = vadd.f32 0.0, %v2104
      %2106 = vdwg.mxu0
      %v2107 = vadd.f32 %v1853, %v2018
      %v2108 = vadd.f32 %v1854, %v2020
      %v2109 = vadd.f32 %v1855, %v2023
      %v2110 = vadd.f32 %v1856, %v2025
      %v2111 = vadd.f32 %v1857, %v2028
      %v2112 = vadd.f32 %v1858, %v2030
      %v2113 = vadd.f32 %v1859, %v2033
      %v2114 = vadd.f32 %v1860, %v2035
      %v2115 = vadd.f32 %v1861, %v2038
      %v2116 = vadd.f32 %v1862, %v2040
      %v2117 = vadd.f32 %v1863, %v2043
      %v2118 = vadd.f32 %v1864, %v2045
      %v2119 = vadd.f32 %v1865, %v2048
      %v2120 = vadd.f32 %v1866, %v2050
      %v2121 = vadd.f32 %v1867, %v2053
      %v2122 = vadd.f32 %v1868, %v2055
      %v2123 = vadd.f32 %v1869, %v2058
      %v2124 = vadd.f32 %v1870, %v2060
      %v2125 = vadd.f32 %v1871, %v2063
      %v2126 = vadd.f32 %v1872, %v2065
      %v2127 = vadd.f32 %v1873, %v2068
      %v2128 = vadd.f32 %v1874, %v2070
      %v2129 = vadd.f32 %v1875, %v2073
      %v2130 = vadd.f32 %v1876, %v2075
      %v2131 = vadd.f32 %v1877, %v2078
      %v2132 = vadd.f32 %v1878, %v2080
      %v2133 = vadd.f32 %v1879, %v2083
      %v2134 = vadd.f32 %v1880, %v2085
      %v2135 = vadd.f32 %v1881, %v2088
      %v2136 = vadd.f32 %v1882, %v2090
      %v2137 = vadd.f32 %v1883, %v2093
      %v2138 = vadd.f32 %v1884, %v2095
      %v2139 = vadd.f32 %v1885, %v2098
      %v2140 = vadd.f32 %v1886, %v2100
      %v2141 = vadd.f32 %v1887, %v2103
      %v2142 = vadd.f32 %v1888, %v2105
      %v2143 = vld [vmem:[%s354 + $0x25] sm:$0xff]
      %v2144 = vld [vmem:[%s354 + $0x2d] sm:$0xff]
      %v2145 = vld [vmem:[%s354 + $0x35] sm:$0xff]
      %v2146 = vld [vmem:[%s354 + $0x3d] sm:$0xff]
      %v2147 = vld [vmem:[%s354 + $0x45] sm:$0xff]
      %v2148 = vld [vmem:[%s354 + $0x4d] sm:$0xff]
      %v2149 = vld [vmem:[%s354 + $0x55] sm:$0xff]
      %v2150 = vld [vmem:[%s354 + $0x5d] sm:$0xff]
      %v2151 = vld [vmem:[%s354 + $0x65] sm:$0xff]
      %v2152 = vld [vmem:[%s354 + $0x6d] sm:$0xff]
      %v2153 = vld [vmem:[%s354 + $0x75] sm:$0xff]
      %v2154 = vld [vmem:[%s354 + $0x7d] sm:$0xff]
      %v2155 = vld [vmem:[%s354 + $0x85] sm:$0xff]
      %v2156 = vld [vmem:[%s354 + $0x8d] sm:$0xff]
      %v2157 = vld [vmem:[%s354 + $0x95] sm:$0xff]
      %v2158 = vld [vmem:[%s354 + $0x9d] sm:$0xff]
      %v2159 = vld [vmem:[%s354 + $0xa5] sm:$0xff]
      %v2160 = vld [vmem:[%s354 + $0xad] sm:$0xff]
      %v2161 = vld [vmem:[%s354 + $0xb5] sm:$0xff]
      %v2162 = vld [vmem:[%s354 + $0xbd] sm:$0xff]
      %v2163 = vld [vmem:[%s354 + $0xc5] sm:$0xff]
      %v2164 = vld [vmem:[%s354 + $0xcd] sm:$0xff]
      %v2165 = vld [vmem:[%s354 + $0xd5] sm:$0xff]
      %v2166 = vld [vmem:[%s354 + $0xdd] sm:$0xff]
      %v2167 = vld [vmem:[%s354 + $0xe5] sm:$0xff]
      %v2168 = vld [vmem:[%s354 + $0xed] sm:$0xff]
      %v2169 = vld [vmem:[%s354 + $0xf5] sm:$0xff]
      %v2170 = vld [vmem:[%s354 + $0xfd] sm:$0xff]
      %v2171 = vld [vmem:[%s354 + $0x105] sm:$0xff]
      %v2172 = vld [vmem:[%s354 + $0x10d] sm:$0xff]
      %v2173 = vld [vmem:[%s354 + $0x115] sm:$0xff]
      %v2174 = vld [vmem:[%s354 + $0x11d] sm:$0xff]
      %v2175 = vld [vmem:[%s354 + $0x125] sm:$0xff]
      %v2176 = vld [vmem:[%s354 + $0x12d] sm:$0xff]
      %v2177 = vld [vmem:[%s354 + $0x135] sm:$0xff]
      %v2178 = vld [vmem:[%s354 + $0x13d] sm:$0xff]
      %v2179 = vpack.c.bf16 %v2144, %v2143
      %v2180 = vpack.c.bf16 %v2146, %v2145
      %v2181 = vpack.c.bf16 %v2148, %v2147
      %v2182 = vpack.c.bf16 %v2150, %v2149
      %v2183 = vpack.c.bf16 %v2152, %v2151
      %v2184 = vpack.c.bf16 %v2154, %v2153
      %v2185 = vpack.c.bf16 %v2156, %v2155
      %v2186 = vpack.c.bf16 %v2158, %v2157
      %v2187 = vpack.c.bf16 %v2160, %v2159
      %v2188 = vpack.c.bf16 %v2162, %v2161
      %v2189 = vpack.c.bf16 %v2164, %v2163
      %v2190 = vpack.c.bf16 %v2166, %v2165
      %v2191 = vpack.c.bf16 %v2168, %v2167
      %v2192 = vpack.c.bf16 %v2170, %v2169
      %v2193 = vpack.c.bf16 %v2172, %v2171
      %v2194 = vpack.c.bf16 %v2174, %v2173
      %v2195 = vpack.c.bf16 %v2176, %v2175
      %v2196 = vpack.c.bf16 %v2178, %v2177
      %s2197 = scalar_lea.vmem %s1, 448
      %v2198 = vld [vmem:[%s2197] sm:$0xf]
      %v2199 = vld [vmem:[%s2197 + $0x4] sm:$0xf]
      %v2200 = vld [vmem:[%s2197 + $0x8] sm:$0xf]
      %v2201 = vld [vmem:[%s2197 + $0xc] sm:$0xf]
      %v2202 = vld [vmem:[%s2197 + $0x10] sm:$0xf]
      %v2203 = vld [vmem:[%s2197 + $0x14] sm:$0xf]
      %v2204 = vld [vmem:[%s2197 + $0x18] sm:$0xf]
      %v2205 = vld [vmem:[%s2197 + $0x1c] sm:$0xf]
      %v2206 = vld [vmem:[%s2197 + $0x20] sm:$0xf]
      %v2207 = vld [vmem:[%s2197 + $0x24] sm:$0xf]
      %v2208 = vld [vmem:[%s2197 + $0x28] sm:$0xf]
      %v2209 = vld [vmem:[%s2197 + $0x2c] sm:$0xf]
      %v2210 = vld [vmem:[%s2197 + $0x30] sm:$0xf]
      %v2211 = vld [vmem:[%s2197 + $0x34] sm:$0xf]
      %v2212 = vld [vmem:[%s2197 + $0x38] sm:$0xf]
      %v2213 = vld [vmem:[%s2197 + $0x3c] sm:$0xf]
      %v2230 = vunpack.c.l.b16 %v2198
      %v2231 = vunpack.c.l.b16 %v2199
      %v2232 = vunpack.c.l.b16 %v2200
      %v2233 = vunpack.c.l.b16 %v2201
      %v2234 = vunpack.c.l.b16 %v2202
      %v2235 = vunpack.c.l.b16 %v2203
      %v2236 = vunpack.c.l.b16 %v2204
      %v2237 = vunpack.c.l.b16 %v2205
      %v2238 = vunpack.c.l.b16 %v2206
      %v2239 = vunpack.c.l.b16 %v2207
      %v2240 = vunpack.c.l.b16 %v2208
      %v2241 = vunpack.c.l.b16 %v2209
      %v2242 = vunpack.c.l.b16 %v2210
      %v2243 = vunpack.c.l.b16 %v2211
      %v2244 = vunpack.c.l.b16 %v2212
      %v2245 = vunpack.c.l.b16 %v2213
      %v2246 = vpack.c.b16 %v2231, %v2230
      %v2247 = vpack.c.b16 %v2233, %v2232
      %v2248 = vpack.c.b16 %v2235, %v2234
      %v2249 = vpack.c.b16 %v2237, %v2236
      %v2250 = vpack.c.b16 %v2239, %v2238
      %v2251 = vpack.c.b16 %v2241, %v2240
      %v2252 = vpack.c.b16 %v2243, %v2242
      %v2253 = vpack.c.b16 %v2245, %v2244
      %2262 = vmatpush.bf16.msra.mxu0 %v2253
      %2263 = vmatpush.bf16.msra.mxu0 %v2252
      %2264 = vmatpush.bf16.msra.mxu0 %v2251
      %2265 = vmatpush.bf16.msra.mxu0 %v2250
      %2266 = vmatpush.bf16.msra.mxu0 %v2249
      %2267 = vmatpush.bf16.msra.mxu0 %v2248
      %2268 = vmatpush.bf16.msra.mxu0 %v2247
      %2269 = vmatpush.bf16.msra.mxu0 %v2246
      %2270 = vmatmul.bf16.gmra.mxu0 %v2179
      %v2271 = vpop.f32.mrf.mxu0
      %v2272 = vadd.f32 0.0, %v2271
      %v2273 = vpop.f32.mrf.mxu0
      %v2274 = vadd.f32 0.0, %v2273
      %2275 = vmatmul.bf16.gmra.mxu0 %v2180
      %v2276 = vpop.f32.mrf.mxu0
      %v2277 = vadd.f32 0.0, %v2276
      %v2278 = vpop.f32.mrf.mxu0
      %v2279 = vadd.f32 0.0, %v2278
      %2280 = vmatmul.bf16.gmra.mxu0 %v2181
      %v2281 = vpop.f32.mrf.mxu0
      %v2282 = vadd.f32 0.0, %v2281
      %v2283 = vpop.f32.mrf.mxu0
      %v2284 = vadd.f32 0.0, %v2283
      %2285 = vmatmul.bf16.gmra.mxu0 %v2182
      %v2286 = vpop.f32.mrf.mxu0
      %v2287 = vadd.f32 0.0, %v2286
      %v2288 = vpop.f32.mrf.mxu0
      %v2289 = vadd.f32 0.0, %v2288
      %2290 = vmatmul.bf16.gmra.mxu0 %v2183
      %v2291 = vpop.f32.mrf.mxu0
      %v2292 = vadd.f32 0.0, %v2291
      %v2293 = vpop.f32.mrf.mxu0
      %v2294 = vadd.f32 0.0, %v2293
      %2295 = vmatmul.bf16.gmra.mxu0 %v2184
      %v2296 = vpop.f32.mrf.mxu0
      %v2297 = vadd.f32 0.0, %v2296
      %v2298 = vpop.f32.mrf.mxu0
      %v2299 = vadd.f32 0.0, %v2298
      %2300 = vmatmul.bf16.gmra.mxu0 %v2185
      %v2301 = vpop.f32.mrf.mxu0
      %v2302 = vadd.f32 0.0, %v2301
      %v2303 = vpop.f32.mrf.mxu0
      %v2304 = vadd.f32 0.0, %v2303
      %2305 = vmatmul.bf16.gmra.mxu0 %v2186
      %v2306 = vpop.f32.mrf.mxu0
      %v2307 = vadd.f32 0.0, %v2306
      %v2308 = vpop.f32.mrf.mxu0
      %v2309 = vadd.f32 0.0, %v2308
      %2310 = vmatmul.bf16.gmra.mxu0 %v2187
      %v2311 = vpop.f32.mrf.mxu0
      %v2312 = vadd.f32 0.0, %v2311
      %v2313 = vpop.f32.mrf.mxu0
      %v2314 = vadd.f32 0.0, %v2313
      %2315 = vmatmul.bf16.gmra.mxu0 %v2188
      %v2316 = vpop.f32.mrf.mxu0
      %v2317 = vadd.f32 0.0, %v2316
      %v2318 = vpop.f32.mrf.mxu0
      %v2319 = vadd.f32 0.0, %v2318
      %2320 = vmatmul.bf16.gmra.mxu0 %v2189
      %v2321 = vpop.f32.mrf.mxu0
      %v2322 = vadd.f32 0.0, %v2321
      %v2323 = vpop.f32.mrf.mxu0
      %v2324 = vadd.f32 0.0, %v2323
      %2325 = vmatmul.bf16.gmra.mxu0 %v2190
      %v2326 = vpop.f32.mrf.mxu0
      %v2327 = vadd.f32 0.0, %v2326
      %v2328 = vpop.f32.mrf.mxu0
      %v2329 = vadd.f32 0.0, %v2328
      %2330 = vmatmul.bf16.gmra.mxu0 %v2191
      %v2331 = vpop.f32.mrf.mxu0
      %v2332 = vadd.f32 0.0, %v2331
      %v2333 = vpop.f32.mrf.mxu0
      %v2334 = vadd.f32 0.0, %v2333
      %2335 = vmatmul.bf16.gmra.mxu0 %v2192
      %v2336 = vpop.f32.mrf.mxu0
      %v2337 = vadd.f32 0.0, %v2336
      %v2338 = vpop.f32.mrf.mxu0
      %v2339 = vadd.f32 0.0, %v2338
      %2340 = vmatmul.bf16.gmra.mxu0 %v2193
      %v2341 = vpop.f32.mrf.mxu0
      %v2342 = vadd.f32 0.0, %v2341
      %v2343 = vpop.f32.mrf.mxu0
      %v2344 = vadd.f32 0.0, %v2343
      %2345 = vmatmul.bf16.gmra.mxu0 %v2194
      %v2346 = vpop.f32.mrf.mxu0
      %v2347 = vadd.f32 0.0, %v2346
      %v2348 = vpop.f32.mrf.mxu0
      %v2349 = vadd.f32 0.0, %v2348
      %2350 = vmatmul.bf16.gmra.mxu0 %v2195
      %v2351 = vpop.f32.mrf.mxu0
      %v2352 = vadd.f32 0.0, %v2351
      %v2353 = vpop.f32.mrf.mxu0
      %v2354 = vadd.f32 0.0, %v2353
      %2355 = vmatmul.bf16.gmra.mxu0 %v2196
      %v2356 = vpop.f32.mrf.mxu0
      %v2357 = vadd.f32 0.0, %v2356
      %v2358 = vpop.f32.mrf.mxu0
      %v2359 = vadd.f32 0.0, %v2358
      %2360 = vdwg.mxu0
      %v2361 = vadd.f32 %v2107, %v2272
      %v2362 = vadd.f32 %v2108, %v2274
      %v2363 = vadd.f32 %v2109, %v2277
      %v2364 = vadd.f32 %v2110, %v2279
      %v2365 = vadd.f32 %v2111, %v2282
      %v2366 = vadd.f32 %v2112, %v2284
      %v2367 = vadd.f32 %v2113, %v2287
      %v2368 = vadd.f32 %v2114, %v2289
      %v2369 = vadd.f32 %v2115, %v2292
      %v2370 = vadd.f32 %v2116, %v2294
      %v2371 = vadd.f32 %v2117, %v2297
      %v2372 = vadd.f32 %v2118, %v2299
      %v2373 = vadd.f32 %v2119, %v2302
      %v2374 = vadd.f32 %v2120, %v2304
      %v2375 = vadd.f32 %v2121, %v2307
      %v2376 = vadd.f32 %v2122, %v2309
      %v2377 = vadd.f32 %v2123, %v2312
      %v2378 = vadd.f32 %v2124, %v2314
      %v2379 = vadd.f32 %v2125, %v2317
      %v2380 = vadd.f32 %v2126, %v2319
      %v2381 = vadd.f32 %v2127, %v2322
      %v2382 = vadd.f32 %v2128, %v2324
      %v2383 = vadd.f32 %v2129, %v2327
      %v2384 = vadd.f32 %v2130, %v2329
      %v2385 = vadd.f32 %v2131, %v2332
      %v2386 = vadd.f32 %v2132, %v2334
      %v2387 = vadd.f32 %v2133, %v2337
      %v2388 = vadd.f32 %v2134, %v2339
      %v2389 = vadd.f32 %v2135, %v2342
      %v2390 = vadd.f32 %v2136, %v2344
      %v2391 = vadd.f32 %v2137, %v2347
      %v2392 = vadd.f32 %v2138, %v2349
      %v2393 = vadd.f32 %v2139, %v2352
      %v2394 = vadd.f32 %v2140, %v2354
      %v2395 = vadd.f32 %v2141, %v2357
      %v2396 = vadd.f32 %v2142, %v2359
      %v2397 = vld [vmem:[%s354 + $0x26] sm:$0xff]
      %v2398 = vld [vmem:[%s354 + $0x2e] sm:$0xff]
      %v2399 = vld [vmem:[%s354 + $0x36] sm:$0xff]
      %v2400 = vld [vmem:[%s354 + $0x3e] sm:$0xff]
      %v2401 = vld [vmem:[%s354 + $0x46] sm:$0xff]
      %v2402 = vld [vmem:[%s354 + $0x4e] sm:$0xff]
      %v2403 = vld [vmem:[%s354 + $0x56] sm:$0xff]
      %v2404 = vld [vmem:[%s354 + $0x5e] sm:$0xff]
      %v2405 = vld [vmem:[%s354 + $0x66] sm:$0xff]
      %v2406 = vld [vmem:[%s354 + $0x6e] sm:$0xff]
      %v2407 = vld [vmem:[%s354 + $0x76] sm:$0xff]
      %v2408 = vld [vmem:[%s354 + $0x7e] sm:$0xff]
      %v2409 = vld [vmem:[%s354 + $0x86] sm:$0xff]
      %v2410 = vld [vmem:[%s354 + $0x8e] sm:$0xff]
      %v2411 = vld [vmem:[%s354 + $0x96] sm:$0xff]
      %v2412 = vld [vmem:[%s354 + $0x9e] sm:$0xff]
      %v2413 = vld [vmem:[%s354 + $0xa6] sm:$0xff]
      %v2414 = vld [vmem:[%s354 + $0xae] sm:$0xff]
      %v2415 = vld [vmem:[%s354 + $0xb6] sm:$0xff]
      %v2416 = vld [vmem:[%s354 + $0xbe] sm:$0xff]
      %v2417 = vld [vmem:[%s354 + $0xc6] sm:$0xff]
      %v2418 = vld [vmem:[%s354 + $0xce] sm:$0xff]
      %v2419 = vld [vmem:[%s354 + $0xd6] sm:$0xff]
      %v2420 = vld [vmem:[%s354 + $0xde] sm:$0xff]
      %v2421 = vld [vmem:[%s354 + $0xe6] sm:$0xff]
      %v2422 = vld [vmem:[%s354 + $0xee] sm:$0xff]
      %v2423 = vld [vmem:[%s354 + $0xf6] sm:$0xff]
      %v2424 = vld [vmem:[%s354 + $0xfe] sm:$0xff]
      %v2425 = vld [vmem:[%s354 + $0x106] sm:$0xff]
      %v2426 = vld [vmem:[%s354 + $0x10e] sm:$0xff]
      %v2427 = vld [vmem:[%s354 + $0x116] sm:$0xff]
      %v2428 = vld [vmem:[%s354 + $0x11e] sm:$0xff]
      %v2429 = vld [vmem:[%s354 + $0x126] sm:$0xff]
      %v2430 = vld [vmem:[%s354 + $0x12e] sm:$0xff]
      %v2431 = vld [vmem:[%s354 + $0x136] sm:$0xff]
      %v2432 = vld [vmem:[%s354 + $0x13e] sm:$0xff]
      %v2433 = vpack.c.bf16 %v2398, %v2397
      %v2434 = vpack.c.bf16 %v2400, %v2399
      %v2435 = vpack.c.bf16 %v2402, %v2401
      %v2436 = vpack.c.bf16 %v2404, %v2403
      %v2437 = vpack.c.bf16 %v2406, %v2405
      %v2438 = vpack.c.bf16 %v2408, %v2407
      %v2439 = vpack.c.bf16 %v2410, %v2409
      %v2440 = vpack.c.bf16 %v2412, %v2411
      %v2441 = vpack.c.bf16 %v2414, %v2413
      %v2442 = vpack.c.bf16 %v2416, %v2415
      %v2443 = vpack.c.bf16 %v2418, %v2417
      %v2444 = vpack.c.bf16 %v2420, %v2419
      %v2445 = vpack.c.bf16 %v2422, %v2421
      %v2446 = vpack.c.bf16 %v2424, %v2423
      %v2447 = vpack.c.bf16 %v2426, %v2425
      %v2448 = vpack.c.bf16 %v2428, %v2427
      %v2449 = vpack.c.bf16 %v2430, %v2429
      %v2450 = vpack.c.bf16 %v2432, %v2431
      %s2451 = scalar_lea.vmem %s1, 512
      %v2452 = vld [vmem:[%s2451] sm:$0xf]
      %v2453 = vld [vmem:[%s2451 + $0x4] sm:$0xf]
      %v2454 = vld [vmem:[%s2451 + $0x8] sm:$0xf]
      %v2455 = vld [vmem:[%s2451 + $0xc] sm:$0xf]
      %v2456 = vld [vmem:[%s2451 + $0x10] sm:$0xf]
      %v2457 = vld [vmem:[%s2451 + $0x14] sm:$0xf]
      %v2458 = vld [vmem:[%s2451 + $0x18] sm:$0xf]
      %v2459 = vld [vmem:[%s2451 + $0x1c] sm:$0xf]
      %v2460 = vld [vmem:[%s2451 + $0x20] sm:$0xf]
      %v2461 = vld [vmem:[%s2451 + $0x24] sm:$0xf]
      %v2462 = vld [vmem:[%s2451 + $0x28] sm:$0xf]
      %v2463 = vld [vmem:[%s2451 + $0x2c] sm:$0xf]
      %v2464 = vld [vmem:[%s2451 + $0x30] sm:$0xf]
      %v2465 = vld [vmem:[%s2451 + $0x34] sm:$0xf]
      %v2466 = vld [vmem:[%s2451 + $0x38] sm:$0xf]
      %v2467 = vld [vmem:[%s2451 + $0x3c] sm:$0xf]
      %v2484 = vunpack.c.l.b16 %v2452
      %v2485 = vunpack.c.l.b16 %v2453
      %v2486 = vunpack.c.l.b16 %v2454
      %v2487 = vunpack.c.l.b16 %v2455
      %v2488 = vunpack.c.l.b16 %v2456
      %v2489 = vunpack.c.l.b16 %v2457
      %v2490 = vunpack.c.l.b16 %v2458
      %v2491 = vunpack.c.l.b16 %v2459
      %v2492 = vunpack.c.l.b16 %v2460
      %v2493 = vunpack.c.l.b16 %v2461
      %v2494 = vunpack.c.l.b16 %v2462
      %v2495 = vunpack.c.l.b16 %v2463
      %v2496 = vunpack.c.l.b16 %v2464
      %v2497 = vunpack.c.l.b16 %v2465
      %v2498 = vunpack.c.l.b16 %v2466
      %v2499 = vunpack.c.l.b16 %v2467
      %v2500 = vpack.c.b16 %v2485, %v2484
      %v2501 = vpack.c.b16 %v2487, %v2486
      %v2502 = vpack.c.b16 %v2489, %v2488
      %v2503 = vpack.c.b16 %v2491, %v2490
      %v2504 = vpack.c.b16 %v2493, %v2492
      %v2505 = vpack.c.b16 %v2495, %v2494
      %v2506 = vpack.c.b16 %v2497, %v2496
      %v2507 = vpack.c.b16 %v2499, %v2498
      %2516 = vmatpush.bf16.msra.mxu0 %v2507
      %2517 = vmatpush.bf16.msra.mxu0 %v2506
      %2518 = vmatpush.bf16.msra.mxu0 %v2505
      %2519 = vmatpush.bf16.msra.mxu0 %v2504
      %2520 = vmatpush.bf16.msra.mxu0 %v2503
      %2521 = vmatpush.bf16.msra.mxu0 %v2502
      %2522 = vmatpush.bf16.msra.mxu0 %v2501
      %2523 = vmatpush.bf16.msra.mxu0 %v2500
      %2524 = vmatmul.bf16.gmra.mxu0 %v2433
      %v2525 = vpop.f32.mrf.mxu0
      %v2526 = vadd.f32 0.0, %v2525
      %v2527 = vpop.f32.mrf.mxu0
      %v2528 = vadd.f32 0.0, %v2527
      %2529 = vmatmul.bf16.gmra.mxu0 %v2434
      %v2530 = vpop.f32.mrf.mxu0
      %v2531 = vadd.f32 0.0, %v2530
      %v2532 = vpop.f32.mrf.mxu0
      %v2533 = vadd.f32 0.0, %v2532
      %2534 = vmatmul.bf16.gmra.mxu0 %v2435
      %v2535 = vpop.f32.mrf.mxu0
      %v2536 = vadd.f32 0.0, %v2535
      %v2537 = vpop.f32.mrf.mxu0
      %v2538 = vadd.f32 0.0, %v2537
      %2539 = vmatmul.bf16.gmra.mxu0 %v2436
      %v2540 = vpop.f32.mrf.mxu0
      %v2541 = vadd.f32 0.0, %v2540
      %v2542 = vpop.f32.mrf.mxu0
      %v2543 = vadd.f32 0.0, %v2542
      %2544 = vmatmul.bf16.gmra.mxu0 %v2437
      %v2545 = vpop.f32.mrf.mxu0
      %v2546 = vadd.f32 0.0, %v2545
      %v2547 = vpop.f32.mrf.mxu0
      %v2548 = vadd.f32 0.0, %v2547
      %2549 = vmatmul.bf16.gmra.mxu0 %v2438
      %v2550 = vpop.f32.mrf.mxu0
      %v2551 = vadd.f32 0.0, %v2550
      %v2552 = vpop.f32.mrf.mxu0
      %v2553 = vadd.f32 0.0, %v2552
      %2554 = vmatmul.bf16.gmra.mxu0 %v2439
      %v2555 = vpop.f32.mrf.mxu0
      %v2556 = vadd.f32 0.0, %v2555
      %v2557 = vpop.f32.mrf.mxu0
      %v2558 = vadd.f32 0.0, %v2557
      %2559 = vmatmul.bf16.gmra.mxu0 %v2440
      %v2560 = vpop.f32.mrf.mxu0
      %v2561 = vadd.f32 0.0, %v2560
      %v2562 = vpop.f32.mrf.mxu0
      %v2563 = vadd.f32 0.0, %v2562
      %2564 = vmatmul.bf16.gmra.mxu0 %v2441
      %v2565 = vpop.f32.mrf.mxu0
      %v2566 = vadd.f32 0.0, %v2565
      %v2567 = vpop.f32.mrf.mxu0
      %v2568 = vadd.f32 0.0, %v2567
      %2569 = vmatmul.bf16.gmra.mxu0 %v2442
      %v2570 = vpop.f32.mrf.mxu0
      %v2571 = vadd.f32 0.0, %v2570
      %v2572 = vpop.f32.mrf.mxu0
      %v2573 = vadd.f32 0.0, %v2572
      %2574 = vmatmul.bf16.gmra.mxu0 %v2443
      %v2575 = vpop.f32.mrf.mxu0
      %v2576 = vadd.f32 0.0, %v2575
      %v2577 = vpop.f32.mrf.mxu0
      %v2578 = vadd.f32 0.0, %v2577
      %2579 = vmatmul.bf16.gmra.mxu0 %v2444
      %v2580 = vpop.f32.mrf.mxu0
      %v2581 = vadd.f32 0.0, %v2580
      %v2582 = vpop.f32.mrf.mxu0
      %v2583 = vadd.f32 0.0, %v2582
      %2584 = vmatmul.bf16.gmra.mxu0 %v2445
      %v2585 = vpop.f32.mrf.mxu0
      %v2586 = vadd.f32 0.0, %v2585
      %v2587 = vpop.f32.mrf.mxu0
      %v2588 = vadd.f32 0.0, %v2587
      %2589 = vmatmul.bf16.gmra.mxu0 %v2446
      %v2590 = vpop.f32.mrf.mxu0
      %v2591 = vadd.f32 0.0, %v2590
      %v2592 = vpop.f32.mrf.mxu0
      %v2593 = vadd.f32 0.0, %v2592
      %2594 = vmatmul.bf16.gmra.mxu0 %v2447
      %v2595 = vpop.f32.mrf.mxu0
      %v2596 = vadd.f32 0.0, %v2595
      %v2597 = vpop.f32.mrf.mxu0
      %v2598 = vadd.f32 0.0, %v2597
      %2599 = vmatmul.bf16.gmra.mxu0 %v2448
      %v2600 = vpop.f32.mrf.mxu0
      %v2601 = vadd.f32 0.0, %v2600
      %v2602 = vpop.f32.mrf.mxu0
      %v2603 = vadd.f32 0.0, %v2602
      %2604 = vmatmul.bf16.gmra.mxu0 %v2449
      %v2605 = vpop.f32.mrf.mxu0
      %v2606 = vadd.f32 0.0, %v2605
      %v2607 = vpop.f32.mrf.mxu0
      %v2608 = vadd.f32 0.0, %v2607
      %2609 = vmatmul.bf16.gmra.mxu0 %v2450
      %v2610 = vpop.f32.mrf.mxu0
      %v2611 = vadd.f32 0.0, %v2610
      %v2612 = vpop.f32.mrf.mxu0
      %v2613 = vadd.f32 0.0, %v2612
      %2614 = vdwg.mxu0
      %v2615 = vadd.f32 %v2361, %v2526
      %v2616 = vadd.f32 %v2362, %v2528
      %v2617 = vadd.f32 %v2363, %v2531
      %v2618 = vadd.f32 %v2364, %v2533
      %v2619 = vadd.f32 %v2365, %v2536
      %v2620 = vadd.f32 %v2366, %v2538
      %v2621 = vadd.f32 %v2367, %v2541
      %v2622 = vadd.f32 %v2368, %v2543
      %v2623 = vadd.f32 %v2369, %v2546
      %v2624 = vadd.f32 %v2370, %v2548
      %v2625 = vadd.f32 %v2371, %v2551
      %v2626 = vadd.f32 %v2372, %v2553
      %v2627 = vadd.f32 %v2373, %v2556
      %v2628 = vadd.f32 %v2374, %v2558
      %v2629 = vadd.f32 %v2375, %v2561
      %v2630 = vadd.f32 %v2376, %v2563
      %v2631 = vadd.f32 %v2377, %v2566
      %v2632 = vadd.f32 %v2378, %v2568
      %v2633 = vadd.f32 %v2379, %v2571
      %v2634 = vadd.f32 %v2380, %v2573
      %v2635 = vadd.f32 %v2381, %v2576
      %v2636 = vadd.f32 %v2382, %v2578
      %v2637 = vadd.f32 %v2383, %v2581
      %v2638 = vadd.f32 %v2384, %v2583
      %v2639 = vadd.f32 %v2385, %v2586
      %v2640 = vadd.f32 %v2386, %v2588
      %v2641 = vadd.f32 %v2387, %v2591
      %v2642 = vadd.f32 %v2388, %v2593
      %v2643 = vadd.f32 %v2389, %v2596
      %v2644 = vadd.f32 %v2390, %v2598
      %v2645 = vadd.f32 %v2391, %v2601
      %v2646 = vadd.f32 %v2392, %v2603
      %v2647 = vadd.f32 %v2393, %v2606
      %v2648 = vadd.f32 %v2394, %v2608
      %v2649 = vadd.f32 %v2395, %v2611
      %v2650 = vadd.f32 %v2396, %v2613
      %v2651 = vld [vmem:[%s3] sm:$0x1]
      %v2653 = vperm.slane %v2651, 0
      %v2655 = vmul.f32 %v2615, %v2653
      %v2656 = vmul.f32 %v2616, %v2653
      %v2657 = vmul.f32 %v2617, %v2653
      %v2658 = vmul.f32 %v2618, %v2653
      %v2659 = vmul.f32 %v2619, %v2653
      %v2660 = vmul.f32 %v2620, %v2653
      %v2661 = vmul.f32 %v2621, %v2653
      %v2662 = vmul.f32 %v2622, %v2653
      %v2663 = vmul.f32 %v2623, %v2653
      %v2664 = vmul.f32 %v2624, %v2653
      %v2665 = vmul.f32 %v2625, %v2653
      %v2666 = vmul.f32 %v2626, %v2653
      %v2667 = vmul.f32 %v2627, %v2653
      %v2668 = vmul.f32 %v2628, %v2653
      %v2669 = vmul.f32 %v2629, %v2653
      %v2670 = vmul.f32 %v2630, %v2653
      %v2671 = vmul.f32 %v2631, %v2653
      %v2672 = vmul.f32 %v2632, %v2653
      %v2673 = vmul.f32 %v2633, %v2653
      %v2674 = vmul.f32 %v2634, %v2653
      %v2675 = vmul.f32 %v2635, %v2653
      %v2676 = vmul.f32 %v2636, %v2653
      %v2677 = vmul.f32 %v2637, %v2653
      %v2678 = vmul.f32 %v2638, %v2653
      %v2679 = vmul.f32 %v2639, %v2653
      %v2680 = vmul.f32 %v2640, %v2653
      %v2681 = vmul.f32 %v2641, %v2653
      %v2682 = vmul.f32 %v2642, %v2653
      %v2683 = vmul.f32 %v2643, %v2653
      %v2684 = vmul.f32 %v2644, %v2653
      %v2685 = vmul.f32 %v2645, %v2653
      %v2686 = vmul.f32 %v2646, %v2653
      %v2687 = vmul.f32 %v2647, %v2653
      %v2688 = vmul.f32 %v2648, %v2653
      %v2689 = vmul.f32 %v2649, %v2653
      %v2690 = vmul.f32 %v2650, %v2653
      %v2691 = vld [vmem:[%s4] sm:$0x1]
      %v2693 = vperm.slane %v2691, 0
      %v2695 = vadd.f32 %v2655, %v2693
      %v2696 = vadd.f32 %v2656, %v2693
      %v2697 = vadd.f32 %v2657, %v2693
      %v2698 = vadd.f32 %v2658, %v2693
      %v2699 = vadd.f32 %v2659, %v2693
      %v2700 = vadd.f32 %v2660, %v2693
      %v2701 = vadd.f32 %v2661, %v2693
      %v2702 = vadd.f32 %v2662, %v2693
      %v2703 = vadd.f32 %v2663, %v2693
      %v2704 = vadd.f32 %v2664, %v2693
      %v2705 = vadd.f32 %v2665, %v2693
      %v2706 = vadd.f32 %v2666, %v2693
      %v2707 = vadd.f32 %v2667, %v2693
      %v2708 = vadd.f32 %v2668, %v2693
      %v2709 = vadd.f32 %v2669, %v2693
      %v2710 = vadd.f32 %v2670, %v2693
      %v2711 = vadd.f32 %v2671, %v2693
      %v2712 = vadd.f32 %v2672, %v2693
      %v2713 = vadd.f32 %v2673, %v2693
      %v2714 = vadd.f32 %v2674, %v2693
      %v2715 = vadd.f32 %v2675, %v2693
      %v2716 = vadd.f32 %v2676, %v2693
      %v2717 = vadd.f32 %v2677, %v2693
      %v2718 = vadd.f32 %v2678, %v2693
      %v2719 = vadd.f32 %v2679, %v2693
      %v2720 = vadd.f32 %v2680, %v2693
      %v2721 = vadd.f32 %v2681, %v2693
      %v2722 = vadd.f32 %v2682, %v2693
      %v2723 = vadd.f32 %v2683, %v2693
      %v2724 = vadd.f32 %v2684, %v2693
      %v2725 = vadd.f32 %v2685, %v2693
      %v2726 = vadd.f32 %v2686, %v2693
      %v2727 = vadd.f32 %v2687, %v2693
      %v2728 = vadd.f32 %v2688, %v2693
      %v2729 = vadd.f32 %v2689, %v2693
      %v2730 = vadd.f32 %v2690, %v2693
      %v2731 = vmax.f32 %v2695, 0.0
      %v2732 = vmax.f32 %v2696, 0.0
      %v2733 = vmax.f32 %v2697, 0.0
      %v2734 = vmax.f32 %v2698, 0.0
      %v2735 = vmax.f32 %v2699, 0.0
      %v2736 = vmax.f32 %v2700, 0.0
      %v2737 = vmax.f32 %v2701, 0.0
      %v2738 = vmax.f32 %v2702, 0.0
      %v2739 = vmax.f32 %v2703, 0.0
      %v2740 = vmax.f32 %v2704, 0.0
      %v2741 = vmax.f32 %v2705, 0.0
      %v2742 = vmax.f32 %v2706, 0.0
      %v2743 = vmax.f32 %v2707, 0.0
      %v2744 = vmax.f32 %v2708, 0.0
      %v2745 = vmax.f32 %v2709, 0.0
      %v2746 = vmax.f32 %v2710, 0.0
      %v2747 = vmax.f32 %v2711, 0.0
      %v2748 = vmax.f32 %v2712, 0.0
      %v2749 = vmax.f32 %v2713, 0.0
      %v2750 = vmax.f32 %v2714, 0.0
      %v2751 = vmax.f32 %v2715, 0.0
      %v2752 = vmax.f32 %v2716, 0.0
      %v2753 = vmax.f32 %v2717, 0.0
      %v2754 = vmax.f32 %v2718, 0.0
      %v2755 = vmax.f32 %v2719, 0.0
      %v2756 = vmax.f32 %v2720, 0.0
      %v2757 = vmax.f32 %v2721, 0.0
      %v2758 = vmax.f32 %v2722, 0.0
      %v2759 = vmax.f32 %v2723, 0.0
      %v2760 = vmax.f32 %v2724, 0.0
      %v2761 = vmax.f32 %v2725, 0.0
      %v2762 = vmax.f32 %v2726, 0.0
      %v2763 = vmax.f32 %v2727, 0.0
      %v2764 = vmax.f32 %v2728, 0.0
      %v2765 = vmax.f32 %v2729, 0.0
      %v2766 = vmax.f32 %v2730, 0.0
      %2768 = vset.pattern.permute.xlu0 0
      %2769 = vperm.xlu0 %2768, %v402
      %v2770 = vpop.permute.xlu0 %2769
      %2773 = vset.pattern.permute.xlu0 0
      %2774 = vperm.xlu0 %2773, %v403
      %v2775 = vpop.permute.xlu0 %2774
      %2778 = vset.pattern.permute.xlu0 0
      %2779 = vperm.xlu0 %2778, %v404
      %v2780 = vpop.permute.xlu0 %2779
      %2783 = vset.pattern.permute.xlu0 0
      %2784 = vperm.xlu0 %2783, %v405
      %v2785 = vpop.permute.xlu0 %2784
      %2788 = vset.pattern.permute.xlu0 0
      %2789 = vperm.xlu0 %2788, %v406
      %v2790 = vpop.permute.xlu0 %2789
      %2793 = vset.pattern.permute.xlu0 0
      %2794 = vperm.xlu0 %2793, %v407
      %v2795 = vpop.permute.xlu0 %2794
      %2798 = vset.pattern.permute.xlu0 0
      %2799 = vperm.xlu0 %2798, %v408
      %v2800 = vpop.permute.xlu0 %2799
      %2803 = vset.pattern.permute.xlu0 0
      %2804 = vperm.xlu0 %2803, %v409
      %v2805 = vpop.permute.xlu0 %2804
      %2808 = vset.pattern.permute.xlu0 0
      %2809 = vperm.xlu0 %2808, %v410
      %v2810 = vpop.permute.xlu0 %2809
      %2813 = vset.pattern.permute.xlu0 0
      %2814 = vperm.xlu0 %2813, %v411
      %v2815 = vpop.permute.xlu0 %2814
      %2818 = vset.pattern.permute.xlu0 0
      %2819 = vperm.xlu0 %2818, %v412
      %v2820 = vpop.permute.xlu0 %2819
      %2823 = vset.pattern.permute.xlu0 0
      %2824 = vperm.xlu0 %2823, %v413
      %v2825 = vpop.permute.xlu0 %2824
      %2828 = vset.pattern.permute.xlu0 0
      %2829 = vperm.xlu0 %2828, %v414
      %v2830 = vpop.permute.xlu0 %2829
      %2833 = vset.pattern.permute.xlu0 0
      %2834 = vperm.xlu0 %2833, %v415
      %v2835 = vpop.permute.xlu0 %2834
      %2838 = vset.pattern.permute.xlu0 0
      %2839 = vperm.xlu0 %2838, %v416
      %v2840 = vpop.permute.xlu0 %2839
      %2843 = vset.pattern.permute.xlu0 0
      %2844 = vperm.xlu0 %2843, %v417
      %v2845 = vpop.permute.xlu0 %2844
      %2848 = vset.pattern.permute.xlu0 0
      %2849 = vperm.xlu0 %2848, %v418
      %v2850 = vpop.permute.xlu0 %2849
      %2853 = vset.pattern.permute.xlu0 0
      %2854 = vperm.xlu0 %2853, %v419
      %v2855 = vpop.permute.xlu0 %2854
      %2858 = vset.pattern.permute.xlu0 0
      %2859 = vperm.xlu0 %2858, %v420
      %v2860 = vpop.permute.xlu0 %2859
      %2863 = vset.pattern.permute.xlu0 0
      %2864 = vperm.xlu0 %2863, %v421
      %v2865 = vpop.permute.xlu0 %2864
      %2868 = vset.pattern.permute.xlu0 0
      %2869 = vperm.xlu0 %2868, %v422
      %v2870 = vpop.permute.xlu0 %2869
      %2873 = vset.pattern.permute.xlu0 0
      %2874 = vperm.xlu0 %2873, %v423
      %v2875 = vpop.permute.xlu0 %2874
      %2878 = vset.pattern.permute.xlu0 0
      %2879 = vperm.xlu0 %2878, %v424
      %v2880 = vpop.permute.xlu0 %2879
      %2883 = vset.pattern.permute.xlu0 0
      %2884 = vperm.xlu0 %2883, %v425
      %v2885 = vpop.permute.xlu0 %2884
      %2888 = vset.pattern.permute.xlu0 0
      %2889 = vperm.xlu0 %2888, %v426
      %v2890 = vpop.permute.xlu0 %2889
      %2893 = vset.pattern.permute.xlu0 0
      %2894 = vperm.xlu0 %2893, %v427
      %v2895 = vpop.permute.xlu0 %2894
      %2898 = vset.pattern.permute.xlu0 0
      %2899 = vperm.xlu0 %2898, %v428
      %v2900 = vpop.permute.xlu0 %2899
      %2903 = vset.pattern.permute.xlu0 0
      %2904 = vperm.xlu0 %2903, %v429
      %v2905 = vpop.permute.xlu0 %2904
      %2908 = vset.pattern.permute.xlu0 0
      %2909 = vperm.xlu0 %2908, %v430
      %v2910 = vpop.permute.xlu0 %2909
      %2913 = vset.pattern.permute.xlu0 0
      %2914 = vperm.xlu0 %2913, %v431
      %v2915 = vpop.permute.xlu0 %2914
      %2918 = vset.pattern.permute.xlu0 0
      %2919 = vperm.xlu0 %2918, %v432
      %v2920 = vpop.permute.xlu0 %2919
      %2923 = vset.pattern.permute.xlu0 0
      %2924 = vperm.xlu0 %2923, %v433
      %v2925 = vpop.permute.xlu0 %2924
      %2928 = vset.pattern.permute.xlu0 0
      %2929 = vperm.xlu0 %2928, %v434
      %v2930 = vpop.permute.xlu0 %2929
      %2933 = vset.pattern.permute.xlu0 0
      %2934 = vperm.xlu0 %2933, %v435
      %v2935 = vpop.permute.xlu0 %2934
      %2938 = vset.pattern.permute.xlu0 0
      %2939 = vperm.xlu0 %2938, %v436
      %v2940 = vpop.permute.xlu0 %2939
      %2943 = vset.pattern.permute.xlu0 0
      %2944 = vperm.xlu0 %2943, %v437
      %v2945 = vpop.permute.xlu0 %2944
      %v2947 = vmul.f32 %v2731, %v2770
      %v2948 = vmul.f32 %v2732, %v2775
      %v2949 = vmul.f32 %v2733, %v2780
      %v2950 = vmul.f32 %v2734, %v2785
      %v2951 = vmul.f32 %v2735, %v2790
      %v2952 = vmul.f32 %v2736, %v2795
      %v2953 = vmul.f32 %v2737, %v2800
      %v2954 = vmul.f32 %v2738, %v2805
      %v2955 = vmul.f32 %v2739, %v2810
      %v2956 = vmul.f32 %v2740, %v2815
      %v2957 = vmul.f32 %v2741, %v2820
      %v2958 = vmul.f32 %v2742, %v2825
      %v2959 = vmul.f32 %v2743, %v2830
      %v2960 = vmul.f32 %v2744, %v2835
      %v2961 = vmul.f32 %v2745, %v2840
      %v2962 = vmul.f32 %v2746, %v2845
      %v2963 = vmul.f32 %v2747, %v2850
      %v2964 = vmul.f32 %v2748, %v2855
      %v2965 = vmul.f32 %v2749, %v2860
      %v2966 = vmul.f32 %v2750, %v2865
      %v2967 = vmul.f32 %v2751, %v2870
      %v2968 = vmul.f32 %v2752, %v2875
      %v2969 = vmul.f32 %v2753, %v2880
      %v2970 = vmul.f32 %v2754, %v2885
      %v2971 = vmul.f32 %v2755, %v2890
      %v2972 = vmul.f32 %v2756, %v2895
      %v2973 = vmul.f32 %v2757, %v2900
      %v2974 = vmul.f32 %v2758, %v2905
      %v2975 = vmul.f32 %v2759, %v2910
      %v2976 = vmul.f32 %v2760, %v2915
      %v2977 = vmul.f32 %v2761, %v2920
      %v2978 = vmul.f32 %v2762, %v2925
      %v2979 = vmul.f32 %v2763, %v2930
      %v2980 = vmul.f32 %v2764, %v2935
      %v2981 = vmul.f32 %v2765, %v2940
      %v2982 = vmul.f32 %v2766, %v2945
      %2983 = vst [vmem:[#allocation2 + $0x18] sm:$0xff] %v2947
      %2984 = vst [vmem:[#allocation2 + $0x20] sm:$0xff] %v2948
      %2985 = vst [vmem:[#allocation2 + $0x28] sm:$0xff] %v2949
      %2986 = vst [vmem:[#allocation2 + $0x30] sm:$0xff] %v2950
      %2987 = vst [vmem:[#allocation2 + $0x38] sm:$0xff] %v2951
      %2988 = vst [vmem:[#allocation2 + $0x40] sm:$0xff] %v2952
      %2989 = vst [vmem:[#allocation2 + $0x48] sm:$0xff] %v2953
      %2990 = vst [vmem:[#allocation2 + $0x50] sm:$0xff] %v2954
      %2991 = vst [vmem:[#allocation2 + $0x58] sm:$0xff] %v2955
      %2992 = vst [vmem:[#allocation2 + $0x60] sm:$0xff] %v2956
      %2993 = vst [vmem:[#allocation2 + $0x68] sm:$0xff] %v2957
      %2994 = vst [vmem:[#allocation2 + $0x70] sm:$0xff] %v2958
      %2995 = vst [vmem:[#allocation2 + $0x78] sm:$0xff] %v2959
      %2996 = vst [vmem:[#allocation2 + $0x80] sm:$0xff] %v2960
      %2997 = vst [vmem:[#allocation2 + $0x88] sm:$0xff] %v2961
      %2998 = vst [vmem:[#allocation2 + $0x90] sm:$0xff] %v2962
      %2999 = vst [vmem:[#allocation2 + $0x98] sm:$0xff] %v2963
      %3000 = vst [vmem:[#allocation2 + $0xa0] sm:$0xff] %v2964
      %3001 = vst [vmem:[#allocation2 + $0xa8] sm:$0xff] %v2965
      %3002 = vst [vmem:[#allocation2 + $0xb0] sm:$0xff] %v2966
      %3003 = vst [vmem:[#allocation2 + $0xb8] sm:$0xff] %v2967
      %3004 = vst [vmem:[#allocation2 + $0xc0] sm:$0xff] %v2968
      %3005 = vst [vmem:[#allocation2 + $0xc8] sm:$0xff] %v2969
      %3006 = vst [vmem:[#allocation2 + $0xd0] sm:$0xff] %v2970
      %3007 = vst [vmem:[#allocation2 + $0xd8] sm:$0xff] %v2971
      %3008 = vst [vmem:[#allocation2 + $0xe0] sm:$0xff] %v2972
      %3009 = vst [vmem:[#allocation2 + $0xe8] sm:$0xff] %v2973
      %3010 = vst [vmem:[#allocation2 + $0xf0] sm:$0xff] %v2974
      %3011 = vst [vmem:[#allocation2 + $0xf8] sm:$0xff] %v2975
      %3012 = vst [vmem:[#allocation2 + $0x100] sm:$0xff] %v2976
      %3013 = vst [vmem:[#allocation2 + $0x108] sm:$0xff] %v2977
      %3014 = vst [vmem:[#allocation2 + $0x110] sm:$0xff] %v2978
      %3015 = vst [vmem:[#allocation2 + $0x118] sm:$0xff] %v2979
      %3016 = vst [vmem:[#allocation2 + $0x120] sm:$0xff] %v2980
      %3017 = vst [vmem:[#allocation2 + $0x128] sm:$0xff] %v2981
      %3018 = vst [vmem:[#allocation2 + $0x130] sm:$0xff] %v2982
      %v3019 = vld [vmem:[#allocation2 + $0x5] sm:$0xff]
      %v3020 = vld [vmem:[#allocation2 + $0xd] sm:$0xff]
      %v3021 = vld [vmem:[#allocation2 + $0x15] sm:$0xff]
      %v3022 = vld [vmem:[#allocation2 + $0x1d] sm:$0xff]
      %v3023 = vld [vmem:[#allocation2 + $0x25] sm:$0xff]
      %v3024 = vld [vmem:[#allocation2 + $0x2d] sm:$0xff]
      %v3025 = vld [vmem:[#allocation2 + $0x35] sm:$0xff]
      %v3026 = vld [vmem:[#allocation2 + $0x3d] sm:$0xff]
      %v3027 = vld [vmem:[#allocation2 + $0x45] sm:$0xff]
      %v3028 = vld [vmem:[#allocation2 + $0x4d] sm:$0xff]
      %v3029 = vld [vmem:[#allocation2 + $0x55] sm:$0xff]
      %v3030 = vld [vmem:[#allocation2 + $0x5d] sm:$0xff]
      %v3031 = vld [vmem:[#allocation2 + $0x65] sm:$0xff]
      %v3032 = vld [vmem:[#allocation2 + $0x6d] sm:$0xff]
      %v3033 = vld [vmem:[#allocation2 + $0x75] sm:$0xff]
      %v3034 = vld [vmem:[#allocation2 + $0x7d] sm:$0xff]
      %v3035 = vld [vmem:[#allocation2 + $0x85] sm:$0xff]
      %v3036 = vld [vmem:[#allocation2 + $0x8d] sm:$0xff]
      %v3037 = vld [vmem:[#allocation2 + $0x95] sm:$0xff]
      %v3038 = vld [vmem:[#allocation2 + $0x9d] sm:$0xff]
      %v3039 = vld [vmem:[#allocation2 + $0xa5] sm:$0xff]
      %v3040 = vld [vmem:[#allocation2 + $0xad] sm:$0xff]
      %v3041 = vld [vmem:[#allocation2 + $0xb5] sm:$0xff]
      %v3042 = vld [vmem:[#allocation2 + $0xbd] sm:$0xff]
      %v3043 = vld [vmem:[#allocation2 + $0xc5] sm:$0xff]
      %v3044 = vld [vmem:[#allocation2 + $0xcd] sm:$0xff]
      %v3045 = vld [vmem:[#allocation2 + $0xd5] sm:$0xff]
      %v3046 = vld [vmem:[#allocation2 + $0xdd] sm:$0xff]
      %v3047 = vld [vmem:[#allocation2 + $0xe5] sm:$0xff]
      %v3048 = vld [vmem:[#allocation2 + $0xed] sm:$0xff]
      %v3049 = vld [vmem:[#allocation2 + $0xf5] sm:$0xff]
      %v3050 = vld [vmem:[#allocation2 + $0xfd] sm:$0xff]
      %v3051 = vld [vmem:[#allocation2 + $0x105] sm:$0xff]
      %v3052 = vld [vmem:[#allocation2 + $0x10d] sm:$0xff]
      %v3053 = vld [vmem:[#allocation2 + $0x115] sm:$0xff]
      %v3054 = vld [vmem:[#allocation2 + $0x11d] sm:$0xff]
      %v3055 = vpack.c.bf16 %v3020, %v3019
      %v3056 = vpack.c.bf16 %v3022, %v3021
      %v3057 = vpack.c.bf16 %v3024, %v3023
      %v3058 = vpack.c.bf16 %v3026, %v3025
      %v3059 = vpack.c.bf16 %v3028, %v3027
      %v3060 = vpack.c.bf16 %v3030, %v3029
      %v3061 = vpack.c.bf16 %v3032, %v3031
      %v3062 = vpack.c.bf16 %v3034, %v3033
      %v3063 = vpack.c.bf16 %v3036, %v3035
      %v3064 = vpack.c.bf16 %v3038, %v3037
      %v3065 = vpack.c.bf16 %v3040, %v3039
      %v3066 = vpack.c.bf16 %v3042, %v3041
      %v3067 = vpack.c.bf16 %v3044, %v3043
      %v3068 = vpack.c.bf16 %v3046, %v3045
      %v3069 = vpack.c.bf16 %v3048, %v3047
      %v3070 = vpack.c.bf16 %v3050, %v3049
      %v3071 = vpack.c.bf16 %v3052, %v3051
      %v3072 = vpack.c.bf16 %v3054, %v3053
      %v3073 = vld [vmem:[%s2] sm:$0xf]
      %v3074 = vld [vmem:[%s2 + $0x4] sm:$0xf]
      %v3075 = vld [vmem:[%s2 + $0x8] sm:$0xf]
      %v3076 = vld [vmem:[%s2 + $0xc] sm:$0xf]
      %v3077 = vld [vmem:[%s2 + $0x10] sm:$0xf]
      %v3078 = vld [vmem:[%s2 + $0x14] sm:$0xf]
      %v3079 = vld [vmem:[%s2 + $0x18] sm:$0xf]
      %v3080 = vld [vmem:[%s2 + $0x1c] sm:$0xf]
      %v3081 = vld [vmem:[%s2 + $0x20] sm:$0xf]
      %v3082 = vld [vmem:[%s2 + $0x24] sm:$0xf]
      %v3083 = vld [vmem:[%s2 + $0x28] sm:$0xf]
      %v3084 = vld [vmem:[%s2 + $0x2c] sm:$0xf]
      %v3085 = vld [vmem:[%s2 + $0x30] sm:$0xf]
      %v3086 = vld [vmem:[%s2 + $0x34] sm:$0xf]
      %v3087 = vld [vmem:[%s2 + $0x38] sm:$0xf]
      %v3088 = vld [vmem:[%s2 + $0x3c] sm:$0xf]
      %v3089 = vld [vmem:[#allocation2 + $0x6] sm:$0xff]
      %v3090 = vld [vmem:[#allocation2 + $0xe] sm:$0xff]
      %v3091 = vld [vmem:[#allocation2 + $0x16] sm:$0xff]
      %v3092 = vld [vmem:[#allocation2 + $0x1e] sm:$0xff]
      %v3093 = vld [vmem:[#allocation2 + $0x26] sm:$0xff]
      %v3094 = vld [vmem:[#allocation2 + $0x2e] sm:$0xff]
      %v3095 = vld [vmem:[#allocation2 + $0x36] sm:$0xff]
      %v3096 = vld [vmem:[#allocation2 + $0x3e] sm:$0xff]
      %v3097 = vld [vmem:[#allocation2 + $0x46] sm:$0xff]
      %v3098 = vld [vmem:[#allocation2 + $0x4e] sm:$0xff]
      %v3099 = vld [vmem:[#allocation2 + $0x56] sm:$0xff]
      %v3100 = vld [vmem:[#allocation2 + $0x5e] sm:$0xff]
      %v3101 = vld [vmem:[#allocation2 + $0x66] sm:$0xff]
      %v3102 = vld [vmem:[#allocation2 + $0x6e] sm:$0xff]
      %v3103 = vld [vmem:[#allocation2 + $0x76] sm:$0xff]
      %v3104 = vld [vmem:[#allocation2 + $0x7e] sm:$0xff]
      %v3105 = vld [vmem:[#allocation2 + $0x86] sm:$0xff]
      %v3106 = vld [vmem:[#allocation2 + $0x8e] sm:$0xff]
      %v3107 = vld [vmem:[#allocation2 + $0x96] sm:$0xff]
      %v3108 = vld [vmem:[#allocation2 + $0x9e] sm:$0xff]
      %v3109 = vld [vmem:[#allocation2 + $0xa6] sm:$0xff]
      %v3110 = vld [vmem:[#allocation2 + $0xae] sm:$0xff]
      %v3111 = vld [vmem:[#allocation2 + $0xb6] sm:$0xff]
      %v3112 = vld [vmem:[#allocation2 + $0xbe] sm:$0xff]
      %v3113 = vld [vmem:[#allocation2 + $0xc6] sm:$0xff]
      %v3114 = vld [vmem:[#allocation2 + $0xce] sm:$0xff]
      %v3115 = vld [vmem:[#allocation2 + $0xd6] sm:$0xff]
      %v3116 = vld [vmem:[#allocation2 + $0xde] sm:$0xff]
      %v3117 = vld [vmem:[#allocation2 + $0xe6] sm:$0xff]
      %v3118 = vld [vmem:[#allocation2 + $0xee] sm:$0xff]
      %v3119 = vld [vmem:[#allocation2 + $0xf6] sm:$0xff]
      %v3120 = vld [vmem:[#allocation2 + $0xfe] sm:$0xff]
      %v3121 = vld [vmem:[#allocation2 + $0x106] sm:$0xff]
      %v3122 = vld [vmem:[#allocation2 + $0x10e] sm:$0xff]
      %v3123 = vld [vmem:[#allocation2 + $0x116] sm:$0xff]
      %v3124 = vld [vmem:[#allocation2 + $0x11e] sm:$0xff]
      %v3125 = vpack.c.bf16 %v3090, %v3089
      %v3126 = vpack.c.bf16 %v3092, %v3091
      %v3127 = vpack.c.bf16 %v3094, %v3093
      %v3128 = vpack.c.bf16 %v3096, %v3095
      %v3129 = vpack.c.bf16 %v3098, %v3097
      %v3130 = vpack.c.bf16 %v3100, %v3099
      %v3131 = vpack.c.bf16 %v3102, %v3101
      %v3132 = vpack.c.bf16 %v3104, %v3103
      %v3133 = vpack.c.bf16 %v3106, %v3105
      %v3134 = vpack.c.bf16 %v3108, %v3107
      %v3135 = vpack.c.bf16 %v3110, %v3109
      %v3136 = vpack.c.bf16 %v3112, %v3111
      %v3137 = vpack.c.bf16 %v3114, %v3113
      %v3138 = vpack.c.bf16 %v3116, %v3115
      %v3139 = vpack.c.bf16 %v3118, %v3117
      %v3140 = vpack.c.bf16 %v3120, %v3119
      %v3141 = vpack.c.bf16 %v3122, %v3121
      %v3142 = vpack.c.bf16 %v3124, %v3123
      %s3143 = scalar_lea.vmem %s2, 64
      %v3144 = vld [vmem:[%s3143] sm:$0xf]
      %v3145 = vld [vmem:[%s3143 + $0x4] sm:$0xf]
      %v3146 = vld [vmem:[%s3143 + $0x8] sm:$0xf]
      %v3147 = vld [vmem:[%s3143 + $0xc] sm:$0xf]
      %v3148 = vld [vmem:[%s3143 + $0x10] sm:$0xf]
      %v3149 = vld [vmem:[%s3143 + $0x14] sm:$0xf]
      %v3150 = vld [vmem:[%s3143 + $0x18] sm:$0xf]
      %v3151 = vld [vmem:[%s3143 + $0x1c] sm:$0xf]
      %v3152 = vld [vmem:[%s3143 + $0x20] sm:$0xf]
      %v3153 = vld [vmem:[%s3143 + $0x24] sm:$0xf]
      %v3154 = vld [vmem:[%s3143 + $0x28] sm:$0xf]
      %v3155 = vld [vmem:[%s3143 + $0x2c] sm:$0xf]
      %v3156 = vld [vmem:[%s3143 + $0x30] sm:$0xf]
      %v3157 = vld [vmem:[%s3143 + $0x34] sm:$0xf]
      %v3158 = vld [vmem:[%s3143 + $0x38] sm:$0xf]
      %v3159 = vld [vmem:[%s3143 + $0x3c] sm:$0xf]
      %v3176 = vunpack.c.l.b16 %v3144
      %v3177 = vunpack.c.l.b16 %v3145
      %v3178 = vunpack.c.l.b16 %v3146
      %v3179 = vunpack.c.l.b16 %v3147
      %v3180 = vunpack.c.l.b16 %v3148
      %v3181 = vunpack.c.l.b16 %v3149
      %v3182 = vunpack.c.l.b16 %v3150
      %v3183 = vunpack.c.l.b16 %v3151
      %v3184 = vunpack.c.l.b16 %v3152
      %v3185 = vunpack.c.l.b16 %v3153
      %v3186 = vunpack.c.l.b16 %v3154
      %v3187 = vunpack.c.l.b16 %v3155
      %v3188 = vunpack.c.l.b16 %v3156
      %v3189 = vunpack.c.l.b16 %v3157
      %v3190 = vunpack.c.l.b16 %v3158
      %v3191 = vunpack.c.l.b16 %v3159
      %v3192 = vpack.c.b16 %v3177, %v3176
      %v3193 = vpack.c.b16 %v3179, %v3178
      %v3194 = vpack.c.b16 %v3181, %v3180
      %v3195 = vpack.c.b16 %v3183, %v3182
      %v3196 = vpack.c.b16 %v3185, %v3184
      %v3197 = vpack.c.b16 %v3187, %v3186
      %v3198 = vpack.c.b16 %v3189, %v3188
      %v3199 = vpack.c.b16 %v3191, %v3190
      %3208 = vmatpush.bf16.msra.mxu0 %v3199
      %3209 = vmatpush.bf16.msra.mxu0 %v3198
      %3210 = vmatpush.bf16.msra.mxu0 %v3197
      %3211 = vmatpush.bf16.msra.mxu0 %v3196
      %3212 = vmatpush.bf16.msra.mxu0 %v3195
      %3213 = vmatpush.bf16.msra.mxu0 %v3194
      %3214 = vmatpush.bf16.msra.mxu0 %v3193
      %3215 = vmatpush.bf16.msra.mxu0 %v3192
      %3216 = vmatmul.bf16.gmra.mxu0 %v3125
      %v3217 = vpop.f32.mrf.mxu0
      %v3218 = vadd.f32 0.0, %v3217
      %v3219 = vpop.f32.mrf.mxu0
      %v3220 = vadd.f32 0.0, %v3219
      %3221 = vmatmul.bf16.gmra.mxu0 %v3126
      %v3222 = vpop.f32.mrf.mxu0
      %v3223 = vadd.f32 0.0, %v3222
      %v3224 = vpop.f32.mrf.mxu0
      %v3225 = vadd.f32 0.0, %v3224
      %3226 = vmatmul.bf16.gmra.mxu0 %v3127
      %v3227 = vpop.f32.mrf.mxu0
      %v3228 = vadd.f32 0.0, %v3227
      %v3229 = vpop.f32.mrf.mxu0
      %v3230 = vadd.f32 0.0, %v3229
      %3231 = vmatmul.bf16.gmra.mxu0 %v3128
      %v3232 = vpop.f32.mrf.mxu0
      %v3233 = vadd.f32 0.0, %v3232
      %v3234 = vpop.f32.mrf.mxu0
      %v3235 = vadd.f32 0.0, %v3234
      %3236 = vmatmul.bf16.gmra.mxu0 %v3129
      %v3237 = vpop.f32.mrf.mxu0
      %v3238 = vadd.f32 0.0, %v3237
      %v3239 = vpop.f32.mrf.mxu0
      %v3240 = vadd.f32 0.0, %v3239
      %3241 = vmatmul.bf16.gmra.mxu0 %v3130
      %v3242 = vpop.f32.mrf.mxu0
      %v3243 = vadd.f32 0.0, %v3242
      %v3244 = vpop.f32.mrf.mxu0
      %v3245 = vadd.f32 0.0, %v3244
      %3246 = vmatmul.bf16.gmra.mxu0 %v3131
      %v3247 = vpop.f32.mrf.mxu0
      %v3248 = vadd.f32 0.0, %v3247
      %v3249 = vpop.f32.mrf.mxu0
      %v3250 = vadd.f32 0.0, %v3249
      %3251 = vmatmul.bf16.gmra.mxu0 %v3132
      %v3252 = vpop.f32.mrf.mxu0
      %v3253 = vadd.f32 0.0, %v3252
      %v3254 = vpop.f32.mrf.mxu0
      %v3255 = vadd.f32 0.0, %v3254
      %3256 = vmatmul.bf16.gmra.mxu0 %v3133
      %v3257 = vpop.f32.mrf.mxu0
      %v3258 = vadd.f32 0.0, %v3257
      %v3259 = vpop.f32.mrf.mxu0
      %v3260 = vadd.f32 0.0, %v3259
      %3261 = vmatmul.bf16.gmra.mxu0 %v3134
      %v3262 = vpop.f32.mrf.mxu0
      %v3263 = vadd.f32 0.0, %v3262
      %v3264 = vpop.f32.mrf.mxu0
      %v3265 = vadd.f32 0.0, %v3264
      %3266 = vmatmul.bf16.gmra.mxu0 %v3135
      %v3267 = vpop.f32.mrf.mxu0
      %v3268 = vadd.f32 0.0, %v3267
      %v3269 = vpop.f32.mrf.mxu0
      %v3270 = vadd.f32 0.0, %v3269
      %3271 = vmatmul.bf16.gmra.mxu0 %v3136
      %v3272 = vpop.f32.mrf.mxu0
      %v3273 = vadd.f32 0.0, %v3272
      %v3274 = vpop.f32.mrf.mxu0
      %v3275 = vadd.f32 0.0, %v3274
      %3276 = vmatmul.bf16.gmra.mxu0 %v3137
      %v3277 = vpop.f32.mrf.mxu0
      %v3278 = vadd.f32 0.0, %v3277
      %v3279 = vpop.f32.mrf.mxu0
      %v3280 = vadd.f32 0.0, %v3279
      %3281 = vmatmul.bf16.gmra.mxu0 %v3138
      %v3282 = vpop.f32.mrf.mxu0
      %v3283 = vadd.f32 0.0, %v3282
      %v3284 = vpop.f32.mrf.mxu0
      %v3285 = vadd.f32 0.0, %v3284
      %3286 = vmatmul.bf16.gmra.mxu0 %v3139
      %v3287 = vpop.f32.mrf.mxu0
      %v3288 = vadd.f32 0.0, %v3287
      %v3289 = vpop.f32.mrf.mxu0
      %v3290 = vadd.f32 0.0, %v3289
      %3291 = vmatmul.bf16.gmra.mxu0 %v3140
      %v3292 = vpop.f32.mrf.mxu0
      %v3293 = vadd.f32 0.0, %v3292
      %v3294 = vpop.f32.mrf.mxu0
      %v3295 = vadd.f32 0.0, %v3294
      %3296 = vmatmul.bf16.gmra.mxu0 %v3141
      %v3297 = vpop.f32.mrf.mxu0
      %v3298 = vadd.f32 0.0, %v3297
      %v3299 = vpop.f32.mrf.mxu0
      %v3300 = vadd.f32 0.0, %v3299
      %3301 = vmatmul.bf16.gmra.mxu0 %v3142
      %v3302 = vpop.f32.mrf.mxu0
      %v3303 = vadd.f32 0.0, %v3302
      %v3304 = vpop.f32.mrf.mxu0
      %v3305 = vadd.f32 0.0, %v3304
      %3306 = vdwg.mxu0
      %v3323 = vunpack.c.l.b16 %v3073
      %v3324 = vunpack.c.l.b16 %v3074
      %v3325 = vunpack.c.l.b16 %v3075
      %v3326 = vunpack.c.l.b16 %v3076
      %v3327 = vunpack.c.l.b16 %v3077
      %v3328 = vunpack.c.l.b16 %v3078
      %v3329 = vunpack.c.l.b16 %v3079
      %v3330 = vunpack.c.l.b16 %v3080
      %v3331 = vunpack.c.l.b16 %v3081
      %v3332 = vunpack.c.l.b16 %v3082
      %v3333 = vunpack.c.l.b16 %v3083
      %v3334 = vunpack.c.l.b16 %v3084
      %v3335 = vunpack.c.l.b16 %v3085
      %v3336 = vunpack.c.l.b16 %v3086
      %v3337 = vunpack.c.l.b16 %v3087
      %v3338 = vunpack.c.l.b16 %v3088
      %v3339 = vpack.c.b16 %v3324, %v3323
      %v3340 = vpack.c.b16 %v3326, %v3325
      %v3341 = vpack.c.b16 %v3328, %v3327
      %v3342 = vpack.c.b16 %v3330, %v3329
      %v3343 = vpack.c.b16 %v3332, %v3331
      %v3344 = vpack.c.b16 %v3334, %v3333
      %v3345 = vpack.c.b16 %v3336, %v3335
      %v3346 = vpack.c.b16 %v3338, %v3337
      %3355 = vmatpush.bf16.msra.mxu0 %v3346
      %3356 = vmatpush.bf16.msra.mxu0 %v3345
      %3357 = vmatpush.bf16.msra.mxu0 %v3344
      %3358 = vmatpush.bf16.msra.mxu0 %v3343
      %3359 = vmatpush.bf16.msra.mxu0 %v3342
      %3360 = vmatpush.bf16.msra.mxu0 %v3341
      %3361 = vmatpush.bf16.msra.mxu0 %v3340
      %3362 = vmatpush.bf16.msra.mxu0 %v3339
      %3363 = vmatmul.bf16.gmra.mxu0 %v3055
      %v3364 = vpop.f32.mrf.mxu0
      %v3365 = vadd.f32 %v3218, %v3364
      %v3366 = vpop.f32.mrf.mxu0
      %v3367 = vadd.f32 %v3220, %v3366
      %3368 = vmatmul.bf16.gmra.mxu0 %v3056
      %v3369 = vpop.f32.mrf.mxu0
      %v3370 = vadd.f32 %v3223, %v3369
      %v3371 = vpop.f32.mrf.mxu0
      %v3372 = vadd.f32 %v3225, %v3371
      %3373 = vmatmul.bf16.gmra.mxu0 %v3057
      %v3374 = vpop.f32.mrf.mxu0
      %v3375 = vadd.f32 %v3228, %v3374
      %v3376 = vpop.f32.mrf.mxu0
      %v3377 = vadd.f32 %v3230, %v3376
      %3378 = vmatmul.bf16.gmra.mxu0 %v3058
      %v3379 = vpop.f32.mrf.mxu0
      %v3380 = vadd.f32 %v3233, %v3379
      %v3381 = vpop.f32.mrf.mxu0
      %v3382 = vadd.f32 %v3235, %v3381
      %3383 = vmatmul.bf16.gmra.mxu0 %v3059
      %v3384 = vpop.f32.mrf.mxu0
      %v3385 = vadd.f32 %v3238, %v3384
      %v3386 = vpop.f32.mrf.mxu0
      %v3387 = vadd.f32 %v3240, %v3386
      %3388 = vmatmul.bf16.gmra.mxu0 %v3060
      %v3389 = vpop.f32.mrf.mxu0
      %v3390 = vadd.f32 %v3243, %v3389
      %v3391 = vpop.f32.mrf.mxu0
      %v3392 = vadd.f32 %v3245, %v3391
      %3393 = vmatmul.bf16.gmra.mxu0 %v3061
      %v3394 = vpop.f32.mrf.mxu0
      %v3395 = vadd.f32 %v3248, %v3394
      %v3396 = vpop.f32.mrf.mxu0
      %v3397 = vadd.f32 %v3250, %v3396
      %3398 = vmatmul.bf16.gmra.mxu0 %v3062
      %v3399 = vpop.f32.mrf.mxu0
      %v3400 = vadd.f32 %v3253, %v3399
      %v3401 = vpop.f32.mrf.mxu0
      %v3402 = vadd.f32 %v3255, %v3401
      %3403 = vmatmul.bf16.gmra.mxu0 %v3063
      %v3404 = vpop.f32.mrf.mxu0
      %v3405 = vadd.f32 %v3258, %v3404
      %v3406 = vpop.f32.mrf.mxu0
      %v3407 = vadd.f32 %v3260, %v3406
      %3408 = vmatmul.bf16.gmra.mxu0 %v3064
      %v3409 = vpop.f32.mrf.mxu0
      %v3410 = vadd.f32 %v3263, %v3409
      %v3411 = vpop.f32.mrf.mxu0
      %v3412 = vadd.f32 %v3265, %v3411
      %3413 = vmatmul.bf16.gmra.mxu0 %v3065
      %v3414 = vpop.f32.mrf.mxu0
      %v3415 = vadd.f32 %v3268, %v3414
      %v3416 = vpop.f32.mrf.mxu0
      %v3417 = vadd.f32 %v3270, %v3416
      %3418 = vmatmul.bf16.gmra.mxu0 %v3066
      %v3419 = vpop.f32.mrf.mxu0
      %v3420 = vadd.f32 %v3273, %v3419
      %v3421 = vpop.f32.mrf.mxu0
      %v3422 = vadd.f32 %v3275, %v3421
      %3423 = vmatmul.bf16.gmra.mxu0 %v3067
      %v3424 = vpop.f32.mrf.mxu0
      %v3425 = vadd.f32 %v3278, %v3424
      %v3426 = vpop.f32.mrf.mxu0
      %v3427 = vadd.f32 %v3280, %v3426
      %3428 = vmatmul.bf16.gmra.mxu0 %v3068
      %v3429 = vpop.f32.mrf.mxu0
      %v3430 = vadd.f32 %v3283, %v3429
      %v3431 = vpop.f32.mrf.mxu0
      %v3432 = vadd.f32 %v3285, %v3431
      %3433 = vmatmul.bf16.gmra.mxu0 %v3069
      %v3434 = vpop.f32.mrf.mxu0
      %v3435 = vadd.f32 %v3288, %v3434
      %v3436 = vpop.f32.mrf.mxu0
      %v3437 = vadd.f32 %v3290, %v3436
      %3438 = vmatmul.bf16.gmra.mxu0 %v3070
      %v3439 = vpop.f32.mrf.mxu0
      %v3440 = vadd.f32 %v3293, %v3439
      %v3441 = vpop.f32.mrf.mxu0
      %v3442 = vadd.f32 %v3295, %v3441
      %3443 = vmatmul.bf16.gmra.mxu0 %v3071
      %v3444 = vpop.f32.mrf.mxu0
      %v3445 = vadd.f32 %v3298, %v3444
      %v3446 = vpop.f32.mrf.mxu0
      %v3447 = vadd.f32 %v3300, %v3446
      %3448 = vmatmul.bf16.gmra.mxu0 %v3072
      %v3449 = vpop.f32.mrf.mxu0
      %v3450 = vadd.f32 %v3303, %v3449
      %v3451 = vpop.f32.mrf.mxu0
      %v3452 = vadd.f32 %v3305, %v3451
      %3453 = vdwg.mxu0
      %v3454 = vld [vmem:[#allocation2 + $0x7] sm:$0xff]
      %v3455 = vld [vmem:[#allocation2 + $0xf] sm:$0xff]
      %v3456 = vld [vmem:[#allocation2 + $0x17] sm:$0xff]
      %v3457 = vld [vmem:[#allocation2 + $0x1f] sm:$0xff]
      %v3458 = vld [vmem:[#allocation2 + $0x27] sm:$0xff]
      %v3459 = vld [vmem:[#allocation2 + $0x2f] sm:$0xff]
      %v3460 = vld [vmem:[#allocation2 + $0x37] sm:$0xff]
      %v3461 = vld [vmem:[#allocation2 + $0x3f] sm:$0xff]
      %v3462 = vld [vmem:[#allocation2 + $0x47] sm:$0xff]
      %v3463 = vld [vmem:[#allocation2 + $0x4f] sm:$0xff]
      %v3464 = vld [vmem:[#allocation2 + $0x57] sm:$0xff]
      %v3465 = vld [vmem:[#allocation2 + $0x5f] sm:$0xff]
      %v3466 = vld [vmem:[#allocation2 + $0x67] sm:$0xff]
      %v3467 = vld [vmem:[#allocation2 + $0x6f] sm:$0xff]
      %v3468 = vld [vmem:[#allocation2 + $0x77] sm:$0xff]
      %v3469 = vld [vmem:[#allocation2 + $0x7f] sm:$0xff]
      %v3470 = vld [vmem:[#allocation2 + $0x87] sm:$0xff]
      %v3471 = vld [vmem:[#allocation2 + $0x8f] sm:$0xff]
      %v3472 = vld [vmem:[#allocation2 + $0x97] sm:$0xff]
      %v3473 = vld [vmem:[#allocation2 + $0x9f] sm:$0xff]
      %v3474 = vld [vmem:[#allocation2 + $0xa7] sm:$0xff]
      %v3475 = vld [vmem:[#allocation2 + $0xaf] sm:$0xff]
      %v3476 = vld [vmem:[#allocation2 + $0xb7] sm:$0xff]
      %v3477 = vld [vmem:[#allocation2 + $0xbf] sm:$0xff]
      %v3478 = vld [vmem:[#allocation2 + $0xc7] sm:$0xff]
      %v3479 = vld [vmem:[#allocation2 + $0xcf] sm:$0xff]
      %v3480 = vld [vmem:[#allocation2 + $0xd7] sm:$0xff]
      %v3481 = vld [vmem:[#allocation2 + $0xdf] sm:$0xff]
      %v3482 = vld [vmem:[#allocation2 + $0xe7] sm:$0xff]
      %v3483 = vld [vmem:[#allocation2 + $0xef] sm:$0xff]
      %v3484 = vld [vmem:[#allocation2 + $0xf7] sm:$0xff]
      %v3485 = vld [vmem:[#allocation2 + $0xff] sm:$0xff]
      %v3486 = vld [vmem:[#allocation2 + $0x107] sm:$0xff]
      %v3487 = vld [vmem:[#allocation2 + $0x10f] sm:$0xff]
      %v3488 = vld [vmem:[#allocation2 + $0x117] sm:$0xff]
      %v3489 = vld [vmem:[#allocation2 + $0x11f] sm:$0xff]
      %v3490 = vpack.c.bf16 %v3455, %v3454
      %v3491 = vpack.c.bf16 %v3457, %v3456
      %v3492 = vpack.c.bf16 %v3459, %v3458
      %v3493 = vpack.c.bf16 %v3461, %v3460
      %v3494 = vpack.c.bf16 %v3463, %v3462
      %v3495 = vpack.c.bf16 %v3465, %v3464
      %v3496 = vpack.c.bf16 %v3467, %v3466
      %v3497 = vpack.c.bf16 %v3469, %v3468
      %v3498 = vpack.c.bf16 %v3471, %v3470
      %v3499 = vpack.c.bf16 %v3473, %v3472
      %v3500 = vpack.c.bf16 %v3475, %v3474
      %v3501 = vpack.c.bf16 %v3477, %v3476
      %v3502 = vpack.c.bf16 %v3479, %v3478
      %v3503 = vpack.c.bf16 %v3481, %v3480
      %v3504 = vpack.c.bf16 %v3483, %v3482
      %v3505 = vpack.c.bf16 %v3485, %v3484
      %v3506 = vpack.c.bf16 %v3487, %v3486
      %v3507 = vpack.c.bf16 %v3489, %v3488
      %s3508 = scalar_lea.vmem %s2, 128
      %v3509 = vld [vmem:[%s3508] sm:$0xf]
      %v3510 = vld [vmem:[%s3508 + $0x4] sm:$0xf]
      %v3511 = vld [vmem:[%s3508 + $0x8] sm:$0xf]
      %v3512 = vld [vmem:[%s3508 + $0xc] sm:$0xf]
      %v3513 = vld [vmem:[%s3508 + $0x10] sm:$0xf]
      %v3514 = vld [vmem:[%s3508 + $0x14] sm:$0xf]
      %v3515 = vld [vmem:[%s3508 + $0x18] sm:$0xf]
      %v3516 = vld [vmem:[%s3508 + $0x1c] sm:$0xf]
      %v3517 = vld [vmem:[%s3508 + $0x20] sm:$0xf]
      %v3518 = vld [vmem:[%s3508 + $0x24] sm:$0xf]
      %v3519 = vld [vmem:[%s3508 + $0x28] sm:$0xf]
      %v3520 = vld [vmem:[%s3508 + $0x2c] sm:$0xf]
      %v3521 = vld [vmem:[%s3508 + $0x30] sm:$0xf]
      %v3522 = vld [vmem:[%s3508 + $0x34] sm:$0xf]
      %v3523 = vld [vmem:[%s3508 + $0x38] sm:$0xf]
      %v3524 = vld [vmem:[%s3508 + $0x3c] sm:$0xf]
      %v3541 = vunpack.c.l.b16 %v3509
      %v3542 = vunpack.c.l.b16 %v3510
      %v3543 = vunpack.c.l.b16 %v3511
      %v3544 = vunpack.c.l.b16 %v3512
      %v3545 = vunpack.c.l.b16 %v3513
      %v3546 = vunpack.c.l.b16 %v3514
      %v3547 = vunpack.c.l.b16 %v3515
      %v3548 = vunpack.c.l.b16 %v3516
      %v3549 = vunpack.c.l.b16 %v3517
      %v3550 = vunpack.c.l.b16 %v3518
      %v3551 = vunpack.c.l.b16 %v3519
      %v3552 = vunpack.c.l.b16 %v3520
      %v3553 = vunpack.c.l.b16 %v3521
      %v3554 = vunpack.c.l.b16 %v3522
      %v3555 = vunpack.c.l.b16 %v3523
      %v3556 = vunpack.c.l.b16 %v3524
      %v3557 = vpack.c.b16 %v3542, %v3541
      %v3558 = vpack.c.b16 %v3544, %v3543
      %v3559 = vpack.c.b16 %v3546, %v3545
      %v3560 = vpack.c.b16 %v3548, %v3547
      %v3561 = vpack.c.b16 %v3550, %v3549
      %v3562 = vpack.c.b16 %v3552, %v3551
      %v3563 = vpack.c.b16 %v3554, %v3553
      %v3564 = vpack.c.b16 %v3556, %v3555
      %3573 = vmatpush.bf16.msra.mxu0 %v3564
      %3574 = vmatpush.bf16.msra.mxu0 %v3563
      %3575 = vmatpush.bf16.msra.mxu0 %v3562
      %3576 = vmatpush.bf16.msra.mxu0 %v3561
      %3577 = vmatpush.bf16.msra.mxu0 %v3560
      %3578 = vmatpush.bf16.msra.mxu0 %v3559
      %3579 = vmatpush.bf16.msra.mxu0 %v3558
      %3580 = vmatpush.bf16.msra.mxu0 %v3557
      %3581 = vmatmul.bf16.gmra.mxu0 %v3490
      %v3582 = vpop.f32.mrf.mxu0
      %v3583 = vadd.f32 0.0, %v3582
      %v3584 = vpop.f32.mrf.mxu0
      %v3585 = vadd.f32 0.0, %v3584
      %3586 = vmatmul.bf16.gmra.mxu0 %v3491
      %v3587 = vpop.f32.mrf.mxu0
      %v3588 = vadd.f32 0.0, %v3587
      %v3589 = vpop.f32.mrf.mxu0
      %v3590 = vadd.f32 0.0, %v3589
      %3591 = vmatmul.bf16.gmra.mxu0 %v3492
      %v3592 = vpop.f32.mrf.mxu0
      %v3593 = vadd.f32 0.0, %v3592
      %v3594 = vpop.f32.mrf.mxu0
      %v3595 = vadd.f32 0.0, %v3594
      %3596 = vmatmul.bf16.gmra.mxu0 %v3493
      %v3597 = vpop.f32.mrf.mxu0
      %v3598 = vadd.f32 0.0, %v3597
      %v3599 = vpop.f32.mrf.mxu0
      %v3600 = vadd.f32 0.0, %v3599
      %3601 = vmatmul.bf16.gmra.mxu0 %v3494
      %v3602 = vpop.f32.mrf.mxu0
      %v3603 = vadd.f32 0.0, %v3602
      %v3604 = vpop.f32.mrf.mxu0
      %v3605 = vadd.f32 0.0, %v3604
      %3606 = vmatmul.bf16.gmra.mxu0 %v3495
      %v3607 = vpop.f32.mrf.mxu0
      %v3608 = vadd.f32 0.0, %v3607
      %v3609 = vpop.f32.mrf.mxu0
      %v3610 = vadd.f32 0.0, %v3609
      %3611 = vmatmul.bf16.gmra.mxu0 %v3496
      %v3612 = vpop.f32.mrf.mxu0
      %v3613 = vadd.f32 0.0, %v3612
      %v3614 = vpop.f32.mrf.mxu0
      %v3615 = vadd.f32 0.0, %v3614
      %3616 = vmatmul.bf16.gmra.mxu0 %v3497
      %v3617 = vpop.f32.mrf.mxu0
      %v3618 = vadd.f32 0.0, %v3617
      %v3619 = vpop.f32.mrf.mxu0
      %v3620 = vadd.f32 0.0, %v3619
      %3621 = vmatmul.bf16.gmra.mxu0 %v3498
      %v3622 = vpop.f32.mrf.mxu0
      %v3623 = vadd.f32 0.0, %v3622
      %v3624 = vpop.f32.mrf.mxu0
      %v3625 = vadd.f32 0.0, %v3624
      %3626 = vmatmul.bf16.gmra.mxu0 %v3499
      %v3627 = vpop.f32.mrf.mxu0
      %v3628 = vadd.f32 0.0, %v3627
      %v3629 = vpop.f32.mrf.mxu0
      %v3630 = vadd.f32 0.0, %v3629
      %3631 = vmatmul.bf16.gmra.mxu0 %v3500
      %v3632 = vpop.f32.mrf.mxu0
      %v3633 = vadd.f32 0.0, %v3632
      %v3634 = vpop.f32.mrf.mxu0
      %v3635 = vadd.f32 0.0, %v3634
      %3636 = vmatmul.bf16.gmra.mxu0 %v3501
      %v3637 = vpop.f32.mrf.mxu0
      %v3638 = vadd.f32 0.0, %v3637
      %v3639 = vpop.f32.mrf.mxu0
      %v3640 = vadd.f32 0.0, %v3639
      %3641 = vmatmul.bf16.gmra.mxu0 %v3502
      %v3642 = vpop.f32.mrf.mxu0
      %v3643 = vadd.f32 0.0, %v3642
      %v3644 = vpop.f32.mrf.mxu0
      %v3645 = vadd.f32 0.0, %v3644
      %3646 = vmatmul.bf16.gmra.mxu0 %v3503
      %v3647 = vpop.f32.mrf.mxu0
      %v3648 = vadd.f32 0.0, %v3647
      %v3649 = vpop.f32.mrf.mxu0
      %v3650 = vadd.f32 0.0, %v3649
      %3651 = vmatmul.bf16.gmra.mxu0 %v3504
      %v3652 = vpop.f32.mrf.mxu0
      %v3653 = vadd.f32 0.0, %v3652
      %v3654 = vpop.f32.mrf.mxu0
      %v3655 = vadd.f32 0.0, %v3654
      %3656 = vmatmul.bf16.gmra.mxu0 %v3505
      %v3657 = vpop.f32.mrf.mxu0
      %v3658 = vadd.f32 0.0, %v3657
      %v3659 = vpop.f32.mrf.mxu0
      %v3660 = vadd.f32 0.0, %v3659
      %3661 = vmatmul.bf16.gmra.mxu0 %v3506
      %v3662 = vpop.f32.mrf.mxu0
      %v3663 = vadd.f32 0.0, %v3662
      %v3664 = vpop.f32.mrf.mxu0
      %v3665 = vadd.f32 0.0, %v3664
      %3666 = vmatmul.bf16.gmra.mxu0 %v3507
      %v3667 = vpop.f32.mrf.mxu0
      %v3668 = vadd.f32 0.0, %v3667
      %v3669 = vpop.f32.mrf.mxu0
      %v3670 = vadd.f32 0.0, %v3669
      %3671 = vdwg.mxu0
      %v3672 = vadd.f32 %v3365, %v3583
      %v3673 = vadd.f32 %v3367, %v3585
      %v3674 = vadd.f32 %v3370, %v3588
      %v3675 = vadd.f32 %v3372, %v3590
      %v3676 = vadd.f32 %v3375, %v3593
      %v3677 = vadd.f32 %v3377, %v3595
      %v3678 = vadd.f32 %v3380, %v3598
      %v3679 = vadd.f32 %v3382, %v3600
      %v3680 = vadd.f32 %v3385, %v3603
      %v3681 = vadd.f32 %v3387, %v3605
      %v3682 = vadd.f32 %v3390, %v3608
      %v3683 = vadd.f32 %v3392, %v3610
      %v3684 = vadd.f32 %v3395, %v3613
      %v3685 = vadd.f32 %v3397, %v3615
      %v3686 = vadd.f32 %v3400, %v3618
      %v3687 = vadd.f32 %v3402, %v3620
      %v3688 = vadd.f32 %v3405, %v3623
      %v3689 = vadd.f32 %v3407, %v3625
      %v3690 = vadd.f32 %v3410, %v3628
      %v3691 = vadd.f32 %v3412, %v3630
      %v3692 = vadd.f32 %v3415, %v3633
      %v3693 = vadd.f32 %v3417, %v3635
      %v3694 = vadd.f32 %v3420, %v3638
      %v3695 = vadd.f32 %v3422, %v3640
      %v3696 = vadd.f32 %v3425, %v3643
      %v3697 = vadd.f32 %v3427, %v3645
      %v3698 = vadd.f32 %v3430, %v3648
      %v3699 = vadd.f32 %v3432, %v3650
      %v3700 = vadd.f32 %v3435, %v3653
      %v3701 = vadd.f32 %v3437, %v3655
      %v3702 = vadd.f32 %v3440, %v3658
      %v3703 = vadd.f32 %v3442, %v3660
      %v3704 = vadd.f32 %v3445, %v3663
      %v3705 = vadd.f32 %v3447, %v3665
      %v3706 = vadd.f32 %v3450, %v3668
      %v3707 = vadd.f32 %v3452, %v3670
      %v3708 = vld [vmem:[#allocation2 + $0x17] sm:$0xff]
      %v3709 = vld [vmem:[#allocation2 + $0x1f] sm:$0xff]
      %v3710 = vld [vmem:[#allocation2 + $0x27] sm:$0xff]
      %v3711 = vld [vmem:[#allocation2 + $0x2f] sm:$0xff]
      %v3712 = vld [vmem:[#allocation2 + $0x37] sm:$0xff]
      %v3713 = vld [vmem:[#allocation2 + $0x3f] sm:$0xff]
      %v3714 = vld [vmem:[#allocation2 + $0x47] sm:$0xff]
      %v3715 = vld [vmem:[#allocation2 + $0x4f] sm:$0xff]
      %v3716 = vld [vmem:[#allocation2 + $0x57] sm:$0xff]
      %v3717 = vld [vmem:[#allocation2 + $0x5f] sm:$0xff]
      %v3718 = vld [vmem:[#allocation2 + $0x67] sm:$0xff]
      %v3719 = vld [vmem:[#allocation2 + $0x6f] sm:$0xff]
      %v3720 = vld [vmem:[#allocation2 + $0x77] sm:$0xff]
      %v3721 = vld [vmem:[#allocation2 + $0x7f] sm:$0xff]
      %v3722 = vld [vmem:[#allocation2 + $0x87] sm:$0xff]
      %v3723 = vld [vmem:[#allocation2 + $0x8f] sm:$0xff]
      %v3724 = vld [vmem:[#allocation2 + $0x97] sm:$0xff]
      %v3725 = vld [vmem:[#allocation2 + $0x9f] sm:$0xff]
      %v3726 = vld [vmem:[#allocation2 + $0xa7] sm:$0xff]
      %v3727 = vld [vmem:[#allocation2 + $0xaf] sm:$0xff]
      %v3728 = vld [vmem:[#allocation2 + $0xb7] sm:$0xff]
      %v3729 = vld [vmem:[#allocation2 + $0xbf] sm:$0xff]
      %v3730 = vld [vmem:[#allocation2 + $0xc7] sm:$0xff]
      %v3731 = vld [vmem:[#allocation2 + $0xcf] sm:$0xff]
      %v3732 = vld [vmem:[#allocation2 + $0xd7] sm:$0xff]
      %v3733 = vld [vmem:[#allocation2 + $0xdf] sm:$0xff]
      %v3734 = vld [vmem:[#allocation2 + $0xe7] sm:$0xff]
      %v3735 = vld [vmem:[#allocation2 + $0xef] sm:$0xff]
      %v3736 = vld [vmem:[#allocation2 + $0xf7] sm:$0xff]
      %v3737 = vld [vmem:[#allocation2 + $0xff] sm:$0xff]
      %v3738 = vld [vmem:[#allocation2 + $0x107] sm:$0xff]
      %v3739 = vld [vmem:[#allocation2 + $0x10f] sm:$0xff]
      %v3740 = vld [vmem:[#allocation2 + $0x117] sm:$0xff]
      %v3741 = vld [vmem:[#allocation2 + $0x11f] sm:$0xff]
      %v3742 = vld [vmem:[#allocation2 + $0x127] sm:$0xff]
      %v3743 = vld [vmem:[#allocation2 + $0x12f] sm:$0xff]
      %v3744 = vpack.c.bf16 %v3709, %v3708
      %v3745 = vpack.c.bf16 %v3711, %v3710
      %v3746 = vpack.c.bf16 %v3713, %v3712
      %v3747 = vpack.c.bf16 %v3715, %v3714
      %v3748 = vpack.c.bf16 %v3717, %v3716
      %v3749 = vpack.c.bf16 %v3719, %v3718
      %v3750 = vpack.c.bf16 %v3721, %v3720
      %v3751 = vpack.c.bf16 %v3723, %v3722
      %v3752 = vpack.c.bf16 %v3725, %v3724
      %v3753 = vpack.c.bf16 %v3727, %v3726
      %v3754 = vpack.c.bf16 %v3729, %v3728
      %v3755 = vpack.c.bf16 %v3731, %v3730
      %v3756 = vpack.c.bf16 %v3733, %v3732
      %v3757 = vpack.c.bf16 %v3735, %v3734
      %v3758 = vpack.c.bf16 %v3737, %v3736
      %v3759 = vpack.c.bf16 %v3739, %v3738
      %v3760 = vpack.c.bf16 %v3741, %v3740
      %v3761 = vpack.c.bf16 %v3743, %v3742
      %s3762 = scalar_lea.vmem %s2, 192
      %v3763 = vld [vmem:[%s3762] sm:$0xf]
      %v3764 = vld [vmem:[%s3762 + $0x4] sm:$0xf]
      %v3765 = vld [vmem:[%s3762 + $0x8] sm:$0xf]
      %v3766 = vld [vmem:[%s3762 + $0xc] sm:$0xf]
      %v3767 = vld [vmem:[%s3762 + $0x10] sm:$0xf]
      %v3768 = vld [vmem:[%s3762 + $0x14] sm:$0xf]
      %v3769 = vld [vmem:[%s3762 + $0x18] sm:$0xf]
      %v3770 = vld [vmem:[%s3762 + $0x1c] sm:$0xf]
      %v3771 = vld [vmem:[%s3762 + $0x20] sm:$0xf]
      %v3772 = vld [vmem:[%s3762 + $0x24] sm:$0xf]
      %v3773 = vld [vmem:[%s3762 + $0x28] sm:$0xf]
      %v3774 = vld [vmem:[%s3762 + $0x2c] sm:$0xf]
      %v3775 = vld [vmem:[%s3762 + $0x30] sm:$0xf]
      %v3776 = vld [vmem:[%s3762 + $0x34] sm:$0xf]
      %v3777 = vld [vmem:[%s3762 + $0x38] sm:$0xf]
      %v3778 = vld [vmem:[%s3762 + $0x3c] sm:$0xf]
      %v3795 = vunpack.c.l.b16 %v3763
      %v3796 = vunpack.c.l.b16 %v3764
      %v3797 = vunpack.c.l.b16 %v3765
      %v3798 = vunpack.c.l.b16 %v3766
      %v3799 = vunpack.c.l.b16 %v3767
      %v3800 = vunpack.c.l.b16 %v3768
      %v3801 = vunpack.c.l.b16 %v3769
      %v3802 = vunpack.c.l.b16 %v3770
      %v3803 = vunpack.c.l.b16 %v3771
      %v3804 = vunpack.c.l.b16 %v3772
      %v3805 = vunpack.c.l.b16 %v3773
      %v3806 = vunpack.c.l.b16 %v3774
      %v3807 = vunpack.c.l.b16 %v3775
      %v3808 = vunpack.c.l.b16 %v3776
      %v3809 = vunpack.c.l.b16 %v3777
      %v3810 = vunpack.c.l.b16 %v3778
      %v3811 = vpack.c.b16 %v3796, %v3795
      %v3812 = vpack.c.b16 %v3798, %v3797
      %v3813 = vpack.c.b16 %v3800, %v3799
      %v3814 = vpack.c.b16 %v3802, %v3801
      %v3815 = vpack.c.b16 %v3804, %v3803
      %v3816 = vpack.c.b16 %v3806, %v3805
      %v3817 = vpack.c.b16 %v3808, %v3807
      %v3818 = vpack.c.b16 %v3810, %v3809
      %3827 = vmatpush.bf16.msra.mxu0 %v3818
      %3828 = vmatpush.bf16.msra.mxu0 %v3817
      %3829 = vmatpush.bf16.msra.mxu0 %v3816
      %3830 = vmatpush.bf16.msra.mxu0 %v3815
      %3831 = vmatpush.bf16.msra.mxu0 %v3814
      %3832 = vmatpush.bf16.msra.mxu0 %v3813
      %3833 = vmatpush.bf16.msra.mxu0 %v3812
      %3834 = vmatpush.bf16.msra.mxu0 %v3811
      %3835 = vmatmul.bf16.gmra.mxu0 %v3744
      %v3836 = vpop.f32.mrf.mxu0
      %v3837 = vadd.f32 0.0, %v3836
      %v3838 = vpop.f32.mrf.mxu0
      %v3839 = vadd.f32 0.0, %v3838
      %3840 = vmatmul.bf16.gmra.mxu0 %v3745
      %v3841 = vpop.f32.mrf.mxu0
      %v3842 = vadd.f32 0.0, %v3841
      %v3843 = vpop.f32.mrf.mxu0
      %v3844 = vadd.f32 0.0, %v3843
      %3845 = vmatmul.bf16.gmra.mxu0 %v3746
      %v3846 = vpop.f32.mrf.mxu0
      %v3847 = vadd.f32 0.0, %v3846
      %v3848 = vpop.f32.mrf.mxu0
      %v3849 = vadd.f32 0.0, %v3848
      %3850 = vmatmul.bf16.gmra.mxu0 %v3747
      %v3851 = vpop.f32.mrf.mxu0
      %v3852 = vadd.f32 0.0, %v3851
      %v3853 = vpop.f32.mrf.mxu0
      %v3854 = vadd.f32 0.0, %v3853
      %3855 = vmatmul.bf16.gmra.mxu0 %v3748
      %v3856 = vpop.f32.mrf.mxu0
      %v3857 = vadd.f32 0.0, %v3856
      %v3858 = vpop.f32.mrf.mxu0
      %v3859 = vadd.f32 0.0, %v3858
      %3860 = vmatmul.bf16.gmra.mxu0 %v3749
      %v3861 = vpop.f32.mrf.mxu0
      %v3862 = vadd.f32 0.0, %v3861
      %v3863 = vpop.f32.mrf.mxu0
      %v3864 = vadd.f32 0.0, %v3863
      %3865 = vmatmul.bf16.gmra.mxu0 %v3750
      %v3866 = vpop.f32.mrf.mxu0
      %v3867 = vadd.f32 0.0, %v3866
      %v3868 = vpop.f32.mrf.mxu0
      %v3869 = vadd.f32 0.0, %v3868
      %3870 = vmatmul.bf16.gmra.mxu0 %v3751
      %v3871 = vpop.f32.mrf.mxu0
      %v3872 = vadd.f32 0.0, %v3871
      %v3873 = vpop.f32.mrf.mxu0
      %v3874 = vadd.f32 0.0, %v3873
      %3875 = vmatmul.bf16.gmra.mxu0 %v3752
      %v3876 = vpop.f32.mrf.mxu0
      %v3877 = vadd.f32 0.0, %v3876
      %v3878 = vpop.f32.mrf.mxu0
      %v3879 = vadd.f32 0.0, %v3878
      %3880 = vmatmul.bf16.gmra.mxu0 %v3753
      %v3881 = vpop.f32.mrf.mxu0
      %v3882 = vadd.f32 0.0, %v3881
      %v3883 = vpop.f32.mrf.mxu0
      %v3884 = vadd.f32 0.0, %v3883
      %3885 = vmatmul.bf16.gmra.mxu0 %v3754
      %v3886 = vpop.f32.mrf.mxu0
      %v3887 = vadd.f32 0.0, %v3886
      %v3888 = vpop.f32.mrf.mxu0
      %v3889 = vadd.f32 0.0, %v3888
      %3890 = vmatmul.bf16.gmra.mxu0 %v3755
      %v3891 = vpop.f32.mrf.mxu0
      %v3892 = vadd.f32 0.0, %v3891
      %v3893 = vpop.f32.mrf.mxu0
      %v3894 = vadd.f32 0.0, %v3893
      %3895 = vmatmul.bf16.gmra.mxu0 %v3756
      %v3896 = vpop.f32.mrf.mxu0
      %v3897 = vadd.f32 0.0, %v3896
      %v3898 = vpop.f32.mrf.mxu0
      %v3899 = vadd.f32 0.0, %v3898
      %3900 = vmatmul.bf16.gmra.mxu0 %v3757
      %v3901 = vpop.f32.mrf.mxu0
      %v3902 = vadd.f32 0.0, %v3901
      %v3903 = vpop.f32.mrf.mxu0
      %v3904 = vadd.f32 0.0, %v3903
      %3905 = vmatmul.bf16.gmra.mxu0 %v3758
      %v3906 = vpop.f32.mrf.mxu0
      %v3907 = vadd.f32 0.0, %v3906
      %v3908 = vpop.f32.mrf.mxu0
      %v3909 = vadd.f32 0.0, %v3908
      %3910 = vmatmul.bf16.gmra.mxu0 %v3759
      %v3911 = vpop.f32.mrf.mxu0
      %v3912 = vadd.f32 0.0, %v3911
      %v3913 = vpop.f32.mrf.mxu0
      %v3914 = vadd.f32 0.0, %v3913
      %3915 = vmatmul.bf16.gmra.mxu0 %v3760
      %v3916 = vpop.f32.mrf.mxu0
      %v3917 = vadd.f32 0.0, %v3916
      %v3918 = vpop.f32.mrf.mxu0
      %v3919 = vadd.f32 0.0, %v3918
      %3920 = vmatmul.bf16.gmra.mxu0 %v3761
      %v3921 = vpop.f32.mrf.mxu0
      %v3922 = vadd.f32 0.0, %v3921
      %v3923 = vpop.f32.mrf.mxu0
      %v3924 = vadd.f32 0.0, %v3923
      %3925 = vdwg.mxu0
      %v3926 = vadd.f32 %v3672, %v3837
      %v3927 = vadd.f32 %v3673, %v3839
      %v3928 = vadd.f32 %v3674, %v3842
      %v3929 = vadd.f32 %v3675, %v3844
      %v3930 = vadd.f32 %v3676, %v3847
      %v3931 = vadd.f32 %v3677, %v3849
      %v3932 = vadd.f32 %v3678, %v3852
      %v3933 = vadd.f32 %v3679, %v3854
      %v3934 = vadd.f32 %v3680, %v3857
      %v3935 = vadd.f32 %v3681, %v3859
      %v3936 = vadd.f32 %v3682, %v3862
      %v3937 = vadd.f32 %v3683, %v3864
      %v3938 = vadd.f32 %v3684, %v3867
      %v3939 = vadd.f32 %v3685, %v3869
      %v3940 = vadd.f32 %v3686, %v3872
      %v3941 = vadd.f32 %v3687, %v3874
      %v3942 = vadd.f32 %v3688, %v3877
      %v3943 = vadd.f32 %v3689, %v3879
      %v3944 = vadd.f32 %v3690, %v3882
      %v3945 = vadd.f32 %v3691, %v3884
      %v3946 = vadd.f32 %v3692, %v3887
      %v3947 = vadd.f32 %v3693, %v3889
      %v3948 = vadd.f32 %v3694, %v3892
      %v3949 = vadd.f32 %v3695, %v3894
      %v3950 = vadd.f32 %v3696, %v3897
      %v3951 = vadd.f32 %v3697, %v3899
      %v3952 = vadd.f32 %v3698, %v3902
      %v3953 = vadd.f32 %v3699, %v3904
      %v3954 = vadd.f32 %v3700, %v3907
      %v3955 = vadd.f32 %v3701, %v3909
      %v3956 = vadd.f32 %v3702, %v3912
      %v3957 = vadd.f32 %v3703, %v3914
      %v3958 = vadd.f32 %v3704, %v3917
      %v3959 = vadd.f32 %v3705, %v3919
      %v3960 = vadd.f32 %v3706, %v3922
      %v3961 = vadd.f32 %v3707, %v3924
      %v3962 = vld [vmem:[#allocation2 + $0x18] sm:$0xff]
      %v3963 = vld [vmem:[#allocation2 + $0x20] sm:$0xff]
      %v3964 = vld [vmem:[#allocation2 + $0x28] sm:$0xff]
      %v3965 = vld [vmem:[#allocation2 + $0x30] sm:$0xff]
      %v3966 = vld [vmem:[#allocation2 + $0x38] sm:$0xff]
      %v3967 = vld [vmem:[#allocation2 + $0x40] sm:$0xff]
      %v3968 = vld [vmem:[#allocation2 + $0x48] sm:$0xff]
      %v3969 = vld [vmem:[#allocation2 + $0x50] sm:$0xff]
      %v3970 = vld [vmem:[#allocation2 + $0x58] sm:$0xff]
      %v3971 = vld [vmem:[#allocation2 + $0x60] sm:$0xff]
      %v3972 = vld [vmem:[#allocation2 + $0x68] sm:$0xff]
      %v3973 = vld [vmem:[#allocation2 + $0x70] sm:$0xff]
      %v3974 = vld [vmem:[#allocation2 + $0x78] sm:$0xff]
      %v3975 = vld [vmem:[#allocation2 + $0x80] sm:$0xff]
      %v3976 = vld [vmem:[#allocation2 + $0x88] sm:$0xff]
      %v3977 = vld [vmem:[#allocation2 + $0x90] sm:$0xff]
      %v3978 = vld [vmem:[#allocation2 + $0x98] sm:$0xff]
      %v3979 = vld [vmem:[#allocation2 + $0xa0] sm:$0xff]
      %v3980 = vld [vmem:[#allocation2 + $0xa8] sm:$0xff]
      %v3981 = vld [vmem:[#allocation2 + $0xb0] sm:$0xff]
      %v3982 = vld [vmem:[#allocation2 + $0xb8] sm:$0xff]
      %v3983 = vld [vmem:[#allocation2 + $0xc0] sm:$0xff]
      %v3984 = vld [vmem:[#allocation2 + $0xc8] sm:$0xff]
      %v3985 = vld [vmem:[#allocation2 + $0xd0] sm:$0xff]
      %v3986 = vld [vmem:[#allocation2 + $0xd8] sm:$0xff]
      %v3987 = vld [vmem:[#allocation2 + $0xe0] sm:$0xff]
      %v3988 = vld [vmem:[#allocation2 + $0xe8] sm:$0xff]
      %v3989 = vld [vmem:[#allocation2 + $0xf0] sm:$0xff]
      %v3990 = vld [vmem:[#allocation2 + $0xf8] sm:$0xff]
      %v3991 = vld [vmem:[#allocation2 + $0x100] sm:$0xff]
      %v3992 = vld [vmem:[#allocation2 + $0x108] sm:$0xff]
      %v3993 = vld [vmem:[#allocation2 + $0x110] sm:$0xff]
      %v3994 = vld [vmem:[#allocation2 + $0x118] sm:$0xff]
      %v3995 = vld [vmem:[#allocation2 + $0x120] sm:$0xff]
      %v3996 = vld [vmem:[#allocation2 + $0x128] sm:$0xff]
      %v3997 = vld [vmem:[#allocation2 + $0x130] sm:$0xff]
      %v3998 = vpack.c.bf16 %v3963, %v3962
      %v3999 = vpack.c.bf16 %v3965, %v3964
      %v4000 = vpack.c.bf16 %v3967, %v3966
      %v4001 = vpack.c.bf16 %v3969, %v3968
      %v4002 = vpack.c.bf16 %v3971, %v3970
      %v4003 = vpack.c.bf16 %v3973, %v3972
      %v4004 = vpack.c.bf16 %v3975, %v3974
      %v4005 = vpack.c.bf16 %v3977, %v3976
      %v4006 = vpack.c.bf16 %v3979, %v3978
      %v4007 = vpack.c.bf16 %v3981, %v3980
      %v4008 = vpack.c.bf16 %v3983, %v3982
      %v4009 = vpack.c.bf16 %v3985, %v3984
      %v4010 = vpack.c.bf16 %v3987, %v3986
      %v4011 = vpack.c.bf16 %v3989, %v3988
      %v4012 = vpack.c.bf16 %v3991, %v3990
      %v4013 = vpack.c.bf16 %v3993, %v3992
      %v4014 = vpack.c.bf16 %v3995, %v3994
      %v4015 = vpack.c.bf16 %v3997, %v3996
      %s4016 = scalar_lea.vmem %s2, 256
      %v4017 = vld [vmem:[%s4016] sm:$0xf]
      %v4018 = vld [vmem:[%s4016 + $0x4] sm:$0xf]
      %v4019 = vld [vmem:[%s4016 + $0x8] sm:$0xf]
      %v4020 = vld [vmem:[%s4016 + $0xc] sm:$0xf]
      %v4021 = vld [vmem:[%s4016 + $0x10] sm:$0xf]
      %v4022 = vld [vmem:[%s4016 + $0x14] sm:$0xf]
      %v4023 = vld [vmem:[%s4016 + $0x18] sm:$0xf]
      %v4024 = vld [vmem:[%s4016 + $0x1c] sm:$0xf]
      %v4025 = vld [vmem:[%s4016 + $0x20] sm:$0xf]
      %v4026 = vld [vmem:[%s4016 + $0x24] sm:$0xf]
      %v4027 = vld [vmem:[%s4016 + $0x28] sm:$0xf]
      %v4028 = vld [vmem:[%s4016 + $0x2c] sm:$0xf]
      %v4029 = vld [vmem:[%s4016 + $0x30] sm:$0xf]
      %v4030 = vld [vmem:[%s4016 + $0x34] sm:$0xf]
      %v4031 = vld [vmem:[%s4016 + $0x38] sm:$0xf]
      %v4032 = vld [vmem:[%s4016 + $0x3c] sm:$0xf]
      %v4049 = vunpack.c.l.b16 %v4017
      %v4050 = vunpack.c.l.b16 %v4018
      %v4051 = vunpack.c.l.b16 %v4019
      %v4052 = vunpack.c.l.b16 %v4020
      %v4053 = vunpack.c.l.b16 %v4021
      %v4054 = vunpack.c.l.b16 %v4022
      %v4055 = vunpack.c.l.b16 %v4023
      %v4056 = vunpack.c.l.b16 %v4024
      %v4057 = vunpack.c.l.b16 %v4025
      %v4058 = vunpack.c.l.b16 %v4026
      %v4059 = vunpack.c.l.b16 %v4027
      %v4060 = vunpack.c.l.b16 %v4028
      %v4061 = vunpack.c.l.b16 %v4029
      %v4062 = vunpack.c.l.b16 %v4030
      %v4063 = vunpack.c.l.b16 %v4031
      %v4064 = vunpack.c.l.b16 %v4032
      %v4065 = vpack.c.b16 %v4050, %v4049
      %v4066 = vpack.c.b16 %v4052, %v4051
      %v4067 = vpack.c.b16 %v4054, %v4053
      %v4068 = vpack.c.b16 %v4056, %v4055
      %v4069 = vpack.c.b16 %v4058, %v4057
      %v4070 = vpack.c.b16 %v4060, %v4059
      %v4071 = vpack.c.b16 %v4062, %v4061
      %v4072 = vpack.c.b16 %v4064, %v4063
      %4081 = vmatpush.bf16.msra.mxu0 %v4072
      %4082 = vmatpush.bf16.msra.mxu0 %v4071
      %4083 = vmatpush.bf16.msra.mxu0 %v4070
      %4084 = vmatpush.bf16.msra.mxu0 %v4069
      %4085 = vmatpush.bf16.msra.mxu0 %v4068
      %4086 = vmatpush.bf16.msra.mxu0 %v4067
      %4087 = vmatpush.bf16.msra.mxu0 %v4066
      %4088 = vmatpush.bf16.msra.mxu0 %v4065
      %4089 = vmatmul.bf16.gmra.mxu0 %v3998
      %v4090 = vpop.f32.mrf.mxu0
      %v4091 = vadd.f32 0.0, %v4090
      %v4092 = vpop.f32.mrf.mxu0
      %v4093 = vadd.f32 0.0, %v4092
      %4094 = vmatmul.bf16.gmra.mxu0 %v3999
      %v4095 = vpop.f32.mrf.mxu0
      %v4096 = vadd.f32 0.0, %v4095
      %v4097 = vpop.f32.mrf.mxu0
      %v4098 = vadd.f32 0.0, %v4097
      %4099 = vmatmul.bf16.gmra.mxu0 %v4000
      %v4100 = vpop.f32.mrf.mxu0
      %v4101 = vadd.f32 0.0, %v4100
      %v4102 = vpop.f32.mrf.mxu0
      %v4103 = vadd.f32 0.0, %v4102
      %4104 = vmatmul.bf16.gmra.mxu0 %v4001
      %v4105 = vpop.f32.mrf.mxu0
      %v4106 = vadd.f32 0.0, %v4105
      %v4107 = vpop.f32.mrf.mxu0
      %v4108 = vadd.f32 0.0, %v4107
      %4109 = vmatmul.bf16.gmra.mxu0 %v4002
      %v4110 = vpop.f32.mrf.mxu0
      %v4111 = vadd.f32 0.0, %v4110
      %v4112 = vpop.f32.mrf.mxu0
      %v4113 = vadd.f32 0.0, %v4112
      %4114 = vmatmul.bf16.gmra.mxu0 %v4003
      %v4115 = vpop.f32.mrf.mxu0
      %v4116 = vadd.f32 0.0, %v4115
      %v4117 = vpop.f32.mrf.mxu0
      %v4118 = vadd.f32 0.0, %v4117
      %4119 = vmatmul.bf16.gmra.mxu0 %v4004
      %v4120 = vpop.f32.mrf.mxu0
      %v4121 = vadd.f32 0.0, %v4120
      %v4122 = vpop.f32.mrf.mxu0
      %v4123 = vadd.f32 0.0, %v4122
      %4124 = vmatmul.bf16.gmra.mxu0 %v4005
      %v4125 = vpop.f32.mrf.mxu0
      %v4126 = vadd.f32 0.0, %v4125
      %v4127 = vpop.f32.mrf.mxu0
      %v4128 = vadd.f32 0.0, %v4127
      %4129 = vmatmul.bf16.gmra.mxu0 %v4006
      %v4130 = vpop.f32.mrf.mxu0
      %v4131 = vadd.f32 0.0, %v4130
      %v4132 = vpop.f32.mrf.mxu0
      %v4133 = vadd.f32 0.0, %v4132
      %4134 = vmatmul.bf16.gmra.mxu0 %v4007
      %v4135 = vpop.f32.mrf.mxu0
      %v4136 = vadd.f32 0.0, %v4135
      %v4137 = vpop.f32.mrf.mxu0
      %v4138 = vadd.f32 0.0, %v4137
      %4139 = vmatmul.bf16.gmra.mxu0 %v4008
      %v4140 = vpop.f32.mrf.mxu0
      %v4141 = vadd.f32 0.0, %v4140
      %v4142 = vpop.f32.mrf.mxu0
      %v4143 = vadd.f32 0.0, %v4142
      %4144 = vmatmul.bf16.gmra.mxu0 %v4009
      %v4145 = vpop.f32.mrf.mxu0
      %v4146 = vadd.f32 0.0, %v4145
      %v4147 = vpop.f32.mrf.mxu0
      %v4148 = vadd.f32 0.0, %v4147
      %4149 = vmatmul.bf16.gmra.mxu0 %v4010
      %v4150 = vpop.f32.mrf.mxu0
      %v4151 = vadd.f32 0.0, %v4150
      %v4152 = vpop.f32.mrf.mxu0
      %v4153 = vadd.f32 0.0, %v4152
      %4154 = vmatmul.bf16.gmra.mxu0 %v4011
      %v4155 = vpop.f32.mrf.mxu0
      %v4156 = vadd.f32 0.0, %v4155
      %v4157 = vpop.f32.mrf.mxu0
      %v4158 = vadd.f32 0.0, %v4157
      %4159 = vmatmul.bf16.gmra.mxu0 %v4012
      %v4160 = vpop.f32.mrf.mxu0
      %v4161 = vadd.f32 0.0, %v4160
      %v4162 = vpop.f32.mrf.mxu0
      %v4163 = vadd.f32 0.0, %v4162
      %4164 = vmatmul.bf16.gmra.mxu0 %v4013
      %v4165 = vpop.f32.mrf.mxu0
      %v4166 = vadd.f32 0.0, %v4165
      %v4167 = vpop.f32.mrf.mxu0
      %v4168 = vadd.f32 0.0, %v4167
      %4169 = vmatmul.bf16.gmra.mxu0 %v4014
      %v4170 = vpop.f32.mrf.mxu0
      %v4171 = vadd.f32 0.0, %v4170
      %v4172 = vpop.f32.mrf.mxu0
      %v4173 = vadd.f32 0.0, %v4172
      %4174 = vmatmul.bf16.gmra.mxu0 %v4015
      %v4175 = vpop.f32.mrf.mxu0
      %v4176 = vadd.f32 0.0, %v4175
      %v4177 = vpop.f32.mrf.mxu0
      %v4178 = vadd.f32 0.0, %v4177
      %4179 = vdwg.mxu0
      %v4180 = vadd.f32 %v3926, %v4091
      %v4181 = vadd.f32 %v3927, %v4093
      %v4182 = vadd.f32 %v3928, %v4096
      %v4183 = vadd.f32 %v3929, %v4098
      %v4184 = vadd.f32 %v3930, %v4101
      %v4185 = vadd.f32 %v3931, %v4103
      %v4186 = vadd.f32 %v3932, %v4106
      %v4187 = vadd.f32 %v3933, %v4108
      %v4188 = vadd.f32 %v3934, %v4111
      %v4189 = vadd.f32 %v3935, %v4113
      %v4190 = vadd.f32 %v3936, %v4116
      %v4191 = vadd.f32 %v3937, %v4118
      %v4192 = vadd.f32 %v3938, %v4121
      %v4193 = vadd.f32 %v3939, %v4123
      %v4194 = vadd.f32 %v3940, %v4126
      %v4195 = vadd.f32 %v3941, %v4128
      %v4196 = vadd.f32 %v3942, %v4131
      %v4197 = vadd.f32 %v3943, %v4133
      %v4198 = vadd.f32 %v3944, %v4136
      %v4199 = vadd.f32 %v3945, %v4138
      %v4200 = vadd.f32 %v3946, %v4141
      %v4201 = vadd.f32 %v3947, %v4143
      %v4202 = vadd.f32 %v3948, %v4146
      %v4203 = vadd.f32 %v3949, %v4148
      %v4204 = vadd.f32 %v3950, %v4151
      %v4205 = vadd.f32 %v3951, %v4153
      %v4206 = vadd.f32 %v3952, %v4156
      %v4207 = vadd.f32 %v3953, %v4158
      %v4208 = vadd.f32 %v3954, %v4161
      %v4209 = vadd.f32 %v3955, %v4163
      %v4210 = vadd.f32 %v3956, %v4166
      %v4211 = vadd.f32 %v3957, %v4168
      %v4212 = vadd.f32 %v3958, %v4171
      %v4213 = vadd.f32 %v3959, %v4173
      %v4214 = vadd.f32 %v3960, %v4176
      %v4215 = vadd.f32 %v3961, %v4178
      %v4216 = vld [vmem:[#allocation2 + $0x19] sm:$0xff]
      %v4217 = vld [vmem:[#allocation2 + $0x21] sm:$0xff]
      %v4218 = vld [vmem:[#allocation2 + $0x29] sm:$0xff]
      %v4219 = vld [vmem:[#allocation2 + $0x31] sm:$0xff]
      %v4220 = vld [vmem:[#allocation2 + $0x39] sm:$0xff]
      %v4221 = vld [vmem:[#allocation2 + $0x41] sm:$0xff]
      %v4222 = vld [vmem:[#allocation2 + $0x49] sm:$0xff]
      %v4223 = vld [vmem:[#allocation2 + $0x51] sm:$0xff]
      %v4224 = vld [vmem:[#allocation2 + $0x59] sm:$0xff]
      %v4225 = vld [vmem:[#allocation2 + $0x61] sm:$0xff]
      %v4226 = vld [vmem:[#allocation2 + $0x69] sm:$0xff]
      %v4227 = vld [vmem:[#allocation2 + $0x71] sm:$0xff]
      %v4228 = vld [vmem:[#allocation2 + $0x79] sm:$0xff]
      %v4229 = vld [vmem:[#allocation2 + $0x81] sm:$0xff]
      %v4230 = vld [vmem:[#allocation2 + $0x89] sm:$0xff]
      %v4231 = vld [vmem:[#allocation2 + $0x91] sm:$0xff]
      %v4232 = vld [vmem:[#allocation2 + $0x99] sm:$0xff]
      %v4233 = vld [vmem:[#allocation2 + $0xa1] sm:$0xff]
      %v4234 = vld [vmem:[#allocation2 + $0xa9] sm:$0xff]
      %v4235 = vld [vmem:[#allocation2 + $0xb1] sm:$0xff]
      %v4236 = vld [vmem:[#allocation2 + $0xb9] sm:$0xff]
      %v4237 = vld [vmem:[#allocation2 + $0xc1] sm:$0xff]
      %v4238 = vld [vmem:[#allocation2 + $0xc9] sm:$0xff]
      %v4239 = vld [vmem:[#allocation2 + $0xd1] sm:$0xff]
      %v4240 = vld [vmem:[#allocation2 + $0xd9] sm:$0xff]
      %v4241 = vld [vmem:[#allocation2 + $0xe1] sm:$0xff]
      %v4242 = vld [vmem:[#allocation2 + $0xe9] sm:$0xff]
      %v4243 = vld [vmem:[#allocation2 + $0xf1] sm:$0xff]
      %v4244 = vld [vmem:[#allocation2 + $0xf9] sm:$0xff]
      %v4245 = vld [vmem:[#allocation2 + $0x101] sm:$0xff]
      %v4246 = vld [vmem:[#allocation2 + $0x109] sm:$0xff]
      %v4247 = vld [vmem:[#allocation2 + $0x111] sm:$0xff]
      %v4248 = vld [vmem:[#allocation2 + $0x119] sm:$0xff]
      %v4249 = vld [vmem:[#allocation2 + $0x121] sm:$0xff]
      %v4250 = vld [vmem:[#allocation2 + $0x129] sm:$0xff]
      %v4251 = vld [vmem:[#allocation2 + $0x131] sm:$0xff]
      %v4252 = vpack.c.bf16 %v4217, %v4216
      %v4253 = vpack.c.bf16 %v4219, %v4218
      %v4254 = vpack.c.bf16 %v4221, %v4220
      %v4255 = vpack.c.bf16 %v4223, %v4222
      %v4256 = vpack.c.bf16 %v4225, %v4224
      %v4257 = vpack.c.bf16 %v4227, %v4226
      %v4258 = vpack.c.bf16 %v4229, %v4228
      %v4259 = vpack.c.bf16 %v4231, %v4230
      %v4260 = vpack.c.bf16 %v4233, %v4232
      %v4261 = vpack.c.bf16 %v4235, %v4234
      %v4262 = vpack.c.bf16 %v4237, %v4236
      %v4263 = vpack.c.bf16 %v4239, %v4238
      %v4264 = vpack.c.bf16 %v4241, %v4240
      %v4265 = vpack.c.bf16 %v4243, %v4242
      %v4266 = vpack.c.bf16 %v4245, %v4244
      %v4267 = vpack.c.bf16 %v4247, %v4246
      %v4268 = vpack.c.bf16 %v4249, %v4248
      %v4269 = vpack.c.bf16 %v4251, %v4250
      %s4270 = scalar_lea.vmem %s2, 320
      %v4271 = vld [vmem:[%s4270] sm:$0xf]
      %v4272 = vld [vmem:[%s4270 + $0x4] sm:$0xf]
      %v4273 = vld [vmem:[%s4270 + $0x8] sm:$0xf]
      %v4274 = vld [vmem:[%s4270 + $0xc] sm:$0xf]
      %v4275 = vld [vmem:[%s4270 + $0x10] sm:$0xf]
      %v4276 = vld [vmem:[%s4270 + $0x14] sm:$0xf]
      %v4277 = vld [vmem:[%s4270 + $0x18] sm:$0xf]
      %v4278 = vld [vmem:[%s4270 + $0x1c] sm:$0xf]
      %v4279 = vld [vmem:[%s4270 + $0x20] sm:$0xf]
      %v4280 = vld [vmem:[%s4270 + $0x24] sm:$0xf]
      %v4281 = vld [vmem:[%s4270 + $0x28] sm:$0xf]
      %v4282 = vld [vmem:[%s4270 + $0x2c] sm:$0xf]
      %v4283 = vld [vmem:[%s4270 + $0x30] sm:$0xf]
      %v4284 = vld [vmem:[%s4270 + $0x34] sm:$0xf]
      %v4285 = vld [vmem:[%s4270 + $0x38] sm:$0xf]
      %v4286 = vld [vmem:[%s4270 + $0x3c] sm:$0xf]
      %v4303 = vunpack.c.l.b16 %v4271
      %v4304 = vunpack.c.l.b16 %v4272
      %v4305 = vunpack.c.l.b16 %v4273
      %v4306 = vunpack.c.l.b16 %v4274
      %v4307 = vunpack.c.l.b16 %v4275
      %v4308 = vunpack.c.l.b16 %v4276
      %v4309 = vunpack.c.l.b16 %v4277
      %v4310 = vunpack.c.l.b16 %v4278
      %v4311 = vunpack.c.l.b16 %v4279
      %v4312 = vunpack.c.l.b16 %v4280
      %v4313 = vunpack.c.l.b16 %v4281
      %v4314 = vunpack.c.l.b16 %v4282
      %v4315 = vunpack.c.l.b16 %v4283
      %v4316 = vunpack.c.l.b16 %v4284
      %v4317 = vunpack.c.l.b16 %v4285
      %v4318 = vunpack.c.l.b16 %v4286
      %v4319 = vpack.c.b16 %v4304, %v4303
      %v4320 = vpack.c.b16 %v4306, %v4305
      %v4321 = vpack.c.b16 %v4308, %v4307
      %v4322 = vpack.c.b16 %v4310, %v4309
      %v4323 = vpack.c.b16 %v4312, %v4311
      %v4324 = vpack.c.b16 %v4314, %v4313
      %v4325 = vpack.c.b16 %v4316, %v4315
      %v4326 = vpack.c.b16 %v4318, %v4317
      %4335 = vmatpush.bf16.msra.mxu0 %v4326
      %4336 = vmatpush.bf16.msra.mxu0 %v4325
      %4337 = vmatpush.bf16.msra.mxu0 %v4324
      %4338 = vmatpush.bf16.msra.mxu0 %v4323
      %4339 = vmatpush.bf16.msra.mxu0 %v4322
      %4340 = vmatpush.bf16.msra.mxu0 %v4321
      %4341 = vmatpush.bf16.msra.mxu0 %v4320
      %4342 = vmatpush.bf16.msra.mxu0 %v4319
      %4343 = vmatmul.bf16.gmra.mxu0 %v4252
      %v4344 = vpop.f32.mrf.mxu0
      %v4345 = vadd.f32 0.0, %v4344
      %v4346 = vpop.f32.mrf.mxu0
      %v4347 = vadd.f32 0.0, %v4346
      %4348 = vmatmul.bf16.gmra.mxu0 %v4253
      %v4349 = vpop.f32.mrf.mxu0
      %v4350 = vadd.f32 0.0, %v4349
      %v4351 = vpop.f32.mrf.mxu0
      %v4352 = vadd.f32 0.0, %v4351
      %4353 = vmatmul.bf16.gmra.mxu0 %v4254
      %v4354 = vpop.f32.mrf.mxu0
      %v4355 = vadd.f32 0.0, %v4354
      %v4356 = vpop.f32.mrf.mxu0
      %v4357 = vadd.f32 0.0, %v4356
      %4358 = vmatmul.bf16.gmra.mxu0 %v4255
      %v4359 = vpop.f32.mrf.mxu0
      %v4360 = vadd.f32 0.0, %v4359
      %v4361 = vpop.f32.mrf.mxu0
      %v4362 = vadd.f32 0.0, %v4361
      %4363 = vmatmul.bf16.gmra.mxu0 %v4256
      %v4364 = vpop.f32.mrf.mxu0
      %v4365 = vadd.f32 0.0, %v4364
      %v4366 = vpop.f32.mrf.mxu0
      %v4367 = vadd.f32 0.0, %v4366
      %4368 = vmatmul.bf16.gmra.mxu0 %v4257
      %v4369 = vpop.f32.mrf.mxu0
      %v4370 = vadd.f32 0.0, %v4369
      %v4371 = vpop.f32.mrf.mxu0
      %v4372 = vadd.f32 0.0, %v4371
      %4373 = vmatmul.bf16.gmra.mxu0 %v4258
      %v4374 = vpop.f32.mrf.mxu0
      %v4375 = vadd.f32 0.0, %v4374
      %v4376 = vpop.f32.mrf.mxu0
      %v4377 = vadd.f32 0.0, %v4376
      %4378 = vmatmul.bf16.gmra.mxu0 %v4259
      %v4379 = vpop.f32.mrf.mxu0
      %v4380 = vadd.f32 0.0, %v4379
      %v4381 = vpop.f32.mrf.mxu0
      %v4382 = vadd.f32 0.0, %v4381
      %4383 = vmatmul.bf16.gmra.mxu0 %v4260
      %v4384 = vpop.f32.mrf.mxu0
      %v4385 = vadd.f32 0.0, %v4384
      %v4386 = vpop.f32.mrf.mxu0
      %v4387 = vadd.f32 0.0, %v4386
      %4388 = vmatmul.bf16.gmra.mxu0 %v4261
      %v4389 = vpop.f32.mrf.mxu0
      %v4390 = vadd.f32 0.0, %v4389
      %v4391 = vpop.f32.mrf.mxu0
      %v4392 = vadd.f32 0.0, %v4391
      %4393 = vmatmul.bf16.gmra.mxu0 %v4262
      %v4394 = vpop.f32.mrf.mxu0
      %v4395 = vadd.f32 0.0, %v4394
      %v4396 = vpop.f32.mrf.mxu0
      %v4397 = vadd.f32 0.0, %v4396
      %4398 = vmatmul.bf16.gmra.mxu0 %v4263
      %v4399 = vpop.f32.mrf.mxu0
      %v4400 = vadd.f32 0.0, %v4399
      %v4401 = vpop.f32.mrf.mxu0
      %v4402 = vadd.f32 0.0, %v4401
      %4403 = vmatmul.bf16.gmra.mxu0 %v4264
      %v4404 = vpop.f32.mrf.mxu0
      %v4405 = vadd.f32 0.0, %v4404
      %v4406 = vpop.f32.mrf.mxu0
      %v4407 = vadd.f32 0.0, %v4406
      %4408 = vmatmul.bf16.gmra.mxu0 %v4265
      %v4409 = vpop.f32.mrf.mxu0
      %v4410 = vadd.f32 0.0, %v4409
      %v4411 = vpop.f32.mrf.mxu0
      %v4412 = vadd.f32 0.0, %v4411
      %4413 = vmatmul.bf16.gmra.mxu0 %v4266
      %v4414 = vpop.f32.mrf.mxu0
      %v4415 = vadd.f32 0.0, %v4414
      %v4416 = vpop.f32.mrf.mxu0
      %v4417 = vadd.f32 0.0, %v4416
      %4418 = vmatmul.bf16.gmra.mxu0 %v4267
      %v4419 = vpop.f32.mrf.mxu0
      %v4420 = vadd.f32 0.0, %v4419
      %v4421 = vpop.f32.mrf.mxu0
      %v4422 = vadd.f32 0.0, %v4421
      %4423 = vmatmul.bf16.gmra.mxu0 %v4268
      %v4424 = vpop.f32.mrf.mxu0
      %v4425 = vadd.f32 0.0, %v4424
      %v4426 = vpop.f32.mrf.mxu0
      %v4427 = vadd.f32 0.0, %v4426
      %4428 = vmatmul.bf16.gmra.mxu0 %v4269
      %v4429 = vpop.f32.mrf.mxu0
      %v4430 = vadd.f32 0.0, %v4429
      %v4431 = vpop.f32.mrf.mxu0
      %v4432 = vadd.f32 0.0, %v4431
      %4433 = vdwg.mxu0
      %v4434 = vadd.f32 %v4180, %v4345
      %v4435 = vadd.f32 %v4181, %v4347
      %v4436 = vadd.f32 %v4182, %v4350
      %v4437 = vadd.f32 %v4183, %v4352
      %v4438 = vadd.f32 %v4184, %v4355
      %v4439 = vadd.f32 %v4185, %v4357
      %v4440 = vadd.f32 %v4186, %v4360
      %v4441 = vadd.f32 %v4187, %v4362
      %v4442 = vadd.f32 %v4188, %v4365
      %v4443 = vadd.f32 %v4189, %v4367
      %v4444 = vadd.f32 %v4190, %v4370
      %v4445 = vadd.f32 %v4191, %v4372
      %v4446 = vadd.f32 %v4192, %v4375
      %v4447 = vadd.f32 %v4193, %v4377
      %v4448 = vadd.f32 %v4194, %v4380
      %v4449 = vadd.f32 %v4195, %v4382
      %v4450 = vadd.f32 %v4196, %v4385
      %v4451 = vadd.f32 %v4197, %v4387
      %v4452 = vadd.f32 %v4198, %v4390
      %v4453 = vadd.f32 %v4199, %v4392
      %v4454 = vadd.f32 %v4200, %v4395
      %v4455 = vadd.f32 %v4201, %v4397
      %v4456 = vadd.f32 %v4202, %v4400
      %v4457 = vadd.f32 %v4203, %v4402
      %v4458 = vadd.f32 %v4204, %v4405
      %v4459 = vadd.f32 %v4205, %v4407
      %v4460 = vadd.f32 %v4206, %v4410
      %v4461 = vadd.f32 %v4207, %v4412
      %v4462 = vadd.f32 %v4208, %v4415
      %v4463 = vadd.f32 %v4209, %v4417
      %v4464 = vadd.f32 %v4210, %v4420
      %v4465 = vadd.f32 %v4211, %v4422
      %v4466 = vadd.f32 %v4212, %v4425
      %v4467 = vadd.f32 %v4213, %v4427
      %v4468 = vadd.f32 %v4214, %v4430
      %v4469 = vadd.f32 %v4215, %v4432
      %v4470 = vld [vmem:[#allocation2 + $0x29] sm:$0xff]
      %v4471 = vld [vmem:[#allocation2 + $0x31] sm:$0xff]
      %v4472 = vld [vmem:[#allocation2 + $0x39] sm:$0xff]
      %v4473 = vld [vmem:[#allocation2 + $0x41] sm:$0xff]
      %v4474 = vld [vmem:[#allocation2 + $0x49] sm:$0xff]
      %v4475 = vld [vmem:[#allocation2 + $0x51] sm:$0xff]
      %v4476 = vld [vmem:[#allocation2 + $0x59] sm:$0xff]
      %v4477 = vld [vmem:[#allocation2 + $0x61] sm:$0xff]
      %v4478 = vld [vmem:[#allocation2 + $0x69] sm:$0xff]
      %v4479 = vld [vmem:[#allocation2 + $0x71] sm:$0xff]
      %v4480 = vld [vmem:[#allocation2 + $0x79] sm:$0xff]
      %v4481 = vld [vmem:[#allocation2 + $0x81] sm:$0xff]
      %v4482 = vld [vmem:[#allocation2 + $0x89] sm:$0xff]
      %v4483 = vld [vmem:[#allocation2 + $0x91] sm:$0xff]
      %v4484 = vld [vmem:[#allocation2 + $0x99] sm:$0xff]
      %v4485 = vld [vmem:[#allocation2 + $0xa1] sm:$0xff]
      %v4486 = vld [vmem:[#allocation2 + $0xa9] sm:$0xff]
      %v4487 = vld [vmem:[#allocation2 + $0xb1] sm:$0xff]
      %v4488 = vld [vmem:[#allocation2 + $0xb9] sm:$0xff]
      %v4489 = vld [vmem:[#allocation2 + $0xc1] sm:$0xff]
      %v4490 = vld [vmem:[#allocation2 + $0xc9] sm:$0xff]
      %v4491 = vld [vmem:[#allocation2 + $0xd1] sm:$0xff]
      %v4492 = vld [vmem:[#allocation2 + $0xd9] sm:$0xff]
      %v4493 = vld [vmem:[#allocation2 + $0xe1] sm:$0xff]
      %v4494 = vld [vmem:[#allocation2 + $0xe9] sm:$0xff]
      %v4495 = vld [vmem:[#allocation2 + $0xf1] sm:$0xff]
      %v4496 = vld [vmem:[#allocation2 + $0xf9] sm:$0xff]
      %v4497 = vld [vmem:[#allocation2 + $0x101] sm:$0xff]
      %v4498 = vld [vmem:[#allocation2 + $0x109] sm:$0xff]
      %v4499 = vld [vmem:[#allocation2 + $0x111] sm:$0xff]
      %v4500 = vld [vmem:[#allocation2 + $0x119] sm:$0xff]
      %v4501 = vld [vmem:[#allocation2 + $0x121] sm:$0xff]
      %v4502 = vld [vmem:[#allocation2 + $0x129] sm:$0xff]
      %v4503 = vld [vmem:[#allocation2 + $0x131] sm:$0xff]
      %v4504 = vld [vmem:[#allocation2 + $0x139] sm:$0xff]
      %v4505 = vld [vmem:[#allocation2 + $0x141] sm:$0xff]
      %v4506 = vpack.c.bf16 %v4471, %v4470
      %v4507 = vpack.c.bf16 %v4473, %v4472
      %v4508 = vpack.c.bf16 %v4475, %v4474
      %v4509 = vpack.c.bf16 %v4477, %v4476
      %v4510 = vpack.c.bf16 %v4479, %v4478
      %v4511 = vpack.c.bf16 %v4481, %v4480
      %v4512 = vpack.c.bf16 %v4483, %v4482
      %v4513 = vpack.c.bf16 %v4485, %v4484
      %v4514 = vpack.c.bf16 %v4487, %v4486
      %v4515 = vpack.c.bf16 %v4489, %v4488
      %v4516 = vpack.c.bf16 %v4491, %v4490
      %v4517 = vpack.c.bf16 %v4493, %v4492
      %v4518 = vpack.c.bf16 %v4495, %v4494
      %v4519 = vpack.c.bf16 %v4497, %v4496
      %v4520 = vpack.c.bf16 %v4499, %v4498
      %v4521 = vpack.c.bf16 %v4501, %v4500
      %v4522 = vpack.c.bf16 %v4503, %v4502
      %v4523 = vpack.c.bf16 %v4505, %v4504
      %s4524 = scalar_lea.vmem %s2, 384
      %v4525 = vld [vmem:[%s4524] sm:$0xf]
      %v4526 = vld [vmem:[%s4524 + $0x4] sm:$0xf]
      %v4527 = vld [vmem:[%s4524 + $0x8] sm:$0xf]
      %v4528 = vld [vmem:[%s4524 + $0xc] sm:$0xf]
      %v4529 = vld [vmem:[%s4524 + $0x10] sm:$0xf]
      %v4530 = vld [vmem:[%s4524 + $0x14] sm:$0xf]
      %v4531 = vld [vmem:[%s4524 + $0x18] sm:$0xf]
      %v4532 = vld [vmem:[%s4524 + $0x1c] sm:$0xf]
      %v4533 = vld [vmem:[%s4524 + $0x20] sm:$0xf]
      %v4534 = vld [vmem:[%s4524 + $0x24] sm:$0xf]
      %v4535 = vld [vmem:[%s4524 + $0x28] sm:$0xf]
      %v4536 = vld [vmem:[%s4524 + $0x2c] sm:$0xf]
      %v4537 = vld [vmem:[%s4524 + $0x30] sm:$0xf]
      %v4538 = vld [vmem:[%s4524 + $0x34] sm:$0xf]
      %v4539 = vld [vmem:[%s4524 + $0x38] sm:$0xf]
      %v4540 = vld [vmem:[%s4524 + $0x3c] sm:$0xf]
      %v4557 = vunpack.c.l.b16 %v4525
      %v4558 = vunpack.c.l.b16 %v4526
      %v4559 = vunpack.c.l.b16 %v4527
      %v4560 = vunpack.c.l.b16 %v4528
      %v4561 = vunpack.c.l.b16 %v4529
      %v4562 = vunpack.c.l.b16 %v4530
      %v4563 = vunpack.c.l.b16 %v4531
      %v4564 = vunpack.c.l.b16 %v4532
      %v4565 = vunpack.c.l.b16 %v4533
      %v4566 = vunpack.c.l.b16 %v4534
      %v4567 = vunpack.c.l.b16 %v4535
      %v4568 = vunpack.c.l.b16 %v4536
      %v4569 = vunpack.c.l.b16 %v4537
      %v4570 = vunpack.c.l.b16 %v4538
      %v4571 = vunpack.c.l.b16 %v4539
      %v4572 = vunpack.c.l.b16 %v4540
      %v4573 = vpack.c.b16 %v4558, %v4557
      %v4574 = vpack.c.b16 %v4560, %v4559
      %v4575 = vpack.c.b16 %v4562, %v4561
      %v4576 = vpack.c.b16 %v4564, %v4563
      %v4577 = vpack.c.b16 %v4566, %v4565
      %v4578 = vpack.c.b16 %v4568, %v4567
      %v4579 = vpack.c.b16 %v4570, %v4569
      %v4580 = vpack.c.b16 %v4572, %v4571
      %4589 = vmatpush.bf16.msra.mxu0 %v4580
      %4590 = vmatpush.bf16.msra.mxu0 %v4579
      %4591 = vmatpush.bf16.msra.mxu0 %v4578
      %4592 = vmatpush.bf16.msra.mxu0 %v4577
      %4593 = vmatpush.bf16.msra.mxu0 %v4576
      %4594 = vmatpush.bf16.msra.mxu0 %v4575
      %4595 = vmatpush.bf16.msra.mxu0 %v4574
      %4596 = vmatpush.bf16.msra.mxu0 %v4573
      %4597 = vmatmul.bf16.gmra.mxu0 %v4506
      %v4598 = vpop.f32.mrf.mxu0
      %v4599 = vadd.f32 0.0, %v4598
      %v4600 = vpop.f32.mrf.mxu0
      %v4601 = vadd.f32 0.0, %v4600
      %4602 = vmatmul.bf16.gmra.mxu0 %v4507
      %v4603 = vpop.f32.mrf.mxu0
      %v4604 = vadd.f32 0.0, %v4603
      %v4605 = vpop.f32.mrf.mxu0
      %v4606 = vadd.f32 0.0, %v4605
      %4607 = vmatmul.bf16.gmra.mxu0 %v4508
      %v4608 = vpop.f32.mrf.mxu0
      %v4609 = vadd.f32 0.0, %v4608
      %v4610 = vpop.f32.mrf.mxu0
      %v4611 = vadd.f32 0.0, %v4610
      %4612 = vmatmul.bf16.gmra.mxu0 %v4509
      %v4613 = vpop.f32.mrf.mxu0
      %v4614 = vadd.f32 0.0, %v4613
      %v4615 = vpop.f32.mrf.mxu0
      %v4616 = vadd.f32 0.0, %v4615
      %4617 = vmatmul.bf16.gmra.mxu0 %v4510
      %v4618 = vpop.f32.mrf.mxu0
      %v4619 = vadd.f32 0.0, %v4618
      %v4620 = vpop.f32.mrf.mxu0
      %v4621 = vadd.f32 0.0, %v4620
      %4622 = vmatmul.bf16.gmra.mxu0 %v4511
      %v4623 = vpop.f32.mrf.mxu0
      %v4624 = vadd.f32 0.0, %v4623
      %v4625 = vpop.f32.mrf.mxu0
      %v4626 = vadd.f32 0.0, %v4625
      %4627 = vmatmul.bf16.gmra.mxu0 %v4512
      %v4628 = vpop.f32.mrf.mxu0
      %v4629 = vadd.f32 0.0, %v4628
      %v4630 = vpop.f32.mrf.mxu0
      %v4631 = vadd.f32 0.0, %v4630
      %4632 = vmatmul.bf16.gmra.mxu0 %v4513
      %v4633 = vpop.f32.mrf.mxu0
      %v4634 = vadd.f32 0.0, %v4633
      %v4635 = vpop.f32.mrf.mxu0
      %v4636 = vadd.f32 0.0, %v4635
      %4637 = vmatmul.bf16.gmra.mxu0 %v4514
      %v4638 = vpop.f32.mrf.mxu0
      %v4639 = vadd.f32 0.0, %v4638
      %v4640 = vpop.f32.mrf.mxu0
      %v4641 = vadd.f32 0.0, %v4640
      %4642 = vmatmul.bf16.gmra.mxu0 %v4515
      %v4643 = vpop.f32.mrf.mxu0
      %v4644 = vadd.f32 0.0, %v4643
      %v4645 = vpop.f32.mrf.mxu0
      %v4646 = vadd.f32 0.0, %v4645
      %4647 = vmatmul.bf16.gmra.mxu0 %v4516
      %v4648 = vpop.f32.mrf.mxu0
      %v4649 = vadd.f32 0.0, %v4648
      %v4650 = vpop.f32.mrf.mxu0
      %v4651 = vadd.f32 0.0, %v4650
      %4652 = vmatmul.bf16.gmra.mxu0 %v4517
      %v4653 = vpop.f32.mrf.mxu0
      %v4654 = vadd.f32 0.0, %v4653
      %v4655 = vpop.f32.mrf.mxu0
      %v4656 = vadd.f32 0.0, %v4655
      %4657 = vmatmul.bf16.gmra.mxu0 %v4518
      %v4658 = vpop.f32.mrf.mxu0
      %v4659 = vadd.f32 0.0, %v4658
      %v4660 = vpop.f32.mrf.mxu0
      %v4661 = vadd.f32 0.0, %v4660
      %4662 = vmatmul.bf16.gmra.mxu0 %v4519
      %v4663 = vpop.f32.mrf.mxu0
      %v4664 = vadd.f32 0.0, %v4663
      %v4665 = vpop.f32.mrf.mxu0
      %v4666 = vadd.f32 0.0, %v4665
      %4667 = vmatmul.bf16.gmra.mxu0 %v4520
      %v4668 = vpop.f32.mrf.mxu0
      %v4669 = vadd.f32 0.0, %v4668
      %v4670 = vpop.f32.mrf.mxu0
      %v4671 = vadd.f32 0.0, %v4670
      %4672 = vmatmul.bf16.gmra.mxu0 %v4521
      %v4673 = vpop.f32.mrf.mxu0
      %v4674 = vadd.f32 0.0, %v4673
      %v4675 = vpop.f32.mrf.mxu0
      %v4676 = vadd.f32 0.0, %v4675
      %4677 = vmatmul.bf16.gmra.mxu0 %v4522
      %v4678 = vpop.f32.mrf.mxu0
      %v4679 = vadd.f32 0.0, %v4678
      %v4680 = vpop.f32.mrf.mxu0
      %v4681 = vadd.f32 0.0, %v4680
      %4682 = vmatmul.bf16.gmra.mxu0 %v4523
      %v4683 = vpop.f32.mrf.mxu0
      %v4684 = vadd.f32 0.0, %v4683
      %v4685 = vpop.f32.mrf.mxu0
      %v4686 = vadd.f32 0.0, %v4685
      %4687 = vdwg.mxu0
      %v4688 = vadd.f32 %v4434, %v4599
      %v4689 = vadd.f32 %v4435, %v4601
      %v4690 = vadd.f32 %v4436, %v4604
      %v4691 = vadd.f32 %v4437, %v4606
      %v4692 = vadd.f32 %v4438, %v4609
      %v4693 = vadd.f32 %v4439, %v4611
      %v4694 = vadd.f32 %v4440, %v4614
      %v4695 = vadd.f32 %v4441, %v4616
      %v4696 = vadd.f32 %v4442, %v4619
      %v4697 = vadd.f32 %v4443, %v4621
      %v4698 = vadd.f32 %v4444, %v4624
      %v4699 = vadd.f32 %v4445, %v4626
      %v4700 = vadd.f32 %v4446, %v4629
      %v4701 = vadd.f32 %v4447, %v4631
      %v4702 = vadd.f32 %v4448, %v4634
      %v4703 = vadd.f32 %v4449, %v4636
      %v4704 = vadd.f32 %v4450, %v4639
      %v4705 = vadd.f32 %v4451, %v4641
      %v4706 = vadd.f32 %v4452, %v4644
      %v4707 = vadd.f32 %v4453, %v4646
      %v4708 = vadd.f32 %v4454, %v4649
      %v4709 = vadd.f32 %v4455, %v4651
      %v4710 = vadd.f32 %v4456, %v4654
      %v4711 = vadd.f32 %v4457, %v4656
      %v4712 = vadd.f32 %v4458, %v4659
      %v4713 = vadd.f32 %v4459, %v4661
      %v4714 = vadd.f32 %v4460, %v4664
      %v4715 = vadd.f32 %v4461, %v4666
      %v4716 = vadd.f32 %v4462, %v4669
      %v4717 = vadd.f32 %v4463, %v4671
      %v4718 = vadd.f32 %v4464, %v4674
      %v4719 = vadd.f32 %v4465, %v4676
      %v4720 = vadd.f32 %v4466, %v4679
      %v4721 = vadd.f32 %v4467, %v4681
      %v4722 = vadd.f32 %v4468, %v4684
      %v4723 = vadd.f32 %v4469, %v4686
      %v4724 = vld [vmem:[#allocation2 + $0x2a] sm:$0xff]
      %v4725 = vld [vmem:[#allocation2 + $0x32] sm:$0xff]
      %v4726 = vld [vmem:[#allocation2 + $0x3a] sm:$0xff]
      %v4727 = vld [vmem:[#allocation2 + $0x42] sm:$0xff]
      %v4728 = vld [vmem:[#allocation2 + $0x4a] sm:$0xff]
      %v4729 = vld [vmem:[#allocation2 + $0x52] sm:$0xff]
      %v4730 = vld [vmem:[#allocation2 + $0x5a] sm:$0xff]
      %v4731 = vld [vmem:[#allocation2 + $0x62] sm:$0xff]
      %v4732 = vld [vmem:[#allocation2 + $0x6a] sm:$0xff]
      %v4733 = vld [vmem:[#allocation2 + $0x72] sm:$0xff]
      %v4734 = vld [vmem:[#allocation2 + $0x7a] sm:$0xff]
      %v4735 = vld [vmem:[#allocation2 + $0x82] sm:$0xff]
      %v4736 = vld [vmem:[#allocation2 + $0x8a] sm:$0xff]
      %v4737 = vld [vmem:[#allocation2 + $0x92] sm:$0xff]
      %v4738 = vld [vmem:[#allocation2 + $0x9a] sm:$0xff]
      %v4739 = vld [vmem:[#allocation2 + $0xa2] sm:$0xff]
      %v4740 = vld [vmem:[#allocation2 + $0xaa] sm:$0xff]
      %v4741 = vld [vmem:[#allocation2 + $0xb2] sm:$0xff]
      %v4742 = vld [vmem:[#allocation2 + $0xba] sm:$0xff]
      %v4743 = vld [vmem:[#allocation2 + $0xc2] sm:$0xff]
      %v4744 = vld [vmem:[#allocation2 + $0xca] sm:$0xff]
      %v4745 = vld [vmem:[#allocation2 + $0xd2] sm:$0xff]
      %v4746 = vld [vmem:[#allocation2 + $0xda] sm:$0xff]
      %v4747 = vld [vmem:[#allocation2 + $0xe2] sm:$0xff]
      %v4748 = vld [vmem:[#allocation2 + $0xea] sm:$0xff]
      %v4749 = vld [vmem:[#allocation2 + $0xf2] sm:$0xff]
      %v4750 = vld [vmem:[#allocation2 + $0xfa] sm:$0xff]
      %v4751 = vld [vmem:[#allocation2 + $0x102] sm:$0xff]
      %v4752 = vld [vmem:[#allocation2 + $0x10a] sm:$0xff]
      %v4753 = vld [vmem:[#allocation2 + $0x112] sm:$0xff]
      %v4754 = vld [vmem:[#allocation2 + $0x11a] sm:$0xff]
      %v4755 = vld [vmem:[#allocation2 + $0x122] sm:$0xff]
      %v4756 = vld [vmem:[#allocation2 + $0x12a] sm:$0xff]
      %v4757 = vld [vmem:[#allocation2 + $0x132] sm:$0xff]
      %v4758 = vld [vmem:[#allocation2 + $0x13a] sm:$0xff]
      %v4759 = vld [vmem:[#allocation2 + $0x142] sm:$0xff]
      %v4760 = vpack.c.bf16 %v4725, %v4724
      %v4761 = vpack.c.bf16 %v4727, %v4726
      %v4762 = vpack.c.bf16 %v4729, %v4728
      %v4763 = vpack.c.bf16 %v4731, %v4730
      %v4764 = vpack.c.bf16 %v4733, %v4732
      %v4765 = vpack.c.bf16 %v4735, %v4734
      %v4766 = vpack.c.bf16 %v4737, %v4736
      %v4767 = vpack.c.bf16 %v4739, %v4738
      %v4768 = vpack.c.bf16 %v4741, %v4740
      %v4769 = vpack.c.bf16 %v4743, %v4742
      %v4770 = vpack.c.bf16 %v4745, %v4744
      %v4771 = vpack.c.bf16 %v4747, %v4746
      %v4772 = vpack.c.bf16 %v4749, %v4748
      %v4773 = vpack.c.bf16 %v4751, %v4750
      %v4774 = vpack.c.bf16 %v4753, %v4752
      %v4775 = vpack.c.bf16 %v4755, %v4754
      %v4776 = vpack.c.bf16 %v4757, %v4756
      %v4777 = vpack.c.bf16 %v4759, %v4758
      %s4778 = scalar_lea.vmem %s2, 448
      %v4779 = vld [vmem:[%s4778] sm:$0xf]
      %v4780 = vld [vmem:[%s4778 + $0x4] sm:$0xf]
      %v4781 = vld [vmem:[%s4778 + $0x8] sm:$0xf]
      %v4782 = vld [vmem:[%s4778 + $0xc] sm:$0xf]
      %v4783 = vld [vmem:[%s4778 + $0x10] sm:$0xf]
      %v4784 = vld [vmem:[%s4778 + $0x14] sm:$0xf]
      %v4785 = vld [vmem:[%s4778 + $0x18] sm:$0xf]
      %v4786 = vld [vmem:[%s4778 + $0x1c] sm:$0xf]
      %v4787 = vld [vmem:[%s4778 + $0x20] sm:$0xf]
      %v4788 = vld [vmem:[%s4778 + $0x24] sm:$0xf]
      %v4789 = vld [vmem:[%s4778 + $0x28] sm:$0xf]
      %v4790 = vld [vmem:[%s4778 + $0x2c] sm:$0xf]
      %v4791 = vld [vmem:[%s4778 + $0x30] sm:$0xf]
      %v4792 = vld [vmem:[%s4778 + $0x34] sm:$0xf]
      %v4793 = vld [vmem:[%s4778 + $0x38] sm:$0xf]
      %v4794 = vld [vmem:[%s4778 + $0x3c] sm:$0xf]
      %v4811 = vunpack.c.l.b16 %v4779
      %v4812 = vunpack.c.l.b16 %v4780
      %v4813 = vunpack.c.l.b16 %v4781
      %v4814 = vunpack.c.l.b16 %v4782
      %v4815 = vunpack.c.l.b16 %v4783
      %v4816 = vunpack.c.l.b16 %v4784
      %v4817 = vunpack.c.l.b16 %v4785
      %v4818 = vunpack.c.l.b16 %v4786
      %v4819 = vunpack.c.l.b16 %v4787
      %v4820 = vunpack.c.l.b16 %v4788
      %v4821 = vunpack.c.l.b16 %v4789
      %v4822 = vunpack.c.l.b16 %v4790
      %v4823 = vunpack.c.l.b16 %v4791
      %v4824 = vunpack.c.l.b16 %v4792
      %v4825 = vunpack.c.l.b16 %v4793
      %v4826 = vunpack.c.l.b16 %v4794
      %v4827 = vpack.c.b16 %v4812, %v4811
      %v4828 = vpack.c.b16 %v4814, %v4813
      %v4829 = vpack.c.b16 %v4816, %v4815
      %v4830 = vpack.c.b16 %v4818, %v4817
      %v4831 = vpack.c.b16 %v4820, %v4819
      %v4832 = vpack.c.b16 %v4822, %v4821
      %v4833 = vpack.c.b16 %v4824, %v4823
      %v4834 = vpack.c.b16 %v4826, %v4825
      %4843 = vmatpush.bf16.msra.mxu0 %v4834
      %4844 = vmatpush.bf16.msra.mxu0 %v4833
      %4845 = vmatpush.bf16.msra.mxu0 %v4832
      %4846 = vmatpush.bf16.msra.mxu0 %v4831
      %4847 = vmatpush.bf16.msra.mxu0 %v4830
      %4848 = vmatpush.bf16.msra.mxu0 %v4829
      %4849 = vmatpush.bf16.msra.mxu0 %v4828
      %4850 = vmatpush.bf16.msra.mxu0 %v4827
      %4851 = vmatmul.bf16.gmra.mxu0 %v4760
      %v4852 = vpop.f32.mrf.mxu0
      %v4853 = vadd.f32 0.0, %v4852
      %v4854 = vpop.f32.mrf.mxu0
      %v4855 = vadd.f32 0.0, %v4854
      %4856 = vmatmul.bf16.gmra.mxu0 %v4761
      %v4857 = vpop.f32.mrf.mxu0
      %v4858 = vadd.f32 0.0, %v4857
      %v4859 = vpop.f32.mrf.mxu0
      %v4860 = vadd.f32 0.0, %v4859
      %4861 = vmatmul.bf16.gmra.mxu0 %v4762
      %v4862 = vpop.f32.mrf.mxu0
      %v4863 = vadd.f32 0.0, %v4862
      %v4864 = vpop.f32.mrf.mxu0
      %v4865 = vadd.f32 0.0, %v4864
      %4866 = vmatmul.bf16.gmra.mxu0 %v4763
      %v4867 = vpop.f32.mrf.mxu0
      %v4868 = vadd.f32 0.0, %v4867
      %v4869 = vpop.f32.mrf.mxu0
      %v4870 = vadd.f32 0.0, %v4869
      %4871 = vmatmul.bf16.gmra.mxu0 %v4764
      %v4872 = vpop.f32.mrf.mxu0
      %v4873 = vadd.f32 0.0, %v4872
      %v4874 = vpop.f32.mrf.mxu0
      %v4875 = vadd.f32 0.0, %v4874
      %4876 = vmatmul.bf16.gmra.mxu0 %v4765
      %v4877 = vpop.f32.mrf.mxu0
      %v4878 = vadd.f32 0.0, %v4877
      %v4879 = vpop.f32.mrf.mxu0
      %v4880 = vadd.f32 0.0, %v4879
      %4881 = vmatmul.bf16.gmra.mxu0 %v4766
      %v4882 = vpop.f32.mrf.mxu0
      %v4883 = vadd.f32 0.0, %v4882
      %v4884 = vpop.f32.mrf.mxu0
      %v4885 = vadd.f32 0.0, %v4884
      %4886 = vmatmul.bf16.gmra.mxu0 %v4767
      %v4887 = vpop.f32.mrf.mxu0
      %v4888 = vadd.f32 0.0, %v4887
      %v4889 = vpop.f32.mrf.mxu0
      %v4890 = vadd.f32 0.0, %v4889
      %4891 = vmatmul.bf16.gmra.mxu0 %v4768
      %v4892 = vpop.f32.mrf.mxu0
      %v4893 = vadd.f32 0.0, %v4892
      %v4894 = vpop.f32.mrf.mxu0
      %v4895 = vadd.f32 0.0, %v4894
      %4896 = vmatmul.bf16.gmra.mxu0 %v4769
      %v4897 = vpop.f32.mrf.mxu0
      %v4898 = vadd.f32 0.0, %v4897
      %v4899 = vpop.f32.mrf.mxu0
      %v4900 = vadd.f32 0.0, %v4899
      %4901 = vmatmul.bf16.gmra.mxu0 %v4770
      %v4902 = vpop.f32.mrf.mxu0
      %v4903 = vadd.f32 0.0, %v4902
      %v4904 = vpop.f32.mrf.mxu0
      %v4905 = vadd.f32 0.0, %v4904
      %4906 = vmatmul.bf16.gmra.mxu0 %v4771
      %v4907 = vpop.f32.mrf.mxu0
      %v4908 = vadd.f32 0.0, %v4907
      %v4909 = vpop.f32.mrf.mxu0
      %v4910 = vadd.f32 0.0, %v4909
      %4911 = vmatmul.bf16.gmra.mxu0 %v4772
      %v4912 = vpop.f32.mrf.mxu0
      %v4913 = vadd.f32 0.0, %v4912
      %v4914 = vpop.f32.mrf.mxu0
      %v4915 = vadd.f32 0.0, %v4914
      %4916 = vmatmul.bf16.gmra.mxu0 %v4773
      %v4917 = vpop.f32.mrf.mxu0
      %v4918 = vadd.f32 0.0, %v4917
      %v4919 = vpop.f32.mrf.mxu0
      %v4920 = vadd.f32 0.0, %v4919
      %4921 = vmatmul.bf16.gmra.mxu0 %v4774
      %v4922 = vpop.f32.mrf.mxu0
      %v4923 = vadd.f32 0.0, %v4922
      %v4924 = vpop.f32.mrf.mxu0
      %v4925 = vadd.f32 0.0, %v4924
      %4926 = vmatmul.bf16.gmra.mxu0 %v4775
      %v4927 = vpop.f32.mrf.mxu0
      %v4928 = vadd.f32 0.0, %v4927
      %v4929 = vpop.f32.mrf.mxu0
      %v4930 = vadd.f32 0.0, %v4929
      %4931 = vmatmul.bf16.gmra.mxu0 %v4776
      %v4932 = vpop.f32.mrf.mxu0
      %v4933 = vadd.f32 0.0, %v4932
      %v4934 = vpop.f32.mrf.mxu0
      %v4935 = vadd.f32 0.0, %v4934
      %4936 = vmatmul.bf16.gmra.mxu0 %v4777
      %v4937 = vpop.f32.mrf.mxu0
      %v4938 = vadd.f32 0.0, %v4937
      %v4939 = vpop.f32.mrf.mxu0
      %v4940 = vadd.f32 0.0, %v4939
      %4941 = vdwg.mxu0
      %v4942 = vadd.f32 %v4688, %v4853
      %v4943 = vadd.f32 %v4689, %v4855
      %v4944 = vadd.f32 %v4690, %v4858
      %v4945 = vadd.f32 %v4691, %v4860
      %v4946 = vadd.f32 %v4692, %v4863
      %v4947 = vadd.f32 %v4693, %v4865
      %v4948 = vadd.f32 %v4694, %v4868
      %v4949 = vadd.f32 %v4695, %v4870
      %v4950 = vadd.f32 %v4696, %v4873
      %v4951 = vadd.f32 %v4697, %v4875
      %v4952 = vadd.f32 %v4698, %v4878
      %v4953 = vadd.f32 %v4699, %v4880
      %v4954 = vadd.f32 %v4700, %v4883
      %v4955 = vadd.f32 %v4701, %v4885
      %v4956 = vadd.f32 %v4702, %v4888
      %v4957 = vadd.f32 %v4703, %v4890
      %v4958 = vadd.f32 %v4704, %v4893
      %v4959 = vadd.f32 %v4705, %v4895
      %v4960 = vadd.f32 %v4706, %v4898
      %v4961 = vadd.f32 %v4707, %v4900
      %v4962 = vadd.f32 %v4708, %v4903
      %v4963 = vadd.f32 %v4709, %v4905
      %v4964 = vadd.f32 %v4710, %v4908
      %v4965 = vadd.f32 %v4711, %v4910
      %v4966 = vadd.f32 %v4712, %v4913
      %v4967 = vadd.f32 %v4713, %v4915
      %v4968 = vadd.f32 %v4714, %v4918
      %v4969 = vadd.f32 %v4715, %v4920
      %v4970 = vadd.f32 %v4716, %v4923
      %v4971 = vadd.f32 %v4717, %v4925
      %v4972 = vadd.f32 %v4718, %v4928
      %v4973 = vadd.f32 %v4719, %v4930
      %v4974 = vadd.f32 %v4720, %v4933
      %v4975 = vadd.f32 %v4721, %v4935
      %v4976 = vadd.f32 %v4722, %v4938
      %v4977 = vadd.f32 %v4723, %v4940
      %v4978 = vld [vmem:[#allocation2 + $0x2b] sm:$0xff]
      %v4979 = vld [vmem:[#allocation2 + $0x33] sm:$0xff]
      %v4980 = vld [vmem:[#allocation2 + $0x3b] sm:$0xff]
      %v4981 = vld [vmem:[#allocation2 + $0x43] sm:$0xff]
      %v4982 = vld [vmem:[#allocation2 + $0x4b] sm:$0xff]
      %v4983 = vld [vmem:[#allocation2 + $0x53] sm:$0xff]
      %v4984 = vld [vmem:[#allocation2 + $0x5b] sm:$0xff]
      %v4985 = vld [vmem:[#allocation2 + $0x63] sm:$0xff]
      %v4986 = vld [vmem:[#allocation2 + $0x6b] sm:$0xff]
      %v4987 = vld [vmem:[#allocation2 + $0x73] sm:$0xff]
      %v4988 = vld [vmem:[#allocation2 + $0x7b] sm:$0xff]
      %v4989 = vld [vmem:[#allocation2 + $0x83] sm:$0xff]
      %v4990 = vld [vmem:[#allocation2 + $0x8b] sm:$0xff]
      %v4991 = vld [vmem:[#allocation2 + $0x93] sm:$0xff]
      %v4992 = vld [vmem:[#allocation2 + $0x9b] sm:$0xff]
      %v4993 = vld [vmem:[#allocation2 + $0xa3] sm:$0xff]
      %v4994 = vld [vmem:[#allocation2 + $0xab] sm:$0xff]
      %v4995 = vld [vmem:[#allocation2 + $0xb3] sm:$0xff]
      %v4996 = vld [vmem:[#allocation2 + $0xbb] sm:$0xff]
      %v4997 = vld [vmem:[#allocation2 + $0xc3] sm:$0xff]
      %v4998 = vld [vmem:[#allocation2 + $0xcb] sm:$0xff]
      %v4999 = vld [vmem:[#allocation2 + $0xd3] sm:$0xff]
      %v5000 = vld [vmem:[#allocation2 + $0xdb] sm:$0xff]
      %v5001 = vld [vmem:[#allocation2 + $0xe3] sm:$0xff]
      %v5002 = vld [vmem:[#allocation2 + $0xeb] sm:$0xff]
      %v5003 = vld [vmem:[#allocation2 + $0xf3] sm:$0xff]
      %v5004 = vld [vmem:[#allocation2 + $0xfb] sm:$0xff]
      %v5005 = vld [vmem:[#allocation2 + $0x103] sm:$0xff]
      %v5006 = vld [vmem:[#allocation2 + $0x10b] sm:$0xff]
      %v5007 = vld [vmem:[#allocation2 + $0x113] sm:$0xff]
      %v5008 = vld [vmem:[#allocation2 + $0x11b] sm:$0xff]
      %v5009 = vld [vmem:[#allocation2 + $0x123] sm:$0xff]
      %v5010 = vld [vmem:[#allocation2 + $0x12b] sm:$0xff]
      %v5011 = vld [vmem:[#allocation2 + $0x133] sm:$0xff]
      %v5012 = vld [vmem:[#allocation2 + $0x13b] sm:$0xff]
      %v5013 = vld [vmem:[#allocation2 + $0x143] sm:$0xff]
      %v5014 = vpack.c.bf16 %v4979, %v4978
      %v5015 = vpack.c.bf16 %v4981, %v4980
      %v5016 = vpack.c.bf16 %v4983, %v4982
      %v5017 = vpack.c.bf16 %v4985, %v4984
      %v5018 = vpack.c.bf16 %v4987, %v4986
      %v5019 = vpack.c.bf16 %v4989, %v4988
      %v5020 = vpack.c.bf16 %v4991, %v4990
      %v5021 = vpack.c.bf16 %v4993, %v4992
      %v5022 = vpack.c.bf16 %v4995, %v4994
      %v5023 = vpack.c.bf16 %v4997, %v4996
      %v5024 = vpack.c.bf16 %v4999, %v4998
      %v5025 = vpack.c.bf16 %v5001, %v5000
      %v5026 = vpack.c.bf16 %v5003, %v5002
      %v5027 = vpack.c.bf16 %v5005, %v5004
      %v5028 = vpack.c.bf16 %v5007, %v5006
      %v5029 = vpack.c.bf16 %v5009, %v5008
      %v5030 = vpack.c.bf16 %v5011, %v5010
      %v5031 = vpack.c.bf16 %v5013, %v5012
      %s5032 = scalar_lea.vmem %s2, 512
      %v5033 = vld [vmem:[%s5032] sm:$0xf]
      %v5034 = vld [vmem:[%s5032 + $0x4] sm:$0xf]
      %v5035 = vld [vmem:[%s5032 + $0x8] sm:$0xf]
      %v5036 = vld [vmem:[%s5032 + $0xc] sm:$0xf]
      %v5037 = vld [vmem:[%s5032 + $0x10] sm:$0xf]
      %v5038 = vld [vmem:[%s5032 + $0x14] sm:$0xf]
      %v5039 = vld [vmem:[%s5032 + $0x18] sm:$0xf]
      %v5040 = vld [vmem:[%s5032 + $0x1c] sm:$0xf]
      %v5041 = vld [vmem:[%s5032 + $0x20] sm:$0xf]
      %v5042 = vld [vmem:[%s5032 + $0x24] sm:$0xf]
      %v5043 = vld [vmem:[%s5032 + $0x28] sm:$0xf]
      %v5044 = vld [vmem:[%s5032 + $0x2c] sm:$0xf]
      %v5045 = vld [vmem:[%s5032 + $0x30] sm:$0xf]
      %v5046 = vld [vmem:[%s5032 + $0x34] sm:$0xf]
      %v5047 = vld [vmem:[%s5032 + $0x38] sm:$0xf]
      %v5048 = vld [vmem:[%s5032 + $0x3c] sm:$0xf]
      %v5065 = vunpack.c.l.b16 %v5033
      %v5066 = vunpack.c.l.b16 %v5034
      %v5067 = vunpack.c.l.b16 %v5035
      %v5068 = vunpack.c.l.b16 %v5036
      %v5069 = vunpack.c.l.b16 %v5037
      %v5070 = vunpack.c.l.b16 %v5038
      %v5071 = vunpack.c.l.b16 %v5039
      %v5072 = vunpack.c.l.b16 %v5040
      %v5073 = vunpack.c.l.b16 %v5041
      %v5074 = vunpack.c.l.b16 %v5042
      %v5075 = vunpack.c.l.b16 %v5043
      %v5076 = vunpack.c.l.b16 %v5044
      %v5077 = vunpack.c.l.b16 %v5045
      %v5078 = vunpack.c.l.b16 %v5046
      %v5079 = vunpack.c.l.b16 %v5047
      %v5080 = vunpack.c.l.b16 %v5048
      %v5081 = vpack.c.b16 %v5066, %v5065
      %v5082 = vpack.c.b16 %v5068, %v5067
      %v5083 = vpack.c.b16 %v5070, %v5069
      %v5084 = vpack.c.b16 %v5072, %v5071
      %v5085 = vpack.c.b16 %v5074, %v5073
      %v5086 = vpack.c.b16 %v5076, %v5075
      %v5087 = vpack.c.b16 %v5078, %v5077
      %v5088 = vpack.c.b16 %v5080, %v5079
      %5097 = vmatpush.bf16.msra.mxu0 %v5088
      %5098 = vmatpush.bf16.msra.mxu0 %v5087
      %5099 = vmatpush.bf16.msra.mxu0 %v5086
      %5100 = vmatpush.bf16.msra.mxu0 %v5085
      %5101 = vmatpush.bf16.msra.mxu0 %v5084
      %5102 = vmatpush.bf16.msra.mxu0 %v5083
      %5103 = vmatpush.bf16.msra.mxu0 %v5082
      %5104 = vmatpush.bf16.msra.mxu0 %v5081
      %5105 = vmatmul.bf16.gmra.mxu0 %v5014
      %v5106 = vpop.f32.mrf.mxu0
      %v5107 = vadd.f32 0.0, %v5106
      %v5108 = vpop.f32.mrf.mxu0
      %v5109 = vadd.f32 0.0, %v5108
      %5110 = vmatmul.bf16.gmra.mxu0 %v5015
      %v5111 = vpop.f32.mrf.mxu0
      %v5112 = vadd.f32 0.0, %v5111
      %v5113 = vpop.f32.mrf.mxu0
      %v5114 = vadd.f32 0.0, %v5113
      %5115 = vmatmul.bf16.gmra.mxu0 %v5016
      %v5116 = vpop.f32.mrf.mxu0
      %v5117 = vadd.f32 0.0, %v5116
      %v5118 = vpop.f32.mrf.mxu0
      %v5119 = vadd.f32 0.0, %v5118
      %5120 = vmatmul.bf16.gmra.mxu0 %v5017
      %v5121 = vpop.f32.mrf.mxu0
      %v5122 = vadd.f32 0.0, %v5121
      %v5123 = vpop.f32.mrf.mxu0
      %v5124 = vadd.f32 0.0, %v5123
      %5125 = vmatmul.bf16.gmra.mxu0 %v5018
      %v5126 = vpop.f32.mrf.mxu0
      %v5127 = vadd.f32 0.0, %v5126
      %v5128 = vpop.f32.mrf.mxu0
      %v5129 = vadd.f32 0.0, %v5128
      %5130 = vmatmul.bf16.gmra.mxu0 %v5019
      %v5131 = vpop.f32.mrf.mxu0
      %v5132 = vadd.f32 0.0, %v5131
      %v5133 = vpop.f32.mrf.mxu0
      %v5134 = vadd.f32 0.0, %v5133
      %5135 = vmatmul.bf16.gmra.mxu0 %v5020
      %v5136 = vpop.f32.mrf.mxu0
      %v5137 = vadd.f32 0.0, %v5136
      %v5138 = vpop.f32.mrf.mxu0
      %v5139 = vadd.f32 0.0, %v5138
      %5140 = vmatmul.bf16.gmra.mxu0 %v5021
      %v5141 = vpop.f32.mrf.mxu0
      %v5142 = vadd.f32 0.0, %v5141
      %v5143 = vpop.f32.mrf.mxu0
      %v5144 = vadd.f32 0.0, %v5143
      %5145 = vmatmul.bf16.gmra.mxu0 %v5022
      %v5146 = vpop.f32.mrf.mxu0
      %v5147 = vadd.f32 0.0, %v5146
      %v5148 = vpop.f32.mrf.mxu0
      %v5149 = vadd.f32 0.0, %v5148
      %5150 = vmatmul.bf16.gmra.mxu0 %v5023
      %v5151 = vpop.f32.mrf.mxu0
      %v5152 = vadd.f32 0.0, %v5151
      %v5153 = vpop.f32.mrf.mxu0
      %v5154 = vadd.f32 0.0, %v5153
      %5155 = vmatmul.bf16.gmra.mxu0 %v5024
      %v5156 = vpop.f32.mrf.mxu0
      %v5157 = vadd.f32 0.0, %v5156
      %v5158 = vpop.f32.mrf.mxu0
      %v5159 = vadd.f32 0.0, %v5158
      %5160 = vmatmul.bf16.gmra.mxu0 %v5025
      %v5161 = vpop.f32.mrf.mxu0
      %v5162 = vadd.f32 0.0, %v5161
      %v5163 = vpop.f32.mrf.mxu0
      %v5164 = vadd.f32 0.0, %v5163
      %5165 = vmatmul.bf16.gmra.mxu0 %v5026
      %v5166 = vpop.f32.mrf.mxu0
      %v5167 = vadd.f32 0.0, %v5166
      %v5168 = vpop.f32.mrf.mxu0
      %v5169 = vadd.f32 0.0, %v5168
      %5170 = vmatmul.bf16.gmra.mxu0 %v5027
      %v5171 = vpop.f32.mrf.mxu0
      %v5172 = vadd.f32 0.0, %v5171
      %v5173 = vpop.f32.mrf.mxu0
      %v5174 = vadd.f32 0.0, %v5173
      %5175 = vmatmul.bf16.gmra.mxu0 %v5028
      %v5176 = vpop.f32.mrf.mxu0
      %v5177 = vadd.f32 0.0, %v5176
      %v5178 = vpop.f32.mrf.mxu0
      %v5179 = vadd.f32 0.0, %v5178
      %5180 = vmatmul.bf16.gmra.mxu0 %v5029
      %v5181 = vpop.f32.mrf.mxu0
      %v5182 = vadd.f32 0.0, %v5181
      %v5183 = vpop.f32.mrf.mxu0
      %v5184 = vadd.f32 0.0, %v5183
      %5185 = vmatmul.bf16.gmra.mxu0 %v5030
      %v5186 = vpop.f32.mrf.mxu0
      %v5187 = vadd.f32 0.0, %v5186
      %v5188 = vpop.f32.mrf.mxu0
      %v5189 = vadd.f32 0.0, %v5188
      %5190 = vmatmul.bf16.gmra.mxu0 %v5031
      %v5191 = vpop.f32.mrf.mxu0
      %v5192 = vadd.f32 0.0, %v5191
      %v5193 = vpop.f32.mrf.mxu0
      %v5194 = vadd.f32 0.0, %v5193
      %5195 = vdwg.mxu0
      %v5196 = vadd.f32 %v4942, %v5107
      %v5197 = vadd.f32 %v4943, %v5109
      %v5198 = vadd.f32 %v4944, %v5112
      %v5199 = vadd.f32 %v4945, %v5114
      %v5200 = vadd.f32 %v4946, %v5117
      %v5201 = vadd.f32 %v4947, %v5119
      %v5202 = vadd.f32 %v4948, %v5122
      %v5203 = vadd.f32 %v4949, %v5124
      %v5204 = vadd.f32 %v4950, %v5127
      %v5205 = vadd.f32 %v4951, %v5129
      %v5206 = vadd.f32 %v4952, %v5132
      %v5207 = vadd.f32 %v4953, %v5134
      %v5208 = vadd.f32 %v4954, %v5137
      %v5209 = vadd.f32 %v4955, %v5139
      %v5210 = vadd.f32 %v4956, %v5142
      %v5211 = vadd.f32 %v4957, %v5144
      %v5212 = vadd.f32 %v4958, %v5147
      %v5213 = vadd.f32 %v4959, %v5149
      %v5214 = vadd.f32 %v4960, %v5152
      %v5215 = vadd.f32 %v4961, %v5154
      %v5216 = vadd.f32 %v4962, %v5157
      %v5217 = vadd.f32 %v4963, %v5159
      %v5218 = vadd.f32 %v4964, %v5162
      %v5219 = vadd.f32 %v4965, %v5164
      %v5220 = vadd.f32 %v4966, %v5167
      %v5221 = vadd.f32 %v4967, %v5169
      %v5222 = vadd.f32 %v4968, %v5172
      %v5223 = vadd.f32 %v4969, %v5174
      %v5224 = vadd.f32 %v4970, %v5177
      %v5225 = vadd.f32 %v4971, %v5179
      %v5226 = vadd.f32 %v4972, %v5182
      %v5227 = vadd.f32 %v4973, %v5184
      %v5228 = vadd.f32 %v4974, %v5187
      %v5229 = vadd.f32 %v4975, %v5189
      %v5230 = vadd.f32 %v4976, %v5192
      %v5231 = vadd.f32 %v4977, %v5194
      %v5232 = vld [vmem:[%s5] sm:$0x1]
      %v5234 = vperm.slane %v5232, 0
      %v5236 = vmul.f32 %v5196, %v5234
      %v5237 = vmul.f32 %v5197, %v5234
      %v5238 = vmul.f32 %v5198, %v5234
      %v5239 = vmul.f32 %v5199, %v5234
      %v5240 = vmul.f32 %v5200, %v5234
      %v5241 = vmul.f32 %v5201, %v5234
      %v5242 = vmul.f32 %v5202, %v5234
      %v5243 = vmul.f32 %v5203, %v5234
      %v5244 = vmul.f32 %v5204, %v5234
      %v5245 = vmul.f32 %v5205, %v5234
      %v5246 = vmul.f32 %v5206, %v5234
      %v5247 = vmul.f32 %v5207, %v5234
      %v5248 = vmul.f32 %v5208, %v5234
      %v5249 = vmul.f32 %v5209, %v5234
      %v5250 = vmul.f32 %v5210, %v5234
      %v5251 = vmul.f32 %v5211, %v5234
      %v5252 = vmul.f32 %v5212, %v5234
      %v5253 = vmul.f32 %v5213, %v5234
      %v5254 = vmul.f32 %v5214, %v5234
      %v5255 = vmul.f32 %v5215, %v5234
      %v5256 = vmul.f32 %v5216, %v5234
      %v5257 = vmul.f32 %v5217, %v5234
      %v5258 = vmul.f32 %v5218, %v5234
      %v5259 = vmul.f32 %v5219, %v5234
      %v5260 = vmul.f32 %v5220, %v5234
      %v5261 = vmul.f32 %v5221, %v5234
      %v5262 = vmul.f32 %v5222, %v5234
      %v5263 = vmul.f32 %v5223, %v5234
      %v5264 = vmul.f32 %v5224, %v5234
      %v5265 = vmul.f32 %v5225, %v5234
      %v5266 = vmul.f32 %v5226, %v5234
      %v5267 = vmul.f32 %v5227, %v5234
      %v5268 = vmul.f32 %v5228, %v5234
      %v5269 = vmul.f32 %v5229, %v5234
      %v5270 = vmul.f32 %v5230, %v5234
      %v5271 = vmul.f32 %v5231, %v5234
      %v5272 = vld [vmem:[%s6] sm:$0x1]
      %v5274 = vperm.slane %v5272, 0
      %v5276 = vadd.f32 %v5236, %v5274
      %v5277 = vadd.f32 %v5237, %v5274
      %v5278 = vadd.f32 %v5238, %v5274
      %v5279 = vadd.f32 %v5239, %v5274
      %v5280 = vadd.f32 %v5240, %v5274
      %v5281 = vadd.f32 %v5241, %v5274
      %v5282 = vadd.f32 %v5242, %v5274
      %v5283 = vadd.f32 %v5243, %v5274
      %v5284 = vadd.f32 %v5244, %v5274
      %v5285 = vadd.f32 %v5245, %v5274
      %v5286 = vadd.f32 %v5246, %v5274
      %v5287 = vadd.f32 %v5247, %v5274
      %v5288 = vadd.f32 %v5248, %v5274
      %v5289 = vadd.f32 %v5249, %v5274
      %v5290 = vadd.f32 %v5250, %v5274
      %v5291 = vadd.f32 %v5251, %v5274
      %v5292 = vadd.f32 %v5252, %v5274
      %v5293 = vadd.f32 %v5253, %v5274
      %v5294 = vadd.f32 %v5254, %v5274
      %v5295 = vadd.f32 %v5255, %v5274
      %v5296 = vadd.f32 %v5256, %v5274
      %v5297 = vadd.f32 %v5257, %v5274
      %v5298 = vadd.f32 %v5258, %v5274
      %v5299 = vadd.f32 %v5259, %v5274
      %v5300 = vadd.f32 %v5260, %v5274
      %v5301 = vadd.f32 %v5261, %v5274
      %v5302 = vadd.f32 %v5262, %v5274
      %v5303 = vadd.f32 %v5263, %v5274
      %v5304 = vadd.f32 %v5264, %v5274
      %v5305 = vadd.f32 %v5265, %v5274
      %v5306 = vadd.f32 %v5266, %v5274
      %v5307 = vadd.f32 %v5267, %v5274
      %v5308 = vadd.f32 %v5268, %v5274
      %v5309 = vadd.f32 %v5269, %v5274
      %v5310 = vadd.f32 %v5270, %v5274
      %v5311 = vadd.f32 %v5271, %v5274
      %v5312 = vmul.f32 %v5276, %v2770
      %v5313 = vmul.f32 %v5277, %v2775
      %v5314 = vmul.f32 %v5278, %v2780
      %v5315 = vmul.f32 %v5279, %v2785
      %v5316 = vmul.f32 %v5280, %v2790
      %v5317 = vmul.f32 %v5281, %v2795
      %v5318 = vmul.f32 %v5282, %v2800
      %v5319 = vmul.f32 %v5283, %v2805
      %v5320 = vmul.f32 %v5284, %v2810
      %v5321 = vmul.f32 %v5285, %v2815
      %v5322 = vmul.f32 %v5286, %v2820
      %v5323 = vmul.f32 %v5287, %v2825
      %v5324 = vmul.f32 %v5288, %v2830
      %v5325 = vmul.f32 %v5289, %v2835
      %v5326 = vmul.f32 %v5290, %v2840
      %v5327 = vmul.f32 %v5291, %v2845
      %v5328 = vmul.f32 %v5292, %v2850
      %v5329 = vmul.f32 %v5293, %v2855
      %v5330 = vmul.f32 %v5294, %v2860
      %v5331 = vmul.f32 %v5295, %v2865
      %v5332 = vmul.f32 %v5296, %v2870
      %v5333 = vmul.f32 %v5297, %v2875
      %v5334 = vmul.f32 %v5298, %v2880
      %v5335 = vmul.f32 %v5299, %v2885
      %v5336 = vmul.f32 %v5300, %v2890
      %v5337 = vmul.f32 %v5301, %v2895
      %v5338 = vmul.f32 %v5302, %v2900
      %v5339 = vmul.f32 %v5303, %v2905
      %v5340 = vmul.f32 %v5304, %v2910
      %v5341 = vmul.f32 %v5305, %v2915
      %v5342 = vmul.f32 %v5306, %v2920
      %v5343 = vmul.f32 %v5307, %v2925
      %v5344 = vmul.f32 %v5308, %v2930
      %v5345 = vmul.f32 %v5309, %v2935
      %v5346 = vmul.f32 %v5310, %v2940
      %v5347 = vmul.f32 %v5311, %v2945
      %v5348 = vadd.f32 %v5312, %v5313
      %v5349 = vadd.f32 %v5348, %v5314
      %v5350 = vadd.f32 %v5349, %v5315
      %v5351 = vadd.f32 %v5350, %v5316
      %v5352 = vadd.f32 %v5351, %v5317
      %v5353 = vadd.f32 %v5352, %v5318
      %v5354 = vadd.f32 %v5353, %v5319
      %v5355 = vadd.f32 %v5354, %v5320
      %v5356 = vadd.f32 %v5355, %v5321
      %v5357 = vadd.f32 %v5356, %v5322
      %v5358 = vadd.f32 %v5357, %v5323
      %v5359 = vadd.f32 %v5358, %v5324
      %v5360 = vadd.f32 %v5359, %v5325
      %v5361 = vadd.f32 %v5360, %v5326
      %v5362 = vadd.f32 %v5361, %v5327
      %v5363 = vadd.f32 %v5362, %v5328
      %v5364 = vadd.f32 %v5363, %v5329
      %v5365 = vadd.f32 %v5364, %v5330
      %v5366 = vadd.f32 %v5365, %v5331
      %v5367 = vadd.f32 %v5366, %v5332
      %v5368 = vadd.f32 %v5367, %v5333
      %v5369 = vadd.f32 %v5368, %v5334
      %v5370 = vadd.f32 %v5369, %v5335
      %v5371 = vadd.f32 %v5370, %v5336
      %v5372 = vadd.f32 %v5371, %v5337
      %v5373 = vadd.f32 %v5372, %v5338
      %v5374 = vadd.f32 %v5373, %v5339
      %v5375 = vadd.f32 %v5374, %v5340
      %v5376 = vadd.f32 %v5375, %v5341
      %v5377 = vadd.f32 %v5376, %v5342
      %v5378 = vadd.f32 %v5377, %v5343
      %v5379 = vadd.f32 %v5378, %v5344
      %v5380 = vadd.f32 %v5379, %v5345
      %v5381 = vadd.f32 %v5380, %v5346
      %v5382 = vadd.f32 %v5381, %v5347
      %v5383 = vrot.slane %v5382, 4
      %v5384 = vadd.f32 %v5382, %v5383
      %v5385 = vrot.slane %v5384, 2
      %v5386 = vadd.f32 %v5384, %v5385
      %v5387 = vrot.slane %v5386, 1
      %v5388 = vadd.f32 %v5386, %v5387
      %v5389 = vmul.f32 %v5388, 0.00390625
      %v5390 = vpack.c.bf16 %v5389, %v5389
      %v5391 = vld [vmem:[%s7] sm:$0xf]
      %v5392 = vld [vmem:[%s7 + $0x4] sm:$0xf]
      %v5393 = vld [vmem:[%s7 + $0x8] sm:$0xf]
      %v5394 = vld [vmem:[%s7 + $0xc] sm:$0xf]
      %v5395 = vld [vmem:[%s7 + $0x10] sm:$0xf]
      %v5396 = vld [vmem:[%s7 + $0x14] sm:$0xf]
      %v5397 = vld [vmem:[%s7 + $0x18] sm:$0xf]
      %v5398 = vld [vmem:[%s7 + $0x1c] sm:$0xf]
      %v5399 = vld [vmem:[%s7 + $0x20] sm:$0xf]
      %v5400 = vld [vmem:[%s7 + $0x24] sm:$0xf]
      %v5401 = vld [vmem:[%s7 + $0x28] sm:$0xf]
      %v5402 = vld [vmem:[%s7 + $0x2c] sm:$0xf]
      %v5403 = vld [vmem:[%s7 + $0x30] sm:$0xf]
      %v5404 = vld [vmem:[%s7 + $0x34] sm:$0xf]
      %v5405 = vld [vmem:[%s7 + $0x38] sm:$0xf]
      %v5406 = vld [vmem:[%s7 + $0x3c] sm:$0xf]
      %v5423 = vunpack.c.l.b16 %v5391
      %v5424 = vunpack.c.l.b16 %v5392
      %v5425 = vunpack.c.l.b16 %v5393
      %v5426 = vunpack.c.l.b16 %v5394
      %v5427 = vunpack.c.l.b16 %v5395
      %v5428 = vunpack.c.l.b16 %v5396
      %v5429 = vunpack.c.l.b16 %v5397
      %v5430 = vunpack.c.l.b16 %v5398
      %v5431 = vunpack.c.l.b16 %v5399
      %v5432 = vunpack.c.l.b16 %v5400
      %v5433 = vunpack.c.l.b16 %v5401
      %v5434 = vunpack.c.l.b16 %v5402
      %v5435 = vunpack.c.l.b16 %v5403
      %v5436 = vunpack.c.l.b16 %v5404
      %v5437 = vunpack.c.l.b16 %v5405
      %v5438 = vunpack.c.l.b16 %v5406
      %v5439 = vpack.c.b16 %v5424, %v5423
      %v5440 = vpack.c.b16 %v5426, %v5425
      %v5441 = vpack.c.b16 %v5428, %v5427
      %v5442 = vpack.c.b16 %v5430, %v5429
      %v5443 = vpack.c.b16 %v5432, %v5431
      %v5444 = vpack.c.b16 %v5434, %v5433
      %v5445 = vpack.c.b16 %v5436, %v5435
      %v5446 = vpack.c.b16 %v5438, %v5437
      %5455 = vmatpush.bf16.msra.mxu0 %v5446
      %5456 = vmatpush.bf16.msra.mxu0 %v5445
      %5457 = vmatpush.bf16.msra.mxu0 %v5444
      %5458 = vmatpush.bf16.msra.mxu0 %v5443
      %5459 = vmatpush.bf16.msra.mxu0 %v5442
      %5460 = vmatpush.bf16.msra.mxu0 %v5441
      %5461 = vmatpush.bf16.msra.mxu0 %v5440
      %5462 = vmatpush.bf16.msra.mxu0 %v5439
      %5463 = vmatmul.bf16.gmra.mxu0 %v5390
      %v5464 = vpop.f32.mrf.mxu0
      %v5465 = vadd.f32 0.0, %v5464
      %v5466 = vpop.f32.mrf.mxu0
      %5467 = vdwg.mxu0
      %v5468 = vmax.f32 %v5465, 0.0
      %v5469 = vpack.c.bf16 %v5468, %v5468
      %v5470 = vld [vmem:[%s8] sm:$0xf]
      %v5471 = vld [vmem:[%s8 + $0x4] sm:$0xf]
      %v5472 = vld [vmem:[%s8 + $0x8] sm:$0xf]
      %v5473 = vld [vmem:[%s8 + $0xc] sm:$0xf]
      %v5474 = vld [vmem:[%s8 + $0x10] sm:$0xf]
      %v5475 = vld [vmem:[%s8 + $0x14] sm:$0xf]
      %v5476 = vld [vmem:[%s8 + $0x18] sm:$0xf]
      %v5477 = vld [vmem:[%s8 + $0x1c] sm:$0xf]
      %v5478 = vld [vmem:[%s8 + $0x20] sm:$0xf]
      %v5479 = vld [vmem:[%s8 + $0x24] sm:$0xf]
      %v5480 = vld [vmem:[%s8 + $0x28] sm:$0xf]
      %v5481 = vld [vmem:[%s8 + $0x2c] sm:$0xf]
      %v5482 = vld [vmem:[%s8 + $0x30] sm:$0xf]
      %v5483 = vld [vmem:[%s8 + $0x34] sm:$0xf]
      %v5484 = vld [vmem:[%s8 + $0x38] sm:$0xf]
      %v5485 = vld [vmem:[%s8 + $0x3c] sm:$0xf]
      %v5502 = vunpack.c.l.b16 %v5470
      %v5503 = vunpack.c.l.b16 %v5471
      %v5504 = vunpack.c.l.b16 %v5472
      %v5505 = vunpack.c.l.b16 %v5473
      %v5506 = vunpack.c.l.b16 %v5474
      %v5507 = vunpack.c.l.b16 %v5475
      %v5508 = vunpack.c.l.b16 %v5476
      %v5509 = vunpack.c.l.b16 %v5477
      %v5510 = vunpack.c.l.b16 %v5478
      %v5511 = vunpack.c.l.b16 %v5479
      %v5512 = vunpack.c.l.b16 %v5480
      %v5513 = vunpack.c.l.b16 %v5481
      %v5514 = vunpack.c.l.b16 %v5482
      %v5515 = vunpack.c.l.b16 %v5483
      %v5516 = vunpack.c.l.b16 %v5484
      %v5517 = vunpack.c.l.b16 %v5485
      %v5518 = vpack.c.b16 %v5503, %v5502
      %v5519 = vpack.c.b16 %v5505, %v5504
      %v5520 = vpack.c.b16 %v5507, %v5506
      %v5521 = vpack.c.b16 %v5509, %v5508
      %v5522 = vpack.c.b16 %v5511, %v5510
      %v5523 = vpack.c.b16 %v5513, %v5512
      %v5524 = vpack.c.b16 %v5515, %v5514
      %v5525 = vpack.c.b16 %v5517, %v5516
      %5534 = vmatpush.bf16.msra.mxu0 %v5525
      %5535 = vmatpush.bf16.msra.mxu0 %v5524
      %5536 = vmatpush.bf16.msra.mxu0 %v5523
      %5537 = vmatpush.bf16.msra.mxu0 %v5522
      %5538 = vmatpush.bf16.msra.mxu0 %v5521
      %5539 = vmatpush.bf16.msra.mxu0 %v5520
      %5540 = vmatpush.bf16.msra.mxu0 %v5519
      %5541 = vmatpush.bf16.msra.mxu0 %v5518
      %5542 = vmatmul.bf16.gmra.mxu0 %v5469
      %v5543 = vpop.f32.mrf.mxu0
      %v5544 = vadd.f32 0.0, %v5543
      %v5545 = vpop.f32.mrf.mxu0
      %5546 = vdwg.mxu0
      %v5547 = vxor.u32 %v5544, 2147483648
      %v5548 = vmul.f32 %v5547, 1.442695
      %v5549 = vpow.pop %v5548
      %v5550 = vadd.f32 %v5549, 1.0
      %v5551 = vrcp.pop %v5550
      %v5552 = vmul.f32 %v5550, %v5551
      %v5553 = vsub.f32 1.0, %v5552
      %v5554 = vmul.f32 %v5551, %v5553
      %v5555 = vadd.f32 %v5551, %v5554
      %vm5556 = vweird.f32 %v5550
      %vm5557 = vweird.f32 %v5551
      %vm5558 = vmor %vm5556, %vm5557
      %v5559 = vsel %vm5558, %v5551, %v5555
      %v5560 = vand.u32 2147483647, %v5550
      %vm5561 = vcmp.eq.f32.partialorder %v5560, 8.507059e+37
      %v5562 = vand.u32 %v5550, 2147483648
      %v5563 = vor.u32 1.1754944e-38, %v5562
      %v5564 = vsel %vm5561, %v5563, %v5559
      %v5565 = vmul.f32 1.0, %v5564
      %v5566 = vperm.slane %v5565, 0
      %v5567 = vmul.f32 %v5276, %v5566
      %v5568 = vmul.f32 %v5277, %v5566
      %v5569 = vmul.f32 %v5278, %v5566
      %v5570 = vmul.f32 %v5279, %v5566
      %v5571 = vmul.f32 %v5280, %v5566
      %v5572 = vmul.f32 %v5281, %v5566
      %v5573 = vmul.f32 %v5282, %v5566
      %v5574 = vmul.f32 %v5283, %v5566
      %v5575 = vmul.f32 %v5284, %v5566
      %v5576 = vmul.f32 %v5285, %v5566
      %v5577 = vmul.f32 %v5286, %v5566
      %v5578 = vmul.f32 %v5287, %v5566
      %v5579 = vmul.f32 %v5288, %v5566
      %v5580 = vmul.f32 %v5289, %v5566
      %v5581 = vmul.f32 %v5290, %v5566
      %v5582 = vmul.f32 %v5291, %v5566
      %v5583 = vmul.f32 %v5292, %v5566
      %v5584 = vmul.f32 %v5293, %v5566
      %v5585 = vmul.f32 %v5294, %v5566
      %v5586 = vmul.f32 %v5295, %v5566
      %v5587 = vmul.f32 %v5296, %v5566
      %v5588 = vmul.f32 %v5297, %v5566
      %v5589 = vmul.f32 %v5298, %v5566
      %v5590 = vmul.f32 %v5299, %v5566
      %v5591 = vmul.f32 %v5300, %v5566
      %v5592 = vmul.f32 %v5301, %v5566
      %v5593 = vmul.f32 %v5302, %v5566
      %v5594 = vmul.f32 %v5303, %v5566
      %v5595 = vmul.f32 %v5304, %v5566
      %v5596 = vmul.f32 %v5305, %v5566
      %v5597 = vmul.f32 %v5306, %v5566
      %v5598 = vmul.f32 %v5307, %v5566
      %v5599 = vmul.f32 %v5308, %v5566
      %v5600 = vmul.f32 %v5309, %v5566
      %v5601 = vmul.f32 %v5310, %v5566
      %v5602 = vmul.f32 %v5311, %v5566
      %v5603 = vmax.f32 %v5567, 0.0
      %v5604 = vmax.f32 %v5568, 0.0
      %v5605 = vmax.f32 %v5569, 0.0
      %v5606 = vmax.f32 %v5570, 0.0
      %v5607 = vmax.f32 %v5571, 0.0
      %v5608 = vmax.f32 %v5572, 0.0
      %v5609 = vmax.f32 %v5573, 0.0
      %v5610 = vmax.f32 %v5574, 0.0
      %v5611 = vmax.f32 %v5575, 0.0
      %v5612 = vmax.f32 %v5576, 0.0
      %v5613 = vmax.f32 %v5577, 0.0
      %v5614 = vmax.f32 %v5578, 0.0
      %v5615 = vmax.f32 %v5579, 0.0
      %v5616 = vmax.f32 %v5580, 0.0
      %v5617 = vmax.f32 %v5581, 0.0
      %v5618 = vmax.f32 %v5582, 0.0
      %v5619 = vmax.f32 %v5583, 0.0
      %v5620 = vmax.f32 %v5584, 0.0
      %v5621 = vmax.f32 %v5585, 0.0
      %v5622 = vmax.f32 %v5586, 0.0
      %v5623 = vmax.f32 %v5587, 0.0
      %v5624 = vmax.f32 %v5588, 0.0
      %v5625 = vmax.f32 %v5589, 0.0
      %v5626 = vmax.f32 %v5590, 0.0
      %v5627 = vmax.f32 %v5591, 0.0
      %v5628 = vmax.f32 %v5592, 0.0
      %v5629 = vmax.f32 %v5593, 0.0
      %v5630 = vmax.f32 %v5594, 0.0
      %v5631 = vmax.f32 %v5595, 0.0
      %v5632 = vmax.f32 %v5596, 0.0
      %v5633 = vmax.f32 %v5597, 0.0
      %v5634 = vmax.f32 %v5598, 0.0
      %v5635 = vmax.f32 %v5599, 0.0
      %v5636 = vmax.f32 %v5600, 0.0
      %v5637 = vmax.f32 %v5601, 0.0
      %v5638 = vmax.f32 %v5602, 0.0
      %5639 = vst [vmem:[%s359] sm:$0xff] %v5603
      %5640 = vst [vmem:[%s359 + $0x8] sm:$0xff] %v5604
      %5641 = vst [vmem:[%s359 + $0x10] sm:$0xff] %v5605
      %5642 = vst [vmem:[%s359 + $0x18] sm:$0xff] %v5606
      %5643 = vst [vmem:[%s359 + $0x20] sm:$0xff] %v5607
      %5644 = vst [vmem:[%s359 + $0x28] sm:$0xff] %v5608
      %5645 = vst [vmem:[%s359 + $0x30] sm:$0xff] %v5609
      %5646 = vst [vmem:[%s359 + $0x38] sm:$0xff] %v5610
      %5647 = vst [vmem:[%s359 + $0x40] sm:$0xff] %v5611
      %5648 = vst [vmem:[%s359 + $0x48] sm:$0xff] %v5612
      %5649 = vst [vmem:[%s359 + $0x50] sm:$0xff] %v5613
      %5650 = vst [vmem:[%s359 + $0x58] sm:$0xff] %v5614
      %5651 = vst [vmem:[%s359 + $0x60] sm:$0xff] %v5615
      %5652 = vst [vmem:[%s359 + $0x68] sm:$0xff] %v5616
      %5653 = vst [vmem:[%s359 + $0x70] sm:$0xff] %v5617
      %5654 = vst [vmem:[%s359 + $0x78] sm:$0xff] %v5618
      %5655 = vst [vmem:[%s359 + $0x80] sm:$0xff] %v5619
      %5656 = vst [vmem:[%s359 + $0x88] sm:$0xff] %v5620
      %5657 = vst [vmem:[%s359 + $0x90] sm:$0xff] %v5621
      %5658 = vst [vmem:[%s359 + $0x98] sm:$0xff] %v5622
      %5659 = vst [vmem:[%s359 + $0xa0] sm:$0xff] %v5623
      %5660 = vst [vmem:[%s359 + $0xa8] sm:$0xff] %v5624
      %5661 = vst [vmem:[%s359 + $0xb0] sm:$0xff] %v5625
      %5662 = vst [vmem:[%s359 + $0xb8] sm:$0xff] %v5626
      %5663 = vst [vmem:[%s359 + $0xc0] sm:$0xff] %v5627
      %5664 = vst [vmem:[%s359 + $0xc8] sm:$0xff] %v5628
      %5665 = vst [vmem:[%s359 + $0xd0] sm:$0xff] %v5629
      %5666 = vst [vmem:[%s359 + $0xd8] sm:$0xff] %v5630
      %5667 = vst [vmem:[%s359 + $0xe0] sm:$0xff] %v5631
      %5668 = vst [vmem:[%s359 + $0xe8] sm:$0xff] %v5632
      %5669 = vst [vmem:[%s359 + $0xf0] sm:$0xff] %v5633
      %5670 = vst [vmem:[%s359 + $0xf8] sm:$0xff] %v5634
      %5671 = vst [vmem:[%s359 + $0x100] sm:$0xff] %v5635
      %5672 = vst [vmem:[%s359 + $0x108] sm:$0xff] %v5636
      %5673 = vst [vmem:[%s359 + $0x110] sm:$0xff] %v5637
      %5674 = vst [vmem:[%s359 + $0x118] sm:$0xff] %v5638
      %p5675 = scmp.lt.s32.totalorder %s21, 1
      %s5676 = scalar_select %p5675, %s21, 1
      %s5677 = smul.addr %s5676, 36
      %s5678 = smul.addr %s5677, 8
      %s5679 = scalar_lea.vmem %s10, %s5678
      // Predicated region
      $region61: #{se_basic_block.1} parent=59 // pred_check
        %p5680 = pneg %p254
      $region62: #{se_basic_block.1} parent=59 // pred_check_branch
        %5682 = sbr.rel (%p5680) target = $region64
      $region63: #{se_basic_block.1} parent=59 // pred_region
        _
      $region64: #{se_basic_block.1} parent=59 // pred_fallthru
        _
    $region60: #{se_basic_block.1} parent=5 // pred_fallthru
      _
    %p5683 = scmp.le.s32.totalorder 2, %s16
    // Predicated region
    $region65: #{se_basic_block.1} parent=5 // pred_check
      %p5684 = pneg %p5683
    $region66: #{se_basic_block.1} parent=5 // pred_check_branch
      %5686 = sbr.rel (%p5684) target = $region68
    $region67: #{se_basic_block.1} parent=5 // pred_region
      %s5687 = ssub.s32 %s16, 2
      // Predicated region
      $region69: #{se_basic_block.1} parent=67 // pred_check
        %p5688 = pneg %p260
      $region70: #{se_basic_block.1} parent=67 // pred_check_branch
        %5690 = sbr.rel (%p5688) target = $region72
      $region71: #{se_basic_block.1} parent=67 // pred_region
        %p5691 = scmp.lt.s32.totalorder %s22, 1
        %s5692 = scalar_select %p5691, %s22, 1
        %s5693 = smul.addr %s5692, 36
        %s5694 = smul.addr %s5693, 8
        %s5695 = scalar_lea.vmem %s10, %s5694
      $region72: #{se_basic_block.1} parent=67 // pred_fallthru
        _
    $region68: #{se_basic_block.1} parent=5 // pred_fallthru
      _
  $region6: #{se_basic_block.1} parent=0 // loop_footer
    %s20 = sadd.s32 1, %s16
  $region7: #{se_basic_block.1} parent=0 // loop_footer_branch
    %15 = sbr.rel target = $region3
  $region8: #{se_basic_block.1} parent=0 // loop_exit
    _

</llo_original>
